<compile_context>
chip_gen: v7x
topology: tpu7x:2x2x1
jax: 0.10.0
libtpu: 0.0.40
codegen_flags: <defaults>
</compile_context>

<pallas_src>
import functools

import jax
import jax.numpy as jnp
from jax.experimental import pallas as pl
from jax.experimental.pallas import tpu as pltpu

# ------------------------- module hyper-parameters ------------------------- #
V_DIM = A_DIM = EMBED_DIM = 32
NUM_HEADS = 4
HEAD_DIM = EMBED_DIM // NUM_HEADS
N_LAYERS = 3
MLP_RATIO = 4
LN_EPS = 1e-5
MATMUL_DTYPE = jnp.bfloat16     # MXU operand dtype; accumulation stays f32


def _layernorm_f32(x, w, b):
    mu = jnp.mean(x, axis=-1, keepdims=True)
    # one-pass variance E[x^2] - mu^2: one fewer dependent cross-lane reduce
    var = jnp.mean(x * x, axis=-1, keepdims=True) - mu * mu
    return (x - mu) * jax.lax.rsqrt(var + LN_EPS) * w + b


def _mxu_dot(a, b):
    if a.dtype != MATMUL_DTYPE:
        a = a.astype(MATMUL_DTYPE)
    if b.dtype != MATMUL_DTYPE:
        b = b.astype(MATMUL_DTYPE)
    return jnp.dot(a, b, preferred_element_type=jnp.float32)


# ------------------------------- Pallas kernel ----------------------------- #
def _one_stream_attn_kernel(
    x_ref,                      # (bt*n, d) token slab
    w_main_ref,                 # (L, d, 3d + d + hidden)  bf16  [qkv | proj | fc1]
    w_fc2_ref,                  # (L, hidden, d)           bf16
    b_ref,                      # (L, 3d + d + hidden + d) f32   [qkv | proj | fc1 | fc2]
    ln_ref,                     # (L, 4, d)                f32   [ln1_w, ln1_b, ln2_w, ln2_b]
    norm_ref,                   # (2, d)                   f32   [norm_w, norm_b]
    out_ref,                    # (bt*n, d)
    *, bt, n, d, h,
):
    hd = d // h
    hn = h * n
    hidden = MLP_RATIO * d
    f32 = jnp.float32

    # Block-diagonal head mask shared by the K and V expansions:
    # element (hh*n + j, c) is 1 iff feature column c belongs to head hh.
    # (Built with comparisons against constants; no integer division.)
    col = jax.lax.broadcasted_iota(jnp.int32, (n, d), 1)
    bd_mask = jnp.concatenate(
        [((col >= hh * hd) & (col < (hh + 1) * hd)).astype(f32)
         for hh in range(h)],
        axis=0)                                               # (h*n, d)

    # Full (bt*n, d) token slab (batch folded into matmul rows), resident for
    # the whole 3-block transformer stack.
    x = x_ref[...].astype(f32)

    for l in range(N_LAYERS):
        w_l = w_main_ref[l]                                   # (d, 4d+hidden) bf16
        b_l = b_ref[l]                                        # (4d+hidden+d,) f32
        ln_l = ln_ref[l]                                      # (4, d) f32

        # ----------------- multi-head self-attention -----------------
        y = _layernorm_f32(x, ln_l[0], ln_l[1])
        qkv = _mxu_dot(y, w_l[:, 0:3 * d]) + b_l[0:3 * d]     # (bt*n, 3d) f32
        # (1/sqrt(head_dim) is already folded into the Q columns of W/b.)

        o_parts = []
        for bi in range(bt):                                  # bt is 1 or 2 (static)
            blk = qkv[bi * n:(bi + 1) * n]                    # (n, 3d)
            q_b = blk[:, 0:d].astype(MATMUL_DTYPE)            # (n, d)
            k_bd = (jnp.concatenate([blk[:, d:2 * d]] * h, axis=0)
                    * bd_mask).astype(MATMUL_DTYPE)           # (h*n, d) block-diag K
            v_bd = (jnp.concatenate([blk[:, 2 * d:3 * d]] * h, axis=0)
                    * bd_mask).astype(MATMUL_DTYPE)           # (h*n, d) block-diag V

            # All-head scores in one 96-lane-wide matmul:
            #   s[i, hh*n + j] = q_hh[i] . k_hh[j]
            s = jax.lax.dot_general(q_b, k_bd, (((1,), (1,)), ((), ())),
                                    preferred_element_type=f32)   # (n, h*n)
            # A single per-row shift is valid for every head segment.
            s = s - jnp.max(s, axis=-1, keepdims=True)
            e = jnp.exp(s)
            # Per-head denominators: h independent lane-slice sums (f32),
            # reciprocal on the EUP, broadcast back to each n-wide segment.
            inv = jnp.concatenate(
                [jnp.broadcast_to(
                    pl.reciprocal(jnp.sum(e[:, hh * n:(hh + 1) * n],
                                          axis=-1, keepdims=True), approx=True),
                    (n, n))
                 for hh in range(h)],
                axis=-1)                                          # (n, h*n)
            p = (e * inv).astype(MATMUL_DTYPE)
            # Block-diagonal V drops every head's output directly into its
            # lane slice of an (n, d) result -> no scratch, no concat of heads.
            o_parts.append(jnp.dot(p, v_bd, preferred_element_type=f32))

        o = o_parts[0] if bt == 1 else jnp.concatenate(o_parts, axis=0)
        x = x + _mxu_dot(o, w_l[:, 3 * d:4 * d]) + b_l[3 * d:4 * d]

        # ------------------------------ MLP ---------------------------
        y = _layernorm_f32(x, ln_l[2], ln_l[3])
        y = _mxu_dot(y, w_l[:, 4 * d:4 * d + hidden]) + b_l[4 * d:4 * d + hidden]
        y = jax.nn.gelu(y, approximate=True)   # tanh form -> EUP slot
        x = x + _mxu_dot(y, w_fc2_ref[l]) + b_l[4 * d + hidden:4 * d + hidden + d]

    # final LayerNorm; split back into streams happens in the wrapper
    x = _layernorm_f32(x, norm_ref[0], norm_ref[1])
    out_ref[...] = x.astype(out_ref.dtype)


# --------------------------------- wrapper --------------------------------- #
def _tensorcores_per_chip():
    """v7x has 2 TensorCores per chip; v5e/v6e have 1.  Conservative fallback
    is 1 (single grid step), which is the fast choice on single-TC chips."""
    try:
        kind = jax.devices()[0].device_kind.lower()
    except Exception:
        return 1
    return 2 if "v7" in kind else 1


def _pick_batch_blocking(b):
    """(num_blocks, batches_per_block).  Single grid step on 1-TC chips so the
    whole batch shares one set of matmuls; 2-way 'parallel' split only when a
    second TensorCore exists to take the other half."""
    if _tensorcores_per_chip() >= 2 and b >= 2 and b % 2 == 0:
        return 2, b // 2
    return 1, b


def one_stream_attention(v, a, pos_v, pos_a, params):
    b, lv, d = v.shape
    _, la, _ = a.shape
    n = lv + la
    hidden = MLP_RATIO * d
    scale = HEAD_DIM ** (-0.5)

    # concat + positional add in the wrapper (cheap layout plumbing): one slab
    # in, one slab out -> single input/output DMA per grid step.
    x = jnp.concatenate([v + pos_v, a + pos_a], axis=1)           # (b, n, d)

    num_blocks, bt = _pick_batch_blocking(b)
    rows = bt * n
    x = x.reshape(num_blocks, rows, d)

    # --- weight packing (wrapper-side, outside the kernel) ---
    # fold 1/sqrt(head_dim) into the Q columns; pre-cast matmul weights to bf16
    qkv_w = params["qkv_w"].at[:, :, :d].multiply(scale)
    qkv_b = params["qkv_b"].at[:, :d].multiply(scale)
    w_main = jnp.concatenate([qkv_w, params["proj_w"], params["fc1_w"]],
                             axis=-1).astype(MATMUL_DTYPE)        # (L, d, 4d+hidden)
    w_fc2 = params["fc2_w"].astype(MATMUL_DTYPE)                  # (L, hidden, d)
    b_all = jnp.concatenate([qkv_b, params["proj_b"], params["fc1_b"],
                             params["fc2_b"]], axis=-1)           # (L, 4d+hidden+d)
    ln_all = jnp.stack([params["ln1_w"], params["ln1_b"],
                        params["ln2_w"], params["ln2_b"]], axis=1)  # (L, 4, d)
    norm_all = jnp.concatenate([params["norm_w"], params["norm_b"]], axis=0)  # (2, d)

    weights = [w_main, w_fc2, b_all, ln_all, norm_all]

    def resident(shape):
        nd = len(shape)
        # constant block index -> weights stay VMEM-resident across grid steps
        return pl.BlockSpec(shape, lambda i, _nd=nd: (0,) * _nd)

    kernel = functools.partial(
        _one_stream_attn_kernel, bt=bt, n=n, d=d, h=NUM_HEADS
    )

    out = pl.pallas_call(
        kernel,
        out_shape=jax.ShapeDtypeStruct((num_blocks, rows, d), v.dtype),
        grid_spec=pltpu.PrefetchScalarGridSpec(
            num_scalar_prefetch=0,
            grid=(num_blocks,),
            in_specs=[pl.BlockSpec((None, rows, d), lambda i: (i, 0, 0))]
                     + [resident(w.shape) for w in weights],
            out_specs=pl.BlockSpec((None, rows, d), lambda i: (i, 0, 0)),
        ),
        compiler_params=pltpu.CompilerParams(
            dimension_semantics=("parallel",),   # batch blocks are independent
        ),
    )(x, *weights)

    out = out.reshape(b, n, d)
    return out[:, :lv, :], out[:, lv:, :]


# ------------------------------ parameter init ----------------------------- #
def init_params(key, d=EMBED_DIM, n_layers=N_LAYERS, mlp_ratio=MLP_RATIO):
    hidden = mlp_ratio * d
    ks = jax.random.split(key, 8)
    std = 0.02
    return {
        "ln1_w": jnp.ones((n_layers, d), jnp.float32),
        "ln1_b": jnp.zeros((n_layers, d), jnp.float32),
        "qkv_w": std * jax.random.normal(ks[0], (n_layers, d, 3 * d), jnp.float32),
        "qkv_b": 0.01 * jax.random.normal(ks[1], (n_layers, 3 * d), jnp.float32),
        "proj_w": std * jax.random.normal(ks[2], (n_layers, d, d), jnp.float32),
        "proj_b": 0.01 * jax.random.normal(ks[3], (n_layers, d), jnp.float32),
        "ln2_w": jnp.ones((n_layers, d), jnp.float32),
        "ln2_b": jnp.zeros((n_layers, d), jnp.float32),
        "fc1_w": std * jax.random.normal(ks[4], (n_layers, d, hidden), jnp.float32),
        "fc1_b": 0.01 * jax.random.normal(ks[5], (n_layers, hidden), jnp.float32),
        "fc2_w": std * jax.random.normal(ks[6], (n_layers, hidden, d), jnp.float32),
        "fc2_b": 0.01 * jax.random.normal(ks[7], (n_layers, d), jnp.float32),
        "norm_w": jnp.ones((1, d), jnp.float32),
        "norm_b": jnp.zeros((1, d), jnp.float32),
    }


# ------------------------------ pure-JAX reference -------------------------- #
def _layernorm_ref(x, w, b):
    mu = jnp.mean(x, axis=-1, keepdims=True)
    var = jnp.mean((x - mu) ** 2, axis=-1, keepdims=True)
    return (x - mu) * jax.lax.rsqrt(var + LN_EPS) * w + b


def reference(v, a, pos_v, pos_a, params):
    d, h = EMBED_DIM, NUM_HEADS
    hd = d // h
    scale = hd ** (-0.5)
    x = jnp.concatenate([v + pos_v, a + pos_a], axis=1)
    b, n, _ = x.shape
    for l in range(N_LAYERS):
        y = _layernorm_ref(x, params["ln1_w"][l], params["ln1_b"][l])
        qkv = y @ params["qkv_w"][l] + params["qkv_b"][l]
        q = qkv[..., 0 * d:1 * d].reshape(b, n, h, hd)
        k = qkv[..., 1 * d:2 * d].reshape(b, n, h, hd)
        vv = qkv[..., 2 * d:3 * d].reshape(b, n, h, hd)
        s = jnp.einsum("bqhd,bkhd->bhqk", q, k) * scale
        p = jax.nn.softmax(s, axis=-1)
        o = jnp.einsum("bhqk,bkhd->bqhd", p, vv).reshape(b, n, d)
        x = x + (o @ params["proj_w"][l] + params["proj_b"][l])
        y = _layernorm_ref(x, params["ln2_w"][l], params["ln2_b"][l])
        y = jax.nn.gelu(y @ params["fc1_w"][l] + params["fc1_b"][l], approximate=False)
        x = x + (y @ params["fc2_w"][l] + params["fc2_b"][l])
    x = _layernorm_ref(x, params["norm_w"][0], params["norm_b"][0])
    lv = v.shape[1]
    return x[:, :lv], x[:, lv:]


# ----------------------------------- main ----------------------------------- #
if __name__ == "__main__":
    B, LV, LA = 2, 16, 8
    key = jax.random.PRNGKey(0)
    kv, ka, kpv, kpa, kparams = jax.random.split(key, 5)

    v = jax.random.normal(kv, (B, LV, V_DIM), jnp.float32)
    a = jax.random.normal(ka, (B, LA, A_DIM), jnp.float32)
    pos_v = 0.1 * jax.random.normal(kpv, (B, LV, EMBED_DIM), jnp.float32)
    pos_a = 0.1 * jax.random.normal(kpa, (B, LA, EMBED_DIM), jnp.float32)
    params = init_params(kparams)

    out_v, out_a = one_stream_attention(v, a, pos_v, pos_a, params)
    jax.block_until_ready((out_v, out_a))

    ref_v, ref_a = reference(v, a, pos_v, pos_a, params)
    assert out_v.shape == (B, LV, EMBED_DIM) and out_a.shape == (B, LA, EMBED_DIM)
    # tolerance covers bf16 MXU operands (f32 accumulation), approx reciprocal
    # and the tanh-GELU approximation (negligible at these magnitudes)
    assert jnp.allclose(out_v, ref_v, atol=5e-3, rtol=5e-3)
    assert jnp.allclose(out_a, ref_a, atol=5e-3, rtol=5e-3)

    print("KERNEL_OK")
</pallas_src>

<mosaic_0001>
module attributes {stable_mosaic.version = 11 : i64} {
  func.func @_one_stream_attn_kernel(%arg0: i32, %arg1: memref<1x48x32xf32, #tpu.memory_space<vmem>>, %arg2: memref<3x32x256xbf16, #tpu.memory_space<vmem>>, %arg3: memref<3x128x32xbf16, #tpu.memory_space<vmem>>, %arg4: memref<3x288xf32, #tpu.memory_space<vmem>>, %arg5: memref<3x4x32xf32, #tpu.memory_space<vmem>>, %arg6: memref<2x32xf32, #tpu.memory_space<vmem>>, %arg7: memref<1x48x32xf32, #tpu.memory_space<vmem>>) attributes {dimension_semantics = [#tpu.dimension_semantics<parallel>], iteration_bounds = array<i64: 1>, scalar_prefetch = 0 : i64, scratch_operands = 0 : i64, tpu.core_type = #tpu.core_type<tc>, window_params = [{transform_indices = @transform_0, window_bounds = array<i64: 1, 48, 32>}, {pipeline_mode = #tpu.pipeline_mode<synchronous>, transform_indices = @transform_1, window_bounds = array<i64: 3, 32, 256>}, {pipeline_mode = #tpu.pipeline_mode<synchronous>, transform_indices = @transform_2, window_bounds = array<i64: 3, 128, 32>}, {pipeline_mode = #tpu.pipeline_mode<synchronous>, transform_indices = @transform_3, window_bounds = array<i64: 3, 288>}, {pipeline_mode = #tpu.pipeline_mode<synchronous>, transform_indices = @transform_4, window_bounds = array<i64: 3, 4, 32>}, {pipeline_mode = #tpu.pipeline_mode<synchronous>, transform_indices = @transform_5, window_bounds = array<i64: 2, 32>}, {transform_indices = @transform_6, window_bounds = array<i64: 1, 48, 32>}]} {
    %0 = tpu.iota {dimensions = array<i32: 1>} : vector<24x32xi32>
    %c0_i32 = arith.constant 0 : i32
    %1 = vector.broadcast %c0_i32 : i32 to vector<24x32xi32>
    %2 = arith.cmpi sge, %0, %1 : vector<24x32xi32>
    %c8_i32 = arith.constant 8 : i32
    %3 = vector.broadcast %c8_i32 : i32 to vector<24x32xi32>
    %4 = arith.cmpi slt, %0, %3 : vector<24x32xi32>
    %5 = arith.andi %2, %4 : vector<24x32xi1>
    %6 = arith.extui %5 : vector<24x32xi1> to vector<24x32xi32>
    %7 = arith.sitofp %6 : vector<24x32xi32> to vector<24x32xf32>
    %c8_i32_0 = arith.constant 8 : i32
    %8 = vector.broadcast %c8_i32_0 : i32 to vector<24x32xi32>
    %9 = arith.cmpi sge, %0, %8 : vector<24x32xi32>
    %c16_i32 = arith.constant 16 : i32
    %10 = vector.broadcast %c16_i32 : i32 to vector<24x32xi32>
    %11 = arith.cmpi slt, %0, %10 : vector<24x32xi32>
    %12 = arith.andi %9, %11 : vector<24x32xi1>
    %13 = arith.extui %12 : vector<24x32xi1> to vector<24x32xi32>
    %14 = arith.sitofp %13 : vector<24x32xi32> to vector<24x32xf32>
    %c16_i32_1 = arith.constant 16 : i32
    %15 = vector.broadcast %c16_i32_1 : i32 to vector<24x32xi32>
    %16 = arith.cmpi sge, %0, %15 : vector<24x32xi32>
    %c24_i32 = arith.constant 24 : i32
    %17 = vector.broadcast %c24_i32 : i32 to vector<24x32xi32>
    %18 = arith.cmpi slt, %0, %17 : vector<24x32xi32>
    %19 = arith.andi %16, %18 : vector<24x32xi1>
    %20 = arith.extui %19 : vector<24x32xi1> to vector<24x32xi32>
    %21 = arith.sitofp %20 : vector<24x32xi32> to vector<24x32xf32>
    %c24_i32_2 = arith.constant 24 : i32
    %22 = vector.broadcast %c24_i32_2 : i32 to vector<24x32xi32>
    %23 = arith.cmpi sge, %0, %22 : vector<24x32xi32>
    %c32_i32 = arith.constant 32 : i32
    %24 = vector.broadcast %c32_i32 : i32 to vector<24x32xi32>
    %25 = arith.cmpi slt, %0, %24 : vector<24x32xi32>
    %26 = arith.andi %23, %25 : vector<24x32xi1>
    %27 = arith.extui %26 : vector<24x32xi1> to vector<24x32xi32>
    %28 = arith.sitofp %27 : vector<24x32xi32> to vector<24x32xf32>
    %29 = tpu.concatenate %7, %14, %21, %28 in 0 : vector<24x32xf32>, vector<24x32xf32>, vector<24x32xf32>, vector<24x32xf32> -> vector<96x32xf32>
    %c0 = arith.constant 0 : index
    %c0_3 = arith.constant 0 : index
    %c0_4 = arith.constant 0 : index
    %30 = vector.load %arg1[%c0, %c0_3, %c0_4] : memref<1x48x32xf32, #tpu.memory_space<vmem>>, vector<1x48x32xf32>
    %31 = vector.shape_cast %30 : vector<1x48x32xf32> to vector<48x32xf32>
    %c0_5 = arith.constant 0 : index
    %c0_6 = arith.constant 0 : index
    %c0_7 = arith.constant 0 : index
    %32 = vector.load %arg2[%c0_5, %c0_6, %c0_7] : memref<3x32x256xbf16, #tpu.memory_space<vmem>>, vector<1x32x256xbf16>
    %33 = vector.shape_cast %32 : vector<1x32x256xbf16> to vector<32x256xbf16>
    %c0_8 = arith.constant 0 : index
    %c0_9 = arith.constant 0 : index
    %34 = vector.load %arg4[%c0_8, %c0_9] : memref<3x288xf32, #tpu.memory_space<vmem>>, vector<1x288xf32>
    %35 = vector.shape_cast %34 : vector<1x288xf32> to vector<288xf32>
    %c0_10 = arith.constant 0 : index
    %c0_11 = arith.constant 0 : index
    %c0_12 = arith.constant 0 : index
    %36 = vector.load %arg5[%c0_10, %c0_11, %c0_12] : memref<3x4x32xf32, #tpu.memory_space<vmem>>, vector<1x4x32xf32>
    %37 = vector.shape_cast %36 : vector<1x4x32xf32> to vector<4x32xf32>
    %38 = vector.extract_strided_slice %37 {offsets = [0, 0], sizes = [1, 32], strides = [1, 1]} : vector<4x32xf32> to vector<1x32xf32>
    %39 = vector.shape_cast %38 : vector<1x32xf32> to vector<32xf32>
    %40 = vector.extract_strided_slice %37 {offsets = [1, 0], sizes = [1, 32], strides = [1, 1]} : vector<4x32xf32> to vector<1x32xf32>
    %41 = vector.shape_cast %40 : vector<1x32xf32> to vector<32xf32>
    %cst = arith.constant dense<0.000000e+00> : vector<48xf32>
    %42 = vector.multi_reduction <add>, %31, %cst [1] : vector<48x32xf32> to vector<48xf32>
    %43 = vector.shape_cast %42 : vector<48xf32> to vector<48x1xf32>
    %cst_13 = arith.constant 3.200000e+01 : f32
    %44 = vector.broadcast %cst_13 : f32 to vector<48x1xf32>
    %45 = arith.divf %43, %44 : vector<48x1xf32>
    %46 = arith.mulf %31, %31 : vector<48x32xf32>
    %cst_14 = arith.constant dense<0.000000e+00> : vector<48xf32>
    %47 = vector.multi_reduction <add>, %46, %cst_14 [1] : vector<48x32xf32> to vector<48xf32>
    %48 = vector.shape_cast %47 : vector<48xf32> to vector<48x1xf32>
    %cst_15 = arith.constant 3.200000e+01 : f32
    %49 = vector.broadcast %cst_15 : f32 to vector<48x1xf32>
    %50 = arith.divf %48, %49 : vector<48x1xf32>
    %51 = arith.mulf %45, %45 : vector<48x1xf32>
    %52 = arith.subf %50, %51 : vector<48x1xf32>
    %53 = vector.broadcast %45 : vector<48x1xf32> to vector<48x32xf32>
    %54 = arith.subf %31, %53 : vector<48x32xf32>
    %cst_16 = arith.constant 9.99999974E-6 : f32
    %55 = vector.broadcast %cst_16 : f32 to vector<48x1xf32>
    %56 = arith.addf %52, %55 : vector<48x1xf32>
    %57 = math.rsqrt %56 : vector<48x1xf32>
    %58 = vector.broadcast %57 : vector<48x1xf32> to vector<48x32xf32>
    %59 = arith.mulf %54, %58 : vector<48x32xf32>
    %60 = vector.shape_cast %39 : vector<32xf32> to vector<1x32xf32>
    %61 = vector.broadcast %60 : vector<1x32xf32> to vector<48x32xf32>
    %62 = arith.mulf %59, %61 : vector<48x32xf32>
    %63 = vector.shape_cast %41 : vector<32xf32> to vector<1x32xf32>
    %64 = vector.broadcast %63 : vector<1x32xf32> to vector<48x32xf32>
    %65 = arith.addf %62, %64 : vector<48x32xf32>
    %66 = vector.extract_strided_slice %33 {offsets = [0, 0], sizes = [32, 96], strides = [1, 1]} : vector<32x256xbf16> to vector<32x96xbf16>
    %67 = arith.truncf %65 : vector<48x32xf32> to vector<48x32xbf16>
    %cst_17 = arith.constant dense<0.000000e+00> : vector<48x96xf32>
    %68 = tpu.matmul %67, %66, %cst_17 {dimension_numbers = #tpu.dot_dimension_numbers<[1], [0], [0], [1], [0, 0, 1, 1], [], []>} : vector<48x32xbf16>, vector<32x96xbf16>, vector<48x96xf32> -> vector<48x96xf32>
    %69 = vector.extract_strided_slice %35 {offsets = [0], sizes = [96], strides = [1]} : vector<288xf32> to vector<96xf32>
    %70 = vector.shape_cast %69 : vector<96xf32> to vector<1x96xf32>
    %71 = vector.broadcast %70 : vector<1x96xf32> to vector<48x96xf32>
    %72 = arith.addf %68, %71 : vector<48x96xf32>
    %73 = vector.extract_strided_slice %72 {offsets = [0, 0], sizes = [24, 96], strides = [1, 1]} : vector<48x96xf32> to vector<24x96xf32>
    %74 = vector.extract_strided_slice %73 {offsets = [0, 0], sizes = [24, 32], strides = [1, 1]} : vector<24x96xf32> to vector<24x32xf32>
    %75 = arith.truncf %74 : vector<24x32xf32> to vector<24x32xbf16>
    %76 = vector.extract_strided_slice %73 {offsets = [0, 32], sizes = [24, 32], strides = [1, 1]} : vector<24x96xf32> to vector<24x32xf32>
    %77 = tpu.concatenate %76, %76, %76, %76 in 0 : vector<24x32xf32>, vector<24x32xf32>, vector<24x32xf32>, vector<24x32xf32> -> vector<96x32xf32>
    %78 = arith.mulf %77, %29 : vector<96x32xf32>
    %79 = arith.truncf %78 : vector<96x32xf32> to vector<96x32xbf16>
    %80 = vector.extract_strided_slice %73 {offsets = [0, 64], sizes = [24, 32], strides = [1, 1]} : vector<24x96xf32> to vector<24x32xf32>
    %81 = tpu.concatenate %80, %80, %80, %80 in 0 : vector<24x32xf32>, vector<24x32xf32>, vector<24x32xf32>, vector<24x32xf32> -> vector<96x32xf32>
    %82 = arith.mulf %81, %29 : vector<96x32xf32>
    %83 = arith.truncf %82 : vector<96x32xf32> to vector<96x32xbf16>
    %cst_18 = arith.constant dense<0.000000e+00> : vector<24x96xf32>
    %84 = tpu.matmul %75, %79, %cst_18 {dimension_numbers = #tpu.dot_dimension_numbers<[1], [1], [0], [0], [0, 0, 1, 0], [], []>} : vector<24x32xbf16>, vector<96x32xbf16>, vector<24x96xf32> -> vector<24x96xf32>
    %cst_19 = arith.constant dense<0xFF800000> : vector<24xf32>
    %85 = vector.multi_reduction <maximumf>, %84, %cst_19 [1] : vector<24x96xf32> to vector<24xf32>
    %86 = vector.shape_cast %85 : vector<24xf32> to vector<24x1xf32>
    %87 = vector.broadcast %86 : vector<24x1xf32> to vector<24x96xf32>
    %88 = arith.subf %84, %87 : vector<24x96xf32>
    %89 = math.exp %88 : vector<24x96xf32>
    %90 = vector.extract_strided_slice %89 {offsets = [0, 0], sizes = [24, 24], strides = [1, 1]} : vector<24x96xf32> to vector<24x24xf32>
    %cst_20 = arith.constant dense<0.000000e+00> : vector<24xf32>
    %91 = vector.multi_reduction <add>, %90, %cst_20 [1] : vector<24x24xf32> to vector<24xf32>
    %92 = vector.shape_cast %91 : vector<24xf32> to vector<24x1xf32>
    %93 = tpu.reciprocal %92 {approx = true} : vector<24x1xf32> -> vector<24x1xf32>
    %94 = vector.shape_cast %93 : vector<24x1xf32> to vector<24x1xf32>
    %95 = vector.broadcast %94 : vector<24x1xf32> to vector<24x24xf32>
    %96 = vector.extract_strided_slice %89 {offsets = [0, 24], sizes = [24, 24], strides = [1, 1]} : vector<24x96xf32> to vector<24x24xf32>
    %cst_21 = arith.constant dense<0.000000e+00> : vector<24xf32>
    %97 = vector.multi_reduction <add>, %96, %cst_21 [1] : vector<24x24xf32> to vector<24xf32>
    %98 = vector.shape_cast %97 : vector<24xf32> to vector<24x1xf32>
    %99 = tpu.reciprocal %98 {approx = true} : vector<24x1xf32> -> vector<24x1xf32>
    %100 = vector.shape_cast %99 : vector<24x1xf32> to vector<24x1xf32>
    %101 = vector.broadcast %100 : vector<24x1xf32> to vector<24x24xf32>
    %102 = vector.extract_strided_slice %89 {offsets = [0, 48], sizes = [24, 24], strides = [1, 1]} : vector<24x96xf32> to vector<24x24xf32>
    %cst_22 = arith.constant dense<0.000000e+00> : vector<24xf32>
    %103 = vector.multi_reduction <add>, %102, %cst_22 [1] : vector<24x24xf32> to vector<24xf32>
    %104 = vector.shape_cast %103 : vector<24xf32> to vector<24x1xf32>
    %105 = tpu.reciprocal %104 {approx = true} : vector<24x1xf32> -> vector<24x1xf32>
    %106 = vector.shape_cast %105 : vector<24x1xf32> to vector<24x1xf32>
    %107 = vector.broadcast %106 : vector<24x1xf32> to vector<24x24xf32>
    %108 = vector.extract_strided_slice %89 {offsets = [0, 72], sizes = [24, 24], strides = [1, 1]} : vector<24x96xf32> to vector<24x24xf32>
    %cst_23 = arith.constant dense<0.000000e+00> : vector<24xf32>
    %109 = vector.multi_reduction <add>, %108, %cst_23 [1] : vector<24x24xf32> to vector<24xf32>
    %110 = vector.shape_cast %109 : vector<24xf32> to vector<24x1xf32>
    %111 = tpu.reciprocal %110 {approx = true} : vector<24x1xf32> -> vector<24x1xf32>
    %112 = vector.shape_cast %111 : vector<24x1xf32> to vector<24x1xf32>
    %113 = vector.broadcast %112 : vector<24x1xf32> to vector<24x24xf32>
    %114 = tpu.concatenate %95, %101, %107, %113 in 1 : vector<24x24xf32>, vector<24x24xf32>, vector<24x24xf32>, vector<24x24xf32> -> vector<24x96xf32>
    %115 = arith.mulf %89, %114 : vector<24x96xf32>
    %116 = arith.truncf %115 : vector<24x96xf32> to vector<24x96xbf16>
    %cst_24 = arith.constant dense<0.000000e+00> : vector<24x32xf32>
    %117 = tpu.matmul %116, %83, %cst_24 {dimension_numbers = #tpu.dot_dimension_numbers<[1], [0], [0], [1], [0, 0, 1, 1], [], []>} : vector<24x96xbf16>, vector<96x32xbf16>, vector<24x32xf32> -> vector<24x32xf32>
    %118 = vector.extract_strided_slice %72 {offsets = [24, 0], sizes = [24, 96], strides = [1, 1]} : vector<48x96xf32> to vector<24x96xf32>
    %119 = vector.extract_strided_slice %118 {offsets = [0, 0], sizes = [24, 32], strides = [1, 1]} : vector<24x96xf32> to vector<24x32xf32>
    %120 = arith.truncf %119 : vector<24x32xf32> to vector<24x32xbf16>
    %121 = vector.extract_strided_slice %118 {offsets = [0, 32], sizes = [24, 32], strides = [1, 1]} : vector<24x96xf32> to vector<24x32xf32>
    %122 = tpu.concatenate %121, %121, %121, %121 in 0 : vector<24x32xf32>, vector<24x32xf32>, vector<24x32xf32>, vector<24x32xf32> -> vector<96x32xf32>
    %123 = arith.mulf %122, %29 : vector<96x32xf32>
    %124 = arith.truncf %123 : vector<96x32xf32> to vector<96x32xbf16>
    %125 = vector.extract_strided_slice %118 {offsets = [0, 64], sizes = [24, 32], strides = [1, 1]} : vector<24x96xf32> to vector<24x32xf32>
    %126 = tpu.concatenate %125, %125, %125, %125 in 0 : vector<24x32xf32>, vector<24x32xf32>, vector<24x32xf32>, vector<24x32xf32> -> vector<96x32xf32>
    %127 = arith.mulf %126, %29 : vector<96x32xf32>
    %128 = arith.truncf %127 : vector<96x32xf32> to vector<96x32xbf16>
    %cst_25 = arith.constant dense<0.000000e+00> : vector<24x96xf32>
    %129 = tpu.matmul %120, %124, %cst_25 {dimension_numbers = #tpu.dot_dimension_numbers<[1], [1], [0], [0], [0, 0, 1, 0], [], []>} : vector<24x32xbf16>, vector<96x32xbf16>, vector<24x96xf32> -> vector<24x96xf32>
    %cst_26 = arith.constant dense<0xFF800000> : vector<24xf32>
    %130 = vector.multi_reduction <maximumf>, %129, %cst_26 [1] : vector<24x96xf32> to vector<24xf32>
    %131 = vector.shape_cast %130 : vector<24xf32> to vector<24x1xf32>
    %132 = vector.broadcast %131 : vector<24x1xf32> to vector<24x96xf32>
    %133 = arith.subf %129, %132 : vector<24x96xf32>
    %134 = math.exp %133 : vector<24x96xf32>
    %135 = vector.extract_strided_slice %134 {offsets = [0, 0], sizes = [24, 24], strides = [1, 1]} : vector<24x96xf32> to vector<24x24xf32>
    %cst_27 = arith.constant dense<0.000000e+00> : vector<24xf32>
    %136 = vector.multi_reduction <add>, %135, %cst_27 [1] : vector<24x24xf32> to vector<24xf32>
    %137 = vector.shape_cast %136 : vector<24xf32> to vector<24x1xf32>
    %138 = tpu.reciprocal %137 {approx = true} : vector<24x1xf32> -> vector<24x1xf32>
    %139 = vector.shape_cast %138 : vector<24x1xf32> to vector<24x1xf32>
    %140 = vector.broadcast %139 : vector<24x1xf32> to vector<24x24xf32>
    %141 = vector.extract_strided_slice %134 {offsets = [0, 24], sizes = [24, 24], strides = [1, 1]} : vector<24x96xf32> to vector<24x24xf32>
    %cst_28 = arith.constant dense<0.000000e+00> : vector<24xf32>
    %142 = vector.multi_reduction <add>, %141, %cst_28 [1] : vector<24x24xf32> to vector<24xf32>
    %143 = vector.shape_cast %142 : vector<24xf32> to vector<24x1xf32>
    %144 = tpu.reciprocal %143 {approx = true} : vector<24x1xf32> -> vector<24x1xf32>
    %145 = vector.shape_cast %144 : vector<24x1xf32> to vector<24x1xf32>
    %146 = vector.broadcast %145 : vector<24x1xf32> to vector<24x24xf32>
    %147 = vector.extract_strided_slice %134 {offsets = [0, 48], sizes = [24, 24], strides = [1, 1]} : vector<24x96xf32> to vector<24x24xf32>
    %cst_29 = arith.constant dense<0.000000e+00> : vector<24xf32>
    %148 = vector.multi_reduction <add>, %147, %cst_29 [1] : vector<24x24xf32> to vector<24xf32>
    %149 = vector.shape_cast %148 : vector<24xf32> to vector<24x1xf32>
    %150 = tpu.reciprocal %149 {approx = true} : vector<24x1xf32> -> vector<24x1xf32>
    %151 = vector.shape_cast %150 : vector<24x1xf32> to vector<24x1xf32>
    %152 = vector.broadcast %151 : vector<24x1xf32> to vector<24x24xf32>
    %153 = vector.extract_strided_slice %134 {offsets = [0, 72], sizes = [24, 24], strides = [1, 1]} : vector<24x96xf32> to vector<24x24xf32>
    %cst_30 = arith.constant dense<0.000000e+00> : vector<24xf32>
    %154 = vector.multi_reduction <add>, %153, %cst_30 [1] : vector<24x24xf32> to vector<24xf32>
    %155 = vector.shape_cast %154 : vector<24xf32> to vector<24x1xf32>
    %156 = tpu.reciprocal %155 {approx = true} : vector<24x1xf32> -> vector<24x1xf32>
    %157 = vector.shape_cast %156 : vector<24x1xf32> to vector<24x1xf32>
    %158 = vector.broadcast %157 : vector<24x1xf32> to vector<24x24xf32>
    %159 = tpu.concatenate %140, %146, %152, %158 in 1 : vector<24x24xf32>, vector<24x24xf32>, vector<24x24xf32>, vector<24x24xf32> -> vector<24x96xf32>
    %160 = arith.mulf %134, %159 : vector<24x96xf32>
    %161 = arith.truncf %160 : vector<24x96xf32> to vector<24x96xbf16>
    %cst_31 = arith.constant dense<0.000000e+00> : vector<24x32xf32>
    %162 = tpu.matmul %161, %128, %cst_31 {dimension_numbers = #tpu.dot_dimension_numbers<[1], [0], [0], [1], [0, 0, 1, 1], [], []>} : vector<24x96xbf16>, vector<96x32xbf16>, vector<24x32xf32> -> vector<24x32xf32>
    %163 = tpu.concatenate %117, %162 in 0 : vector<24x32xf32>, vector<24x32xf32> -> vector<48x32xf32>
    %164 = vector.extract_strided_slice %33 {offsets = [0, 96], sizes = [32, 32], strides = [1, 1]} : vector<32x256xbf16> to vector<32x32xbf16>
    %165 = arith.truncf %163 : vector<48x32xf32> to vector<48x32xbf16>
    %cst_32 = arith.constant dense<0.000000e+00> : vector<48x32xf32>
    %166 = tpu.matmul %165, %164, %cst_32 {dimension_numbers = #tpu.dot_dimension_numbers<[1], [0], [0], [1], [0, 0, 1, 1], [], []>} : vector<48x32xbf16>, vector<32x32xbf16>, vector<48x32xf32> -> vector<48x32xf32>
    %167 = arith.addf %31, %166 : vector<48x32xf32>
    %168 = vector.extract_strided_slice %35 {offsets = [96], sizes = [32], strides = [1]} : vector<288xf32> to vector<32xf32>
    %169 = vector.shape_cast %168 : vector<32xf32> to vector<1x32xf32>
    %170 = vector.broadcast %169 : vector<1x32xf32> to vector<48x32xf32>
    %171 = arith.addf %167, %170 : vector<48x32xf32>
    %172 = vector.extract_strided_slice %37 {offsets = [2, 0], sizes = [1, 32], strides = [1, 1]} : vector<4x32xf32> to vector<1x32xf32>
    %173 = vector.shape_cast %172 : vector<1x32xf32> to vector<32xf32>
    %174 = vector.extract_strided_slice %37 {offsets = [3, 0], sizes = [1, 32], strides = [1, 1]} : vector<4x32xf32> to vector<1x32xf32>
    %175 = vector.shape_cast %174 : vector<1x32xf32> to vector<32xf32>
    %cst_33 = arith.constant dense<0.000000e+00> : vector<48xf32>
    %176 = vector.multi_reduction <add>, %171, %cst_33 [1] : vector<48x32xf32> to vector<48xf32>
    %177 = vector.shape_cast %176 : vector<48xf32> to vector<48x1xf32>
    %cst_34 = arith.constant 3.200000e+01 : f32
    %178 = vector.broadcast %cst_34 : f32 to vector<48x1xf32>
    %179 = arith.divf %177, %178 : vector<48x1xf32>
    %180 = arith.mulf %171, %171 : vector<48x32xf32>
    %cst_35 = arith.constant dense<0.000000e+00> : vector<48xf32>
    %181 = vector.multi_reduction <add>, %180, %cst_35 [1] : vector<48x32xf32> to vector<48xf32>
    %182 = vector.shape_cast %181 : vector<48xf32> to vector<48x1xf32>
    %cst_36 = arith.constant 3.200000e+01 : f32
    %183 = vector.broadcast %cst_36 : f32 to vector<48x1xf32>
    %184 = arith.divf %182, %183 : vector<48x1xf32>
    %185 = arith.mulf %179, %179 : vector<48x1xf32>
    %186 = arith.subf %184, %185 : vector<48x1xf32>
    %187 = vector.broadcast %179 : vector<48x1xf32> to vector<48x32xf32>
    %188 = arith.subf %171, %187 : vector<48x32xf32>
    %cst_37 = arith.constant 9.99999974E-6 : f32
    %189 = vector.broadcast %cst_37 : f32 to vector<48x1xf32>
    %190 = arith.addf %186, %189 : vector<48x1xf32>
    %191 = math.rsqrt %190 : vector<48x1xf32>
    %192 = vector.broadcast %191 : vector<48x1xf32> to vector<48x32xf32>
    %193 = arith.mulf %188, %192 : vector<48x32xf32>
    %194 = vector.shape_cast %173 : vector<32xf32> to vector<1x32xf32>
    %195 = vector.broadcast %194 : vector<1x32xf32> to vector<48x32xf32>
    %196 = arith.mulf %193, %195 : vector<48x32xf32>
    %197 = vector.shape_cast %175 : vector<32xf32> to vector<1x32xf32>
    %198 = vector.broadcast %197 : vector<1x32xf32> to vector<48x32xf32>
    %199 = arith.addf %196, %198 : vector<48x32xf32>
    %200 = vector.extract_strided_slice %33 {offsets = [0, 128], sizes = [32, 128], strides = [1, 1]} : vector<32x256xbf16> to vector<32x128xbf16>
    %201 = arith.truncf %199 : vector<48x32xf32> to vector<48x32xbf16>
    %cst_38 = arith.constant dense<0.000000e+00> : vector<48x128xf32>
    %202 = tpu.matmul %201, %200, %cst_38 {dimension_numbers = #tpu.dot_dimension_numbers<[1], [0], [0], [1], [0, 0, 1, 1], [], []>} : vector<48x32xbf16>, vector<32x128xbf16>, vector<48x128xf32> -> vector<48x128xf32>
    %203 = vector.extract_strided_slice %35 {offsets = [128], sizes = [128], strides = [1]} : vector<288xf32> to vector<128xf32>
    %204 = vector.shape_cast %203 : vector<128xf32> to vector<1x128xf32>
    %205 = vector.broadcast %204 : vector<1x128xf32> to vector<48x128xf32>
    %206 = arith.addf %202, %205 : vector<48x128xf32>
    %207 = arith.mulf %206, %206 : vector<48x128xf32>
    %208 = arith.mulf %206, %207 : vector<48x128xf32>
    %cst_39 = arith.constant 4.471500e-02 : f32
    %209 = vector.broadcast %cst_39 : f32 to vector<48x128xf32>
    %210 = arith.mulf %209, %208 : vector<48x128xf32>
    %211 = arith.addf %206, %210 : vector<48x128xf32>
    %cst_40 = arith.constant 0.797884583 : f32
    %212 = vector.broadcast %cst_40 : f32 to vector<48x128xf32>
    %213 = arith.mulf %212, %211 : vector<48x128xf32>
    %214 = math.tanh %213 : vector<48x128xf32>
    %cst_41 = arith.constant 1.000000e+00 : f32
    %215 = vector.broadcast %cst_41 : f32 to vector<48x128xf32>
    %216 = arith.addf %215, %214 : vector<48x128xf32>
    %cst_42 = arith.constant 5.000000e-01 : f32
    %217 = vector.broadcast %cst_42 : f32 to vector<48x128xf32>
    %218 = arith.mulf %217, %216 : vector<48x128xf32>
    %219 = arith.mulf %206, %218 : vector<48x128xf32>
    %c0_43 = arith.constant 0 : index
    %c0_44 = arith.constant 0 : index
    %c0_45 = arith.constant 0 : index
    %220 = vector.load %arg3[%c0_43, %c0_44, %c0_45] : memref<3x128x32xbf16, #tpu.memory_space<vmem>>, vector<1x128x32xbf16>
    %221 = vector.shape_cast %220 : vector<1x128x32xbf16> to vector<128x32xbf16>
    %222 = arith.truncf %219 : vector<48x128xf32> to vector<48x128xbf16>
    %cst_46 = arith.constant dense<0.000000e+00> : vector<48x32xf32>
    %223 = tpu.matmul %222, %221, %cst_46 {dimension_numbers = #tpu.dot_dimension_numbers<[1], [0], [0], [1], [0, 0, 1, 1], [], []>} : vector<48x128xbf16>, vector<128x32xbf16>, vector<48x32xf32> -> vector<48x32xf32>
    %224 = arith.addf %171, %223 : vector<48x32xf32>
    %225 = vector.extract_strided_slice %35 {offsets = [256], sizes = [32], strides = [1]} : vector<288xf32> to vector<32xf32>
    %226 = vector.shape_cast %225 : vector<32xf32> to vector<1x32xf32>
    %227 = vector.broadcast %226 : vector<1x32xf32> to vector<48x32xf32>
    %228 = arith.addf %224, %227 : vector<48x32xf32>
    %c1 = arith.constant 1 : index
    %c0_47 = arith.constant 0 : index
    %c0_48 = arith.constant 0 : index
    %229 = vector.load %arg2[%c1, %c0_47, %c0_48] : memref<3x32x256xbf16, #tpu.memory_space<vmem>>, vector<1x32x256xbf16>
    %230 = vector.shape_cast %229 : vector<1x32x256xbf16> to vector<32x256xbf16>
    %c1_49 = arith.constant 1 : index
    %c0_50 = arith.constant 0 : index
    %231 = vector.load %arg4[%c1_49, %c0_50] : memref<3x288xf32, #tpu.memory_space<vmem>>, vector<1x288xf32>
    %232 = vector.shape_cast %231 : vector<1x288xf32> to vector<288xf32>
    %c1_51 = arith.constant 1 : index
    %c0_52 = arith.constant 0 : index
    %c0_53 = arith.constant 0 : index
    %233 = vector.load %arg5[%c1_51, %c0_52, %c0_53] : memref<3x4x32xf32, #tpu.memory_space<vmem>>, vector<1x4x32xf32>
    %234 = vector.shape_cast %233 : vector<1x4x32xf32> to vector<4x32xf32>
    %235 = vector.extract_strided_slice %234 {offsets = [0, 0], sizes = [1, 32], strides = [1, 1]} : vector<4x32xf32> to vector<1x32xf32>
    %236 = vector.shape_cast %235 : vector<1x32xf32> to vector<32xf32>
    %237 = vector.extract_strided_slice %234 {offsets = [1, 0], sizes = [1, 32], strides = [1, 1]} : vector<4x32xf32> to vector<1x32xf32>
    %238 = vector.shape_cast %237 : vector<1x32xf32> to vector<32xf32>
    %cst_54 = arith.constant dense<0.000000e+00> : vector<48xf32>
    %239 = vector.multi_reduction <add>, %228, %cst_54 [1] : vector<48x32xf32> to vector<48xf32>
    %240 = vector.shape_cast %239 : vector<48xf32> to vector<48x1xf32>
    %cst_55 = arith.constant 3.200000e+01 : f32
    %241 = vector.broadcast %cst_55 : f32 to vector<48x1xf32>
    %242 = arith.divf %240, %241 : vector<48x1xf32>
    %243 = arith.mulf %228, %228 : vector<48x32xf32>
    %cst_56 = arith.constant dense<0.000000e+00> : vector<48xf32>
    %244 = vector.multi_reduction <add>, %243, %cst_56 [1] : vector<48x32xf32> to vector<48xf32>
    %245 = vector.shape_cast %244 : vector<48xf32> to vector<48x1xf32>
    %cst_57 = arith.constant 3.200000e+01 : f32
    %246 = vector.broadcast %cst_57 : f32 to vector<48x1xf32>
    %247 = arith.divf %245, %246 : vector<48x1xf32>
    %248 = arith.mulf %242, %242 : vector<48x1xf32>
    %249 = arith.subf %247, %248 : vector<48x1xf32>
    %250 = vector.broadcast %242 : vector<48x1xf32> to vector<48x32xf32>
    %251 = arith.subf %228, %250 : vector<48x32xf32>
    %cst_58 = arith.constant 9.99999974E-6 : f32
    %252 = vector.broadcast %cst_58 : f32 to vector<48x1xf32>
    %253 = arith.addf %249, %252 : vector<48x1xf32>
    %254 = math.rsqrt %253 : vector<48x1xf32>
    %255 = vector.broadcast %254 : vector<48x1xf32> to vector<48x32xf32>
    %256 = arith.mulf %251, %255 : vector<48x32xf32>
    %257 = vector.shape_cast %236 : vector<32xf32> to vector<1x32xf32>
    %258 = vector.broadcast %257 : vector<1x32xf32> to vector<48x32xf32>
    %259 = arith.mulf %256, %258 : vector<48x32xf32>
    %260 = vector.shape_cast %238 : vector<32xf32> to vector<1x32xf32>
    %261 = vector.broadcast %260 : vector<1x32xf32> to vector<48x32xf32>
    %262 = arith.addf %259, %261 : vector<48x32xf32>
    %263 = vector.extract_strided_slice %230 {offsets = [0, 0], sizes = [32, 96], strides = [1, 1]} : vector<32x256xbf16> to vector<32x96xbf16>
    %264 = arith.truncf %262 : vector<48x32xf32> to vector<48x32xbf16>
    %cst_59 = arith.constant dense<0.000000e+00> : vector<48x96xf32>
    %265 = tpu.matmul %264, %263, %cst_59 {dimension_numbers = #tpu.dot_dimension_numbers<[1], [0], [0], [1], [0, 0, 1, 1], [], []>} : vector<48x32xbf16>, vector<32x96xbf16>, vector<48x96xf32> -> vector<48x96xf32>
    %266 = vector.extract_strided_slice %232 {offsets = [0], sizes = [96], strides = [1]} : vector<288xf32> to vector<96xf32>
    %267 = vector.shape_cast %266 : vector<96xf32> to vector<1x96xf32>
    %268 = vector.broadcast %267 : vector<1x96xf32> to vector<48x96xf32>
    %269 = arith.addf %265, %268 : vector<48x96xf32>
    %270 = vector.extract_strided_slice %269 {offsets = [0, 0], sizes = [24, 96], strides = [1, 1]} : vector<48x96xf32> to vector<24x96xf32>
    %271 = vector.extract_strided_slice %270 {offsets = [0, 0], sizes = [24, 32], strides = [1, 1]} : vector<24x96xf32> to vector<24x32xf32>
    %272 = arith.truncf %271 : vector<24x32xf32> to vector<24x32xbf16>
    %273 = vector.extract_strided_slice %270 {offsets = [0, 32], sizes = [24, 32], strides = [1, 1]} : vector<24x96xf32> to vector<24x32xf32>
    %274 = tpu.concatenate %273, %273, %273, %273 in 0 : vector<24x32xf32>, vector<24x32xf32>, vector<24x32xf32>, vector<24x32xf32> -> vector<96x32xf32>
    %275 = arith.mulf %274, %29 : vector<96x32xf32>
    %276 = arith.truncf %275 : vector<96x32xf32> to vector<96x32xbf16>
    %277 = vector.extract_strided_slice %270 {offsets = [0, 64], sizes = [24, 32], strides = [1, 1]} : vector<24x96xf32> to vector<24x32xf32>
    %278 = tpu.concatenate %277, %277, %277, %277 in 0 : vector<24x32xf32>, vector<24x32xf32>, vector<24x32xf32>, vector<24x32xf32> -> vector<96x32xf32>
    %279 = arith.mulf %278, %29 : vector<96x32xf32>
    %280 = arith.truncf %279 : vector<96x32xf32> to vector<96x32xbf16>
    %cst_60 = arith.constant dense<0.000000e+00> : vector<24x96xf32>
    %281 = tpu.matmul %272, %276, %cst_60 {dimension_numbers = #tpu.dot_dimension_numbers<[1], [1], [0], [0], [0, 0, 1, 0], [], []>} : vector<24x32xbf16>, vector<96x32xbf16>, vector<24x96xf32> -> vector<24x96xf32>
    %cst_61 = arith.constant dense<0xFF800000> : vector<24xf32>
    %282 = vector.multi_reduction <maximumf>, %281, %cst_61 [1] : vector<24x96xf32> to vector<24xf32>
    %283 = vector.shape_cast %282 : vector<24xf32> to vector<24x1xf32>
    %284 = vector.broadcast %283 : vector<24x1xf32> to vector<24x96xf32>
    %285 = arith.subf %281, %284 : vector<24x96xf32>
    %286 = math.exp %285 : vector<24x96xf32>
    %287 = vector.extract_strided_slice %286 {offsets = [0, 0], sizes = [24, 24], strides = [1, 1]} : vector<24x96xf32> to vector<24x24xf32>
    %cst_62 = arith.constant dense<0.000000e+00> : vector<24xf32>
    %288 = vector.multi_reduction <add>, %287, %cst_62 [1] : vector<24x24xf32> to vector<24xf32>
    %289 = vector.shape_cast %288 : vector<24xf32> to vector<24x1xf32>
    %290 = tpu.reciprocal %289 {approx = true} : vector<24x1xf32> -> vector<24x1xf32>
    %291 = vector.shape_cast %290 : vector<24x1xf32> to vector<24x1xf32>
    %292 = vector.broadcast %291 : vector<24x1xf32> to vector<24x24xf32>
    %293 = vector.extract_strided_slice %286 {offsets = [0, 24], sizes = [24, 24], strides = [1, 1]} : vector<24x96xf32> to vector<24x24xf32>
    %cst_63 = arith.constant dense<0.000000e+00> : vector<24xf32>
    %294 = vector.multi_reduction <add>, %293, %cst_63 [1] : vector<24x24xf32> to vector<24xf32>
    %295 = vector.shape_cast %294 : vector<24xf32> to vector<24x1xf32>
    %296 = tpu.reciprocal %295 {approx = true} : vector<24x1xf32> -> vector<24x1xf32>
    %297 = vector.shape_cast %296 : vector<24x1xf32> to vector<24x1xf32>
    %298 = vector.broadcast %297 : vector<24x1xf32> to vector<24x24xf32>
    %299 = vector.extract_strided_slice %286 {offsets = [0, 48], sizes = [24, 24], strides = [1, 1]} : vector<24x96xf32> to vector<24x24xf32>
    %cst_64 = arith.constant dense<0.000000e+00> : vector<24xf32>
    %300 = vector.multi_reduction <add>, %299, %cst_64 [1] : vector<24x24xf32> to vector<24xf32>
    %301 = vector.shape_cast %300 : vector<24xf32> to vector<24x1xf32>
    %302 = tpu.reciprocal %301 {approx = true} : vector<24x1xf32> -> vector<24x1xf32>
    %303 = vector.shape_cast %302 : vector<24x1xf32> to vector<24x1xf32>
    %304 = vector.broadcast %303 : vector<24x1xf32> to vector<24x24xf32>
    %305 = vector.extract_strided_slice %286 {offsets = [0, 72], sizes = [24, 24], strides = [1, 1]} : vector<24x96xf32> to vector<24x24xf32>
    %cst_65 = arith.constant dense<0.000000e+00> : vector<24xf32>
    %306 = vector.multi_reduction <add>, %305, %cst_65 [1] : vector<24x24xf32> to vector<24xf32>
    %307 = vector.shape_cast %306 : vector<24xf32> to vector<24x1xf32>
    %308 = tpu.reciprocal %307 {approx = true} : vector<24x1xf32> -> vector<24x1xf32>
    %309 = vector.shape_cast %308 : vector<24x1xf32> to vector<24x1xf32>
    %310 = vector.broadcast %309 : vector<24x1xf32> to vector<24x24xf32>
    %311 = tpu.concatenate %292, %298, %304, %310 in 1 : vector<24x24xf32>, vector<24x24xf32>, vector<24x24xf32>, vector<24x24xf32> -> vector<24x96xf32>
    %312 = arith.mulf %286, %311 : vector<24x96xf32>
    %313 = arith.truncf %312 : vector<24x96xf32> to vector<24x96xbf16>
    %cst_66 = arith.constant dense<0.000000e+00> : vector<24x32xf32>
    %314 = tpu.matmul %313, %280, %cst_66 {dimension_numbers = #tpu.dot_dimension_numbers<[1], [0], [0], [1], [0, 0, 1, 1], [], []>} : vector<24x96xbf16>, vector<96x32xbf16>, vector<24x32xf32> -> vector<24x32xf32>
    %315 = vector.extract_strided_slice %269 {offsets = [24, 0], sizes = [24, 96], strides = [1, 1]} : vector<48x96xf32> to vector<24x96xf32>
    %316 = vector.extract_strided_slice %315 {offsets = [0, 0], sizes = [24, 32], strides = [1, 1]} : vector<24x96xf32> to vector<24x32xf32>
    %317 = arith.truncf %316 : vector<24x32xf32> to vector<24x32xbf16>
    %318 = vector.extract_strided_slice %315 {offsets = [0, 32], sizes = [24, 32], strides = [1, 1]} : vector<24x96xf32> to vector<24x32xf32>
    %319 = tpu.concatenate %318, %318, %318, %318 in 0 : vector<24x32xf32>, vector<24x32xf32>, vector<24x32xf32>, vector<24x32xf32> -> vector<96x32xf32>
    %320 = arith.mulf %319, %29 : vector<96x32xf32>
    %321 = arith.truncf %320 : vector<96x32xf32> to vector<96x32xbf16>
    %322 = vector.extract_strided_slice %315 {offsets = [0, 64], sizes = [24, 32], strides = [1, 1]} : vector<24x96xf32> to vector<24x32xf32>
    %323 = tpu.concatenate %322, %322, %322, %322 in 0 : vector<24x32xf32>, vector<24x32xf32>, vector<24x32xf32>, vector<24x32xf32> -> vector<96x32xf32>
    %324 = arith.mulf %323, %29 : vector<96x32xf32>
    %325 = arith.truncf %324 : vector<96x32xf32> to vector<96x32xbf16>
    %cst_67 = arith.constant dense<0.000000e+00> : vector<24x96xf32>
    %326 = tpu.matmul %317, %321, %cst_67 {dimension_numbers = #tpu.dot_dimension_numbers<[1], [1], [0], [0], [0, 0, 1, 0], [], []>} : vector<24x32xbf16>, vector<96x32xbf16>, vector<24x96xf32> -> vector<24x96xf32>
    %cst_68 = arith.constant dense<0xFF800000> : vector<24xf32>
    %327 = vector.multi_reduction <maximumf>, %326, %cst_68 [1] : vector<24x96xf32> to vector<24xf32>
    %328 = vector.shape_cast %327 : vector<24xf32> to vector<24x1xf32>
    %329 = vector.broadcast %328 : vector<24x1xf32> to vector<24x96xf32>
    %330 = arith.subf %326, %329 : vector<24x96xf32>
    %331 = math.exp %330 : vector<24x96xf32>
    %332 = vector.extract_strided_slice %331 {offsets = [0, 0], sizes = [24, 24], strides = [1, 1]} : vector<24x96xf32> to vector<24x24xf32>
    %cst_69 = arith.constant dense<0.000000e+00> : vector<24xf32>
    %333 = vector.multi_reduction <add>, %332, %cst_69 [1] : vector<24x24xf32> to vector<24xf32>
    %334 = vector.shape_cast %333 : vector<24xf32> to vector<24x1xf32>
    %335 = tpu.reciprocal %334 {approx = true} : vector<24x1xf32> -> vector<24x1xf32>
    %336 = vector.shape_cast %335 : vector<24x1xf32> to vector<24x1xf32>
    %337 = vector.broadcast %336 : vector<24x1xf32> to vector<24x24xf32>
    %338 = vector.extract_strided_slice %331 {offsets = [0, 24], sizes = [24, 24], strides = [1, 1]} : vector<24x96xf32> to vector<24x24xf32>
    %cst_70 = arith.constant dense<0.000000e+00> : vector<24xf32>
    %339 = vector.multi_reduction <add>, %338, %cst_70 [1] : vector<24x24xf32> to vector<24xf32>
    %340 = vector.shape_cast %339 : vector<24xf32> to vector<24x1xf32>
    %341 = tpu.reciprocal %340 {approx = true} : vector<24x1xf32> -> vector<24x1xf32>
    %342 = vector.shape_cast %341 : vector<24x1xf32> to vector<24x1xf32>
    %343 = vector.broadcast %342 : vector<24x1xf32> to vector<24x24xf32>
    %344 = vector.extract_strided_slice %331 {offsets = [0, 48], sizes = [24, 24], strides = [1, 1]} : vector<24x96xf32> to vector<24x24xf32>
    %cst_71 = arith.constant dense<0.000000e+00> : vector<24xf32>
    %345 = vector.multi_reduction <add>, %344, %cst_71 [1] : vector<24x24xf32> to vector<24xf32>
    %346 = vector.shape_cast %345 : vector<24xf32> to vector<24x1xf32>
    %347 = tpu.reciprocal %346 {approx = true} : vector<24x1xf32> -> vector<24x1xf32>
    %348 = vector.shape_cast %347 : vector<24x1xf32> to vector<24x1xf32>
    %349 = vector.broadcast %348 : vector<24x1xf32> to vector<24x24xf32>
    %350 = vector.extract_strided_slice %331 {offsets = [0, 72], sizes = [24, 24], strides = [1, 1]} : vector<24x96xf32> to vector<24x24xf32>
    %cst_72 = arith.constant dense<0.000000e+00> : vector<24xf32>
    %351 = vector.multi_reduction <add>, %350, %cst_72 [1] : vector<24x24xf32> to vector<24xf32>
    %352 = vector.shape_cast %351 : vector<24xf32> to vector<24x1xf32>
    %353 = tpu.reciprocal %352 {approx = true} : vector<24x1xf32> -> vector<24x1xf32>
    %354 = vector.shape_cast %353 : vector<24x1xf32> to vector<24x1xf32>
    %355 = vector.broadcast %354 : vector<24x1xf32> to vector<24x24xf32>
    %356 = tpu.concatenate %337, %343, %349, %355 in 1 : vector<24x24xf32>, vector<24x24xf32>, vector<24x24xf32>, vector<24x24xf32> -> vector<24x96xf32>
    %357 = arith.mulf %331, %356 : vector<24x96xf32>
    %358 = arith.truncf %357 : vector<24x96xf32> to vector<24x96xbf16>
    %cst_73 = arith.constant dense<0.000000e+00> : vector<24x32xf32>
    %359 = tpu.matmul %358, %325, %cst_73 {dimension_numbers = #tpu.dot_dimension_numbers<[1], [0], [0], [1], [0, 0, 1, 1], [], []>} : vector<24x96xbf16>, vector<96x32xbf16>, vector<24x32xf32> -> vector<24x32xf32>
    %360 = tpu.concatenate %314, %359 in 0 : vector<24x32xf32>, vector<24x32xf32> -> vector<48x32xf32>
    %361 = vector.extract_strided_slice %230 {offsets = [0, 96], sizes = [32, 32], strides = [1, 1]} : vector<32x256xbf16> to vector<32x32xbf16>
    %362 = arith.truncf %360 : vector<48x32xf32> to vector<48x32xbf16>
    %cst_74 = arith.constant dense<0.000000e+00> : vector<48x32xf32>
    %363 = tpu.matmul %362, %361, %cst_74 {dimension_numbers = #tpu.dot_dimension_numbers<[1], [0], [0], [1], [0, 0, 1, 1], [], []>} : vector<48x32xbf16>, vector<32x32xbf16>, vector<48x32xf32> -> vector<48x32xf32>
    %364 = arith.addf %228, %363 : vector<48x32xf32>
    %365 = vector.extract_strided_slice %232 {offsets = [96], sizes = [32], strides = [1]} : vector<288xf32> to vector<32xf32>
    %366 = vector.shape_cast %365 : vector<32xf32> to vector<1x32xf32>
    %367 = vector.broadcast %366 : vector<1x32xf32> to vector<48x32xf32>
    %368 = arith.addf %364, %367 : vector<48x32xf32>
    %369 = vector.extract_strided_slice %234 {offsets = [2, 0], sizes = [1, 32], strides = [1, 1]} : vector<4x32xf32> to vector<1x32xf32>
    %370 = vector.shape_cast %369 : vector<1x32xf32> to vector<32xf32>
    %371 = vector.extract_strided_slice %234 {offsets = [3, 0], sizes = [1, 32], strides = [1, 1]} : vector<4x32xf32> to vector<1x32xf32>
    %372 = vector.shape_cast %371 : vector<1x32xf32> to vector<32xf32>
    %cst_75 = arith.constant dense<0.000000e+00> : vector<48xf32>
    %373 = vector.multi_reduction <add>, %368, %cst_75 [1] : vector<48x32xf32> to vector<48xf32>
    %374 = vector.shape_cast %373 : vector<48xf32> to vector<48x1xf32>
    %cst_76 = arith.constant 3.200000e+01 : f32
    %375 = vector.broadcast %cst_76 : f32 to vector<48x1xf32>
    %376 = arith.divf %374, %375 : vector<48x1xf32>
    %377 = arith.mulf %368, %368 : vector<48x32xf32>
    %cst_77 = arith.constant dense<0.000000e+00> : vector<48xf32>
    %378 = vector.multi_reduction <add>, %377, %cst_77 [1] : vector<48x32xf32> to vector<48xf32>
    %379 = vector.shape_cast %378 : vector<48xf32> to vector<48x1xf32>
    %cst_78 = arith.constant 3.200000e+01 : f32
    %380 = vector.broadcast %cst_78 : f32 to vector<48x1xf32>
    %381 = arith.divf %379, %380 : vector<48x1xf32>
    %382 = arith.mulf %376, %376 : vector<48x1xf32>
    %383 = arith.subf %381, %382 : vector<48x1xf32>
    %384 = vector.broadcast %376 : vector<48x1xf32> to vector<48x32xf32>
    %385 = arith.subf %368, %384 : vector<48x32xf32>
    %cst_79 = arith.constant 9.99999974E-6 : f32
    %386 = vector.broadcast %cst_79 : f32 to vector<48x1xf32>
    %387 = arith.addf %383, %386 : vector<48x1xf32>
    %388 = math.rsqrt %387 : vector<48x1xf32>
    %389 = vector.broadcast %388 : vector<48x1xf32> to vector<48x32xf32>
    %390 = arith.mulf %385, %389 : vector<48x32xf32>
    %391 = vector.shape_cast %370 : vector<32xf32> to vector<1x32xf32>
    %392 = vector.broadcast %391 : vector<1x32xf32> to vector<48x32xf32>
    %393 = arith.mulf %390, %392 : vector<48x32xf32>
    %394 = vector.shape_cast %372 : vector<32xf32> to vector<1x32xf32>
    %395 = vector.broadcast %394 : vector<1x32xf32> to vector<48x32xf32>
    %396 = arith.addf %393, %395 : vector<48x32xf32>
    %397 = vector.extract_strided_slice %230 {offsets = [0, 128], sizes = [32, 128], strides = [1, 1]} : vector<32x256xbf16> to vector<32x128xbf16>
    %398 = arith.truncf %396 : vector<48x32xf32> to vector<48x32xbf16>
    %cst_80 = arith.constant dense<0.000000e+00> : vector<48x128xf32>
    %399 = tpu.matmul %398, %397, %cst_80 {dimension_numbers = #tpu.dot_dimension_numbers<[1], [0], [0], [1], [0, 0, 1, 1], [], []>} : vector<48x32xbf16>, vector<32x128xbf16>, vector<48x128xf32> -> vector<48x128xf32>
    %400 = vector.extract_strided_slice %232 {offsets = [128], sizes = [128], strides = [1]} : vector<288xf32> to vector<128xf32>
    %401 = vector.shape_cast %400 : vector<128xf32> to vector<1x128xf32>
    %402 = vector.broadcast %401 : vector<1x128xf32> to vector<48x128xf32>
    %403 = arith.addf %399, %402 : vector<48x128xf32>
    %404 = arith.mulf %403, %403 : vector<48x128xf32>
    %405 = arith.mulf %403, %404 : vector<48x128xf32>
    %cst_81 = arith.constant 4.471500e-02 : f32
    %406 = vector.broadcast %cst_81 : f32 to vector<48x128xf32>
    %407 = arith.mulf %406, %405 : vector<48x128xf32>
    %408 = arith.addf %403, %407 : vector<48x128xf32>
    %cst_82 = arith.constant 0.797884583 : f32
    %409 = vector.broadcast %cst_82 : f32 to vector<48x128xf32>
    %410 = arith.mulf %409, %408 : vector<48x128xf32>
    %411 = math.tanh %410 : vector<48x128xf32>
    %cst_83 = arith.constant 1.000000e+00 : f32
    %412 = vector.broadcast %cst_83 : f32 to vector<48x128xf32>
    %413 = arith.addf %412, %411 : vector<48x128xf32>
    %cst_84 = arith.constant 5.000000e-01 : f32
    %414 = vector.broadcast %cst_84 : f32 to vector<48x128xf32>
    %415 = arith.mulf %414, %413 : vector<48x128xf32>
    %416 = arith.mulf %403, %415 : vector<48x128xf32>
    %c1_85 = arith.constant 1 : index
    %c0_86 = arith.constant 0 : index
    %c0_87 = arith.constant 0 : index
    %417 = vector.load %arg3[%c1_85, %c0_86, %c0_87] : memref<3x128x32xbf16, #tpu.memory_space<vmem>>, vector<1x128x32xbf16>
    %418 = vector.shape_cast %417 : vector<1x128x32xbf16> to vector<128x32xbf16>
    %419 = arith.truncf %416 : vector<48x128xf32> to vector<48x128xbf16>
    %cst_88 = arith.constant dense<0.000000e+00> : vector<48x32xf32>
    %420 = tpu.matmul %419, %418, %cst_88 {dimension_numbers = #tpu.dot_dimension_numbers<[1], [0], [0], [1], [0, 0, 1, 1], [], []>} : vector<48x128xbf16>, vector<128x32xbf16>, vector<48x32xf32> -> vector<48x32xf32>
    %421 = arith.addf %368, %420 : vector<48x32xf32>
    %422 = vector.extract_strided_slice %232 {offsets = [256], sizes = [32], strides = [1]} : vector<288xf32> to vector<32xf32>
    %423 = vector.shape_cast %422 : vector<32xf32> to vector<1x32xf32>
    %424 = vector.broadcast %423 : vector<1x32xf32> to vector<48x32xf32>
    %425 = arith.addf %421, %424 : vector<48x32xf32>
    %c2 = arith.constant 2 : index
    %c0_89 = arith.constant 0 : index
    %c0_90 = arith.constant 0 : index
    %426 = vector.load %arg2[%c2, %c0_89, %c0_90] : memref<3x32x256xbf16, #tpu.memory_space<vmem>>, vector<1x32x256xbf16>
    %427 = vector.shape_cast %426 : vector<1x32x256xbf16> to vector<32x256xbf16>
    %c2_91 = arith.constant 2 : index
    %c0_92 = arith.constant 0 : index
    %428 = vector.load %arg4[%c2_91, %c0_92] : memref<3x288xf32, #tpu.memory_space<vmem>>, vector<1x288xf32>
    %429 = vector.shape_cast %428 : vector<1x288xf32> to vector<288xf32>
    %c2_93 = arith.constant 2 : index
    %c0_94 = arith.constant 0 : index
    %c0_95 = arith.constant 0 : index
    %430 = vector.load %arg5[%c2_93, %c0_94, %c0_95] : memref<3x4x32xf32, #tpu.memory_space<vmem>>, vector<1x4x32xf32>
    %431 = vector.shape_cast %430 : vector<1x4x32xf32> to vector<4x32xf32>
    %432 = vector.extract_strided_slice %431 {offsets = [0, 0], sizes = [1, 32], strides = [1, 1]} : vector<4x32xf32> to vector<1x32xf32>
    %433 = vector.shape_cast %432 : vector<1x32xf32> to vector<32xf32>
    %434 = vector.extract_strided_slice %431 {offsets = [1, 0], sizes = [1, 32], strides = [1, 1]} : vector<4x32xf32> to vector<1x32xf32>
    %435 = vector.shape_cast %434 : vector<1x32xf32> to vector<32xf32>
    %cst_96 = arith.constant dense<0.000000e+00> : vector<48xf32>
    %436 = vector.multi_reduction <add>, %425, %cst_96 [1] : vector<48x32xf32> to vector<48xf32>
    %437 = vector.shape_cast %436 : vector<48xf32> to vector<48x1xf32>
    %cst_97 = arith.constant 3.200000e+01 : f32
    %438 = vector.broadcast %cst_97 : f32 to vector<48x1xf32>
    %439 = arith.divf %437, %438 : vector<48x1xf32>
    %440 = arith.mulf %425, %425 : vector<48x32xf32>
    %cst_98 = arith.constant dense<0.000000e+00> : vector<48xf32>
    %441 = vector.multi_reduction <add>, %440, %cst_98 [1] : vector<48x32xf32> to vector<48xf32>
    %442 = vector.shape_cast %441 : vector<48xf32> to vector<48x1xf32>
    %cst_99 = arith.constant 3.200000e+01 : f32
    %443 = vector.broadcast %cst_99 : f32 to vector<48x1xf32>
    %444 = arith.divf %442, %443 : vector<48x1xf32>
    %445 = arith.mulf %439, %439 : vector<48x1xf32>
    %446 = arith.subf %444, %445 : vector<48x1xf32>
    %447 = vector.broadcast %439 : vector<48x1xf32> to vector<48x32xf32>
    %448 = arith.subf %425, %447 : vector<48x32xf32>
    %cst_100 = arith.constant 9.99999974E-6 : f32
    %449 = vector.broadcast %cst_100 : f32 to vector<48x1xf32>
    %450 = arith.addf %446, %449 : vector<48x1xf32>
    %451 = math.rsqrt %450 : vector<48x1xf32>
    %452 = vector.broadcast %451 : vector<48x1xf32> to vector<48x32xf32>
    %453 = arith.mulf %448, %452 : vector<48x32xf32>
    %454 = vector.shape_cast %433 : vector<32xf32> to vector<1x32xf32>
    %455 = vector.broadcast %454 : vector<1x32xf32> to vector<48x32xf32>
    %456 = arith.mulf %453, %455 : vector<48x32xf32>
    %457 = vector.shape_cast %435 : vector<32xf32> to vector<1x32xf32>
    %458 = vector.broadcast %457 : vector<1x32xf32> to vector<48x32xf32>
    %459 = arith.addf %456, %458 : vector<48x32xf32>
    %460 = vector.extract_strided_slice %427 {offsets = [0, 0], sizes = [32, 96], strides = [1, 1]} : vector<32x256xbf16> to vector<32x96xbf16>
    %461 = arith.truncf %459 : vector<48x32xf32> to vector<48x32xbf16>
    %cst_101 = arith.constant dense<0.000000e+00> : vector<48x96xf32>
    %462 = tpu.matmul %461, %460, %cst_101 {dimension_numbers = #tpu.dot_dimension_numbers<[1], [0], [0], [1], [0, 0, 1, 1], [], []>} : vector<48x32xbf16>, vector<32x96xbf16>, vector<48x96xf32> -> vector<48x96xf32>
    %463 = vector.extract_strided_slice %429 {offsets = [0], sizes = [96], strides = [1]} : vector<288xf32> to vector<96xf32>
    %464 = vector.shape_cast %463 : vector<96xf32> to vector<1x96xf32>
    %465 = vector.broadcast %464 : vector<1x96xf32> to vector<48x96xf32>
    %466 = arith.addf %462, %465 : vector<48x96xf32>
    %467 = vector.extract_strided_slice %466 {offsets = [0, 0], sizes = [24, 96], strides = [1, 1]} : vector<48x96xf32> to vector<24x96xf32>
    %468 = vector.extract_strided_slice %467 {offsets = [0, 0], sizes = [24, 32], strides = [1, 1]} : vector<24x96xf32> to vector<24x32xf32>
    %469 = arith.truncf %468 : vector<24x32xf32> to vector<24x32xbf16>
    %470 = vector.extract_strided_slice %467 {offsets = [0, 32], sizes = [24, 32], strides = [1, 1]} : vector<24x96xf32> to vector<24x32xf32>
    %471 = tpu.concatenate %470, %470, %470, %470 in 0 : vector<24x32xf32>, vector<24x32xf32>, vector<24x32xf32>, vector<24x32xf32> -> vector<96x32xf32>
    %472 = arith.mulf %471, %29 : vector<96x32xf32>
    %473 = arith.truncf %472 : vector<96x32xf32> to vector<96x32xbf16>
    %474 = vector.extract_strided_slice %467 {offsets = [0, 64], sizes = [24, 32], strides = [1, 1]} : vector<24x96xf32> to vector<24x32xf32>
    %475 = tpu.concatenate %474, %474, %474, %474 in 0 : vector<24x32xf32>, vector<24x32xf32>, vector<24x32xf32>, vector<24x32xf32> -> vector<96x32xf32>
    %476 = arith.mulf %475, %29 : vector<96x32xf32>
    %477 = arith.truncf %476 : vector<96x32xf32> to vector<96x32xbf16>
    %cst_102 = arith.constant dense<0.000000e+00> : vector<24x96xf32>
    %478 = tpu.matmul %469, %473, %cst_102 {dimension_numbers = #tpu.dot_dimension_numbers<[1], [1], [0], [0], [0, 0, 1, 0], [], []>} : vector<24x32xbf16>, vector<96x32xbf16>, vector<24x96xf32> -> vector<24x96xf32>
    %cst_103 = arith.constant dense<0xFF800000> : vector<24xf32>
    %479 = vector.multi_reduction <maximumf>, %478, %cst_103 [1] : vector<24x96xf32> to vector<24xf32>
    %480 = vector.shape_cast %479 : vector<24xf32> to vector<24x1xf32>
    %481 = vector.broadcast %480 : vector<24x1xf32> to vector<24x96xf32>
    %482 = arith.subf %478, %481 : vector<24x96xf32>
    %483 = math.exp %482 : vector<24x96xf32>
    %484 = vector.extract_strided_slice %483 {offsets = [0, 0], sizes = [24, 24], strides = [1, 1]} : vector<24x96xf32> to vector<24x24xf32>
    %cst_104 = arith.constant dense<0.000000e+00> : vector<24xf32>
    %485 = vector.multi_reduction <add>, %484, %cst_104 [1] : vector<24x24xf32> to vector<24xf32>
    %486 = vector.shape_cast %485 : vector<24xf32> to vector<24x1xf32>
    %487 = tpu.reciprocal %486 {approx = true} : vector<24x1xf32> -> vector<24x1xf32>
    %488 = vector.shape_cast %487 : vector<24x1xf32> to vector<24x1xf32>
    %489 = vector.broadcast %488 : vector<24x1xf32> to vector<24x24xf32>
    %490 = vector.extract_strided_slice %483 {offsets = [0, 24], sizes = [24, 24], strides = [1, 1]} : vector<24x96xf32> to vector<24x24xf32>
    %cst_105 = arith.constant dense<0.000000e+00> : vector<24xf32>
    %491 = vector.multi_reduction <add>, %490, %cst_105 [1] : vector<24x24xf32> to vector<24xf32>
    %492 = vector.shape_cast %491 : vector<24xf32> to vector<24x1xf32>
    %493 = tpu.reciprocal %492 {approx = true} : vector<24x1xf32> -> vector<24x1xf32>
    %494 = vector.shape_cast %493 : vector<24x1xf32> to vector<24x1xf32>
    %495 = vector.broadcast %494 : vector<24x1xf32> to vector<24x24xf32>
    %496 = vector.extract_strided_slice %483 {offsets = [0, 48], sizes = [24, 24], strides = [1, 1]} : vector<24x96xf32> to vector<24x24xf32>
    %cst_106 = arith.constant dense<0.000000e+00> : vector<24xf32>
    %497 = vector.multi_reduction <add>, %496, %cst_106 [1] : vector<24x24xf32> to vector<24xf32>
    %498 = vector.shape_cast %497 : vector<24xf32> to vector<24x1xf32>
    %499 = tpu.reciprocal %498 {approx = true} : vector<24x1xf32> -> vector<24x1xf32>
    %500 = vector.shape_cast %499 : vector<24x1xf32> to vector<24x1xf32>
    %501 = vector.broadcast %500 : vector<24x1xf32> to vector<24x24xf32>
    %502 = vector.extract_strided_slice %483 {offsets = [0, 72], sizes = [24, 24], strides = [1, 1]} : vector<24x96xf32> to vector<24x24xf32>
    %cst_107 = arith.constant dense<0.000000e+00> : vector<24xf32>
    %503 = vector.multi_reduction <add>, %502, %cst_107 [1] : vector<24x24xf32> to vector<24xf32>
    %504 = vector.shape_cast %503 : vector<24xf32> to vector<24x1xf32>
    %505 = tpu.reciprocal %504 {approx = true} : vector<24x1xf32> -> vector<24x1xf32>
    %506 = vector.shape_cast %505 : vector<24x1xf32> to vector<24x1xf32>
    %507 = vector.broadcast %506 : vector<24x1xf32> to vector<24x24xf32>
    %508 = tpu.concatenate %489, %495, %501, %507 in 1 : vector<24x24xf32>, vector<24x24xf32>, vector<24x24xf32>, vector<24x24xf32> -> vector<24x96xf32>
    %509 = arith.mulf %483, %508 : vector<24x96xf32>
    %510 = arith.truncf %509 : vector<24x96xf32> to vector<24x96xbf16>
    %cst_108 = arith.constant dense<0.000000e+00> : vector<24x32xf32>
    %511 = tpu.matmul %510, %477, %cst_108 {dimension_numbers = #tpu.dot_dimension_numbers<[1], [0], [0], [1], [0, 0, 1, 1], [], []>} : vector<24x96xbf16>, vector<96x32xbf16>, vector<24x32xf32> -> vector<24x32xf32>
    %512 = vector.extract_strided_slice %466 {offsets = [24, 0], sizes = [24, 96], strides = [1, 1]} : vector<48x96xf32> to vector<24x96xf32>
    %513 = vector.extract_strided_slice %512 {offsets = [0, 0], sizes = [24, 32], strides = [1, 1]} : vector<24x96xf32> to vector<24x32xf32>
    %514 = arith.truncf %513 : vector<24x32xf32> to vector<24x32xbf16>
    %515 = vector.extract_strided_slice %512 {offsets = [0, 32], sizes = [24, 32], strides = [1, 1]} : vector<24x96xf32> to vector<24x32xf32>
    %516 = tpu.concatenate %515, %515, %515, %515 in 0 : vector<24x32xf32>, vector<24x32xf32>, vector<24x32xf32>, vector<24x32xf32> -> vector<96x32xf32>
    %517 = arith.mulf %516, %29 : vector<96x32xf32>
    %518 = arith.truncf %517 : vector<96x32xf32> to vector<96x32xbf16>
    %519 = vector.extract_strided_slice %512 {offsets = [0, 64], sizes = [24, 32], strides = [1, 1]} : vector<24x96xf32> to vector<24x32xf32>
    %520 = tpu.concatenate %519, %519, %519, %519 in 0 : vector<24x32xf32>, vector<24x32xf32>, vector<24x32xf32>, vector<24x32xf32> -> vector<96x32xf32>
    %521 = arith.mulf %520, %29 : vector<96x32xf32>
    %522 = arith.truncf %521 : vector<96x32xf32> to vector<96x32xbf16>
    %cst_109 = arith.constant dense<0.000000e+00> : vector<24x96xf32>
    %523 = tpu.matmul %514, %518, %cst_109 {dimension_numbers = #tpu.dot_dimension_numbers<[1], [1], [0], [0], [0, 0, 1, 0], [], []>} : vector<24x32xbf16>, vector<96x32xbf16>, vector<24x96xf32> -> vector<24x96xf32>
    %cst_110 = arith.constant dense<0xFF800000> : vector<24xf32>
    %524 = vector.multi_reduction <maximumf>, %523, %cst_110 [1] : vector<24x96xf32> to vector<24xf32>
    %525 = vector.shape_cast %524 : vector<24xf32> to vector<24x1xf32>
    %526 = vector.broadcast %525 : vector<24x1xf32> to vector<24x96xf32>
    %527 = arith.subf %523, %526 : vector<24x96xf32>
    %528 = math.exp %527 : vector<24x96xf32>
    %529 = vector.extract_strided_slice %528 {offsets = [0, 0], sizes = [24, 24], strides = [1, 1]} : vector<24x96xf32> to vector<24x24xf32>
    %cst_111 = arith.constant dense<0.000000e+00> : vector<24xf32>
    %530 = vector.multi_reduction <add>, %529, %cst_111 [1] : vector<24x24xf32> to vector<24xf32>
    %531 = vector.shape_cast %530 : vector<24xf32> to vector<24x1xf32>
    %532 = tpu.reciprocal %531 {approx = true} : vector<24x1xf32> -> vector<24x1xf32>
    %533 = vector.shape_cast %532 : vector<24x1xf32> to vector<24x1xf32>
    %534 = vector.broadcast %533 : vector<24x1xf32> to vector<24x24xf32>
    %535 = vector.extract_strided_slice %528 {offsets = [0, 24], sizes = [24, 24], strides = [1, 1]} : vector<24x96xf32> to vector<24x24xf32>
    %cst_112 = arith.constant dense<0.000000e+00> : vector<24xf32>
    %536 = vector.multi_reduction <add>, %535, %cst_112 [1] : vector<24x24xf32> to vector<24xf32>
    %537 = vector.shape_cast %536 : vector<24xf32> to vector<24x1xf32>
    %538 = tpu.reciprocal %537 {approx = true} : vector<24x1xf32> -> vector<24x1xf32>
    %539 = vector.shape_cast %538 : vector<24x1xf32> to vector<24x1xf32>
    %540 = vector.broadcast %539 : vector<24x1xf32> to vector<24x24xf32>
    %541 = vector.extract_strided_slice %528 {offsets = [0, 48], sizes = [24, 24], strides = [1, 1]} : vector<24x96xf32> to vector<24x24xf32>
    %cst_113 = arith.constant dense<0.000000e+00> : vector<24xf32>
    %542 = vector.multi_reduction <add>, %541, %cst_113 [1] : vector<24x24xf32> to vector<24xf32>
    %543 = vector.shape_cast %542 : vector<24xf32> to vector<24x1xf32>
    %544 = tpu.reciprocal %543 {approx = true} : vector<24x1xf32> -> vector<24x1xf32>
    %545 = vector.shape_cast %544 : vector<24x1xf32> to vector<24x1xf32>
    %546 = vector.broadcast %545 : vector<24x1xf32> to vector<24x24xf32>
    %547 = vector.extract_strided_slice %528 {offsets = [0, 72], sizes = [24, 24], strides = [1, 1]} : vector<24x96xf32> to vector<24x24xf32>
    %cst_114 = arith.constant dense<0.000000e+00> : vector<24xf32>
    %548 = vector.multi_reduction <add>, %547, %cst_114 [1] : vector<24x24xf32> to vector<24xf32>
    %549 = vector.shape_cast %548 : vector<24xf32> to vector<24x1xf32>
    %550 = tpu.reciprocal %549 {approx = true} : vector<24x1xf32> -> vector<24x1xf32>
    %551 = vector.shape_cast %550 : vector<24x1xf32> to vector<24x1xf32>
    %552 = vector.broadcast %551 : vector<24x1xf32> to vector<24x24xf32>
    %553 = tpu.concatenate %534, %540, %546, %552 in 1 : vector<24x24xf32>, vector<24x24xf32>, vector<24x24xf32>, vector<24x24xf32> -> vector<24x96xf32>
    %554 = arith.mulf %528, %553 : vector<24x96xf32>
    %555 = arith.truncf %554 : vector<24x96xf32> to vector<24x96xbf16>
    %cst_115 = arith.constant dense<0.000000e+00> : vector<24x32xf32>
    %556 = tpu.matmul %555, %522, %cst_115 {dimension_numbers = #tpu.dot_dimension_numbers<[1], [0], [0], [1], [0, 0, 1, 1], [], []>} : vector<24x96xbf16>, vector<96x32xbf16>, vector<24x32xf32> -> vector<24x32xf32>
    %557 = tpu.concatenate %511, %556 in 0 : vector<24x32xf32>, vector<24x32xf32> -> vector<48x32xf32>
    %558 = vector.extract_strided_slice %427 {offsets = [0, 96], sizes = [32, 32], strides = [1, 1]} : vector<32x256xbf16> to vector<32x32xbf16>
    %559 = arith.truncf %557 : vector<48x32xf32> to vector<48x32xbf16>
    %cst_116 = arith.constant dense<0.000000e+00> : vector<48x32xf32>
    %560 = tpu.matmul %559, %558, %cst_116 {dimension_numbers = #tpu.dot_dimension_numbers<[1], [0], [0], [1], [0, 0, 1, 1], [], []>} : vector<48x32xbf16>, vector<32x32xbf16>, vector<48x32xf32> -> vector<48x32xf32>
    %561 = arith.addf %425, %560 : vector<48x32xf32>
    %562 = vector.extract_strided_slice %429 {offsets = [96], sizes = [32], strides = [1]} : vector<288xf32> to vector<32xf32>
    %563 = vector.shape_cast %562 : vector<32xf32> to vector<1x32xf32>
    %564 = vector.broadcast %563 : vector<1x32xf32> to vector<48x32xf32>
    %565 = arith.addf %561, %564 : vector<48x32xf32>
    %566 = vector.extract_strided_slice %431 {offsets = [2, 0], sizes = [1, 32], strides = [1, 1]} : vector<4x32xf32> to vector<1x32xf32>
    %567 = vector.shape_cast %566 : vector<1x32xf32> to vector<32xf32>
    %568 = vector.extract_strided_slice %431 {offsets = [3, 0], sizes = [1, 32], strides = [1, 1]} : vector<4x32xf32> to vector<1x32xf32>
    %569 = vector.shape_cast %568 : vector<1x32xf32> to vector<32xf32>
    %cst_117 = arith.constant dense<0.000000e+00> : vector<48xf32>
    %570 = vector.multi_reduction <add>, %565, %cst_117 [1] : vector<48x32xf32> to vector<48xf32>
    %571 = vector.shape_cast %570 : vector<48xf32> to vector<48x1xf32>
    %cst_118 = arith.constant 3.200000e+01 : f32
    %572 = vector.broadcast %cst_118 : f32 to vector<48x1xf32>
    %573 = arith.divf %571, %572 : vector<48x1xf32>
    %574 = arith.mulf %565, %565 : vector<48x32xf32>
    %cst_119 = arith.constant dense<0.000000e+00> : vector<48xf32>
    %575 = vector.multi_reduction <add>, %574, %cst_119 [1] : vector<48x32xf32> to vector<48xf32>
    %576 = vector.shape_cast %575 : vector<48xf32> to vector<48x1xf32>
    %cst_120 = arith.constant 3.200000e+01 : f32
    %577 = vector.broadcast %cst_120 : f32 to vector<48x1xf32>
    %578 = arith.divf %576, %577 : vector<48x1xf32>
    %579 = arith.mulf %573, %573 : vector<48x1xf32>
    %580 = arith.subf %578, %579 : vector<48x1xf32>
    %581 = vector.broadcast %573 : vector<48x1xf32> to vector<48x32xf32>
    %582 = arith.subf %565, %581 : vector<48x32xf32>
    %cst_121 = arith.constant 9.99999974E-6 : f32
    %583 = vector.broadcast %cst_121 : f32 to vector<48x1xf32>
    %584 = arith.addf %580, %583 : vector<48x1xf32>
    %585 = math.rsqrt %584 : vector<48x1xf32>
    %586 = vector.broadcast %585 : vector<48x1xf32> to vector<48x32xf32>
    %587 = arith.mulf %582, %586 : vector<48x32xf32>
    %588 = vector.shape_cast %567 : vector<32xf32> to vector<1x32xf32>
    %589 = vector.broadcast %588 : vector<1x32xf32> to vector<48x32xf32>
    %590 = arith.mulf %587, %589 : vector<48x32xf32>
    %591 = vector.shape_cast %569 : vector<32xf32> to vector<1x32xf32>
    %592 = vector.broadcast %591 : vector<1x32xf32> to vector<48x32xf32>
    %593 = arith.addf %590, %592 : vector<48x32xf32>
    %594 = vector.extract_strided_slice %427 {offsets = [0, 128], sizes = [32, 128], strides = [1, 1]} : vector<32x256xbf16> to vector<32x128xbf16>
    %595 = arith.truncf %593 : vector<48x32xf32> to vector<48x32xbf16>
    %cst_122 = arith.constant dense<0.000000e+00> : vector<48x128xf32>
    %596 = tpu.matmul %595, %594, %cst_122 {dimension_numbers = #tpu.dot_dimension_numbers<[1], [0], [0], [1], [0, 0, 1, 1], [], []>} : vector<48x32xbf16>, vector<32x128xbf16>, vector<48x128xf32> -> vector<48x128xf32>
    %597 = vector.extract_strided_slice %429 {offsets = [128], sizes = [128], strides = [1]} : vector<288xf32> to vector<128xf32>
    %598 = vector.shape_cast %597 : vector<128xf32> to vector<1x128xf32>
    %599 = vector.broadcast %598 : vector<1x128xf32> to vector<48x128xf32>
    %600 = arith.addf %596, %599 : vector<48x128xf32>
    %601 = arith.mulf %600, %600 : vector<48x128xf32>
    %602 = arith.mulf %600, %601 : vector<48x128xf32>
    %cst_123 = arith.constant 4.471500e-02 : f32
    %603 = vector.broadcast %cst_123 : f32 to vector<48x128xf32>
    %604 = arith.mulf %603, %602 : vector<48x128xf32>
    %605 = arith.addf %600, %604 : vector<48x128xf32>
    %cst_124 = arith.constant 0.797884583 : f32
    %606 = vector.broadcast %cst_124 : f32 to vector<48x128xf32>
    %607 = arith.mulf %606, %605 : vector<48x128xf32>
    %608 = math.tanh %607 : vector<48x128xf32>
    %cst_125 = arith.constant 1.000000e+00 : f32
    %609 = vector.broadcast %cst_125 : f32 to vector<48x128xf32>
    %610 = arith.addf %609, %608 : vector<48x128xf32>
    %cst_126 = arith.constant 5.000000e-01 : f32
    %611 = vector.broadcast %cst_126 : f32 to vector<48x128xf32>
    %612 = arith.mulf %611, %610 : vector<48x128xf32>
    %613 = arith.mulf %600, %612 : vector<48x128xf32>
    %c2_127 = arith.constant 2 : index
    %c0_128 = arith.constant 0 : index
    %c0_129 = arith.constant 0 : index
    %614 = vector.load %arg3[%c2_127, %c0_128, %c0_129] : memref<3x128x32xbf16, #tpu.memory_space<vmem>>, vector<1x128x32xbf16>
    %615 = vector.shape_cast %614 : vector<1x128x32xbf16> to vector<128x32xbf16>
    %616 = arith.truncf %613 : vector<48x128xf32> to vector<48x128xbf16>
    %cst_130 = arith.constant dense<0.000000e+00> : vector<48x32xf32>
    %617 = tpu.matmul %616, %615, %cst_130 {dimension_numbers = #tpu.dot_dimension_numbers<[1], [0], [0], [1], [0, 0, 1, 1], [], []>} : vector<48x128xbf16>, vector<128x32xbf16>, vector<48x32xf32> -> vector<48x32xf32>
    %618 = arith.addf %565, %617 : vector<48x32xf32>
    %619 = vector.extract_strided_slice %429 {offsets = [256], sizes = [32], strides = [1]} : vector<288xf32> to vector<32xf32>
    %620 = vector.shape_cast %619 : vector<32xf32> to vector<1x32xf32>
    %621 = vector.broadcast %620 : vector<1x32xf32> to vector<48x32xf32>
    %622 = arith.addf %618, %621 : vector<48x32xf32>
    %c0_131 = arith.constant 0 : index
    %c0_132 = arith.constant 0 : index
    %623 = vector.load %arg6[%c0_131, %c0_132] : memref<2x32xf32, #tpu.memory_space<vmem>>, vector<1x32xf32>
    %624 = vector.shape_cast %623 : vector<1x32xf32> to vector<32xf32>
    %c1_133 = arith.constant 1 : index
    %c0_134 = arith.constant 0 : index
    %625 = vector.load %arg6[%c1_133, %c0_134] : memref<2x32xf32, #tpu.memory_space<vmem>>, vector<1x32xf32>
    %626 = vector.shape_cast %625 : vector<1x32xf32> to vector<32xf32>
    %cst_135 = arith.constant dense<0.000000e+00> : vector<48xf32>
    %627 = vector.multi_reduction <add>, %622, %cst_135 [1] : vector<48x32xf32> to vector<48xf32>
    %628 = vector.shape_cast %627 : vector<48xf32> to vector<48x1xf32>
    %cst_136 = arith.constant 3.200000e+01 : f32
    %629 = vector.broadcast %cst_136 : f32 to vector<48x1xf32>
    %630 = arith.divf %628, %629 : vector<48x1xf32>
    %631 = arith.mulf %622, %622 : vector<48x32xf32>
    %cst_137 = arith.constant dense<0.000000e+00> : vector<48xf32>
    %632 = vector.multi_reduction <add>, %631, %cst_137 [1] : vector<48x32xf32> to vector<48xf32>
    %633 = vector.shape_cast %632 : vector<48xf32> to vector<48x1xf32>
    %cst_138 = arith.constant 3.200000e+01 : f32
    %634 = vector.broadcast %cst_138 : f32 to vector<48x1xf32>
    %635 = arith.divf %633, %634 : vector<48x1xf32>
    %636 = arith.mulf %630, %630 : vector<48x1xf32>
    %637 = arith.subf %635, %636 : vector<48x1xf32>
    %638 = vector.broadcast %630 : vector<48x1xf32> to vector<48x32xf32>
    %639 = arith.subf %622, %638 : vector<48x32xf32>
    %cst_139 = arith.constant 9.99999974E-6 : f32
    %640 = vector.broadcast %cst_139 : f32 to vector<48x1xf32>
    %641 = arith.addf %637, %640 : vector<48x1xf32>
    %642 = math.rsqrt %641 : vector<48x1xf32>
    %643 = vector.broadcast %642 : vector<48x1xf32> to vector<48x32xf32>
    %644 = arith.mulf %639, %643 : vector<48x32xf32>
    %645 = vector.shape_cast %624 : vector<32xf32> to vector<1x32xf32>
    %646 = vector.broadcast %645 : vector<1x32xf32> to vector<48x32xf32>
    %647 = arith.mulf %644, %646 : vector<48x32xf32>
    %648 = vector.shape_cast %626 : vector<32xf32> to vector<1x32xf32>
    %649 = vector.broadcast %648 : vector<1x32xf32> to vector<48x32xf32>
    %650 = arith.addf %647, %649 : vector<48x32xf32>
    %c0_140 = arith.constant 0 : index
    %c0_141 = arith.constant 0 : index
    %c0_142 = arith.constant 0 : index
    %651 = vector.load %arg7[%c0_140, %c0_141, %c0_142] : memref<1x48x32xf32, #tpu.memory_space<vmem>>, vector<1x48x32xf32>
    %652 = vector.shape_cast %651 : vector<1x48x32xf32> to vector<48x32xf32>
    %653 = vector.shape_cast %650 : vector<48x32xf32> to vector<1x48x32xf32>
    tpu.vector_store %arg7[%c0_140, %c0_141, %c0_142], %653 {strides = array<i32>} : memref<1x48x32xf32, #tpu.memory_space<vmem>>, vector<1x48x32xf32>,
    return
  }
  func.func @transform_0(%arg0: i32) -> (i32, i32, i32) {
    %c0_i32 = arith.constant 0 : i32
    %c0_i32_0 = arith.constant 0 : i32
    %c0_i32_1 = arith.constant 0 : i32
    return %arg0, %c0_i32, %c0_i32_0 : i32, i32, i32
  }
  func.func @transform_1(%arg0: i32) -> (i32, i32, i32) {
    %c0_i32 = arith.constant 0 : i32
    %c0_i32_0 = arith.constant 0 : i32
    %c0_i32_1 = arith.constant 0 : i32
    %c0_i32_2 = arith.constant 0 : i32
    return %c0_i32, %c0_i32_0, %c0_i32_1 : i32, i32, i32
  }
  func.func @transform_2(%arg0: i32) -> (i32, i32, i32) {
    %c0_i32 = arith.constant 0 : i32
    %c0_i32_0 = arith.constant 0 : i32
    %c0_i32_1 = arith.constant 0 : i32
    %c0_i32_2 = arith.constant 0 : i32
    return %c0_i32, %c0_i32_0, %c0_i32_1 : i32, i32, i32
  }
  func.func @transform_3(%arg0: i32) -> (i32, i32) {
    %c0_i32 = arith.constant 0 : i32
    %c0_i32_0 = arith.constant 0 : i32
    %c0_i32_1 = arith.constant 0 : i32
    return %c0_i32, %c0_i32_0 : i32, i32
  }
  func.func @transform_4(%arg0: i32) -> (i32, i32, i32) {
    %c0_i32 = arith.constant 0 : i32
    %c0_i32_0 = arith.constant 0 : i32
    %c0_i32_1 = arith.constant 0 : i32
    %c0_i32_2 = arith.constant 0 : i32
    return %c0_i32, %c0_i32_0, %c0_i32_1 : i32, i32, i32
  }
  func.func @transform_5(%arg0: i32) -> (i32, i32) {
    %c0_i32 = arith.constant 0 : i32
    %c0_i32_0 = arith.constant 0 : i32
    %c0_i32_1 = arith.constant 0 : i32
    return %c0_i32, %c0_i32_0 : i32, i32
  }
  func.func @transform_6(%arg0: i32) -> (i32, i32, i32) {
    %c0_i32 = arith.constant 0 : i32
    %c0_i32_0 = arith.constant 0 : i32
    %c0_i32_1 = arith.constant 0 : i32
    return %arg0, %c0_i32, %c0_i32_0 : i32, i32, i32
  }
}

</mosaic_0001>

<llo_original>
// kernel: tpu_custom_call.1
$region0: #{tpu_custom_call.1}
  #allocation0 [shape = 'u32[]', space=smem, size = 0x4, offset = 0x4, fixed_abs, tag = 'smem constant byte address 0x4 - core index']
  #allocation1 [shape = 'u32[144,128]{1,0:T(1,128)}', space=vmem, size = 0x12000, scoped, tag = 'internal scratch']
  %s0 = inlined_call_operand.vmem [shape: f32[1,48,32], index: 0, kind: input, shape index: {}]
  %s1 = inlined_call_operand.vmem [shape: bf16[3,32,256], index: 1, kind: input, shape index: {}]
  %s2 = inlined_call_operand.vmem [shape: bf16[3,128,32], index: 2, kind: input, shape index: {}]
  %s3 = inlined_call_operand.vmem [shape: f32[3,288], index: 3, kind: input, shape index: {}]
  %s4 = inlined_call_operand.vmem [shape: f32[3,4,32], index: 4, kind: input, shape index: {}]
  %s5 = inlined_call_operand.vmem [shape: f32[2,32], index: 5, kind: input, shape index: {}]
  %s6 = inlined_call_operand.vmem [shape: f32[1,48,32], index: 6, kind: output, shape index: {}]
  %s7 = sld [smem:[#allocation0]]
  $region34: #{tpu_custom_call.1} parent=0
    _
  %s9 = ssub.s32 1, %s7
  %s10 = scalar_select 0, %s9, %s7
  // Predicated region
  $region2: #{tpu_custom_call.1} parent=0 // pred_check
    _
  $region3: #{tpu_custom_call.1} parent=0 // pred_check_branch
    %12 = sbr.rel (0) target = $region5
  $region4: #{tpu_custom_call.1} parent=0 // pred_region
    _
  $region5: #{tpu_custom_call.1} parent=0 // pred_fallthru
    _
  // Predicated region
  $region6: #{tpu_custom_call.1} parent=0 // pred_check
    _
  $region7: #{tpu_custom_call.1} parent=0 // pred_check_branch
    %14 = sbr.rel (0) target = $region9
  $region8: #{tpu_custom_call.1} parent=0 // pred_region
    _
  $region9: #{tpu_custom_call.1} parent=0 // pred_fallthru
    _
  // Predicated region
  $region10: #{tpu_custom_call.1} parent=0 // pred_check
    _
  $region11: #{tpu_custom_call.1} parent=0 // pred_check_branch
    %16 = sbr.rel (0) target = $region13
  $region12: #{tpu_custom_call.1} parent=0 // pred_region
    _
  $region13: #{tpu_custom_call.1} parent=0 // pred_fallthru
    _
  // Predicated region
  $region14: #{tpu_custom_call.1} parent=0 // pred_check
    _
  $region15: #{tpu_custom_call.1} parent=0 // pred_check_branch
    %18 = sbr.rel (0) target = $region17
  $region16: #{tpu_custom_call.1} parent=0 // pred_region
    _
  $region17: #{tpu_custom_call.1} parent=0 // pred_fallthru
    _
  // Predicated region
  $region18: #{tpu_custom_call.1} parent=0 // pred_check
    _
  $region19: #{tpu_custom_call.1} parent=0 // pred_check_branch
    %20 = sbr.rel (0) target = $region21
  $region20: #{tpu_custom_call.1} parent=0 // pred_region
    _
  $region21: #{tpu_custom_call.1} parent=0 // pred_fallthru
    _
  // Predicated region
  $region22: #{tpu_custom_call.1} parent=0 // pred_check
    _
  $region23: #{tpu_custom_call.1} parent=0 // pred_check_branch
    %22 = sbr.rel (0) target = $region25
  $region24: #{tpu_custom_call.1} parent=0 // pred_region
    _
  $region25: #{tpu_custom_call.1} parent=0 // pred_fallthru
    _
  %v24 = vlaneseq
  %v25 = vand.u32 %v24, 127
  %vm26 = vcmp.ge.s32.totalorder %v25, 0
  %vm27 = vcmp.lt.s32.totalorder %v25, 8
  %vm28 = vmand %vm26, %vm27
  %v29 = vsel %vm28, 1, 0
  %v30 = vcvt.s32.f32 %v29
  %vm31 = vcmp.ge.s32.totalorder %v25, 8
  %vm32 = vcmp.lt.s32.totalorder %v25, 16
  %vm33 = vmand %vm31, %vm32
  %v34 = vsel %vm33, 1, 0
  %v35 = vcvt.s32.f32 %v34
  %vm36 = vcmp.ge.s32.totalorder %v25, 16
  %vm37 = vcmp.lt.s32.totalorder %v25, 24
  %vm38 = vmand %vm36, %vm37
  %v39 = vsel %vm38, 1, 0
  %v40 = vcvt.s32.f32 %v39
  %vm41 = vcmp.ge.s32.totalorder %v25, 24
  %vm42 = vcmp.lt.s32.totalorder %v25, 32
  %vm43 = vmand %vm41, %vm42
  %v44 = vsel %vm43, 1, 0
  %v45 = vcvt.s32.f32 %v44
  %v50 = vld [vmem:[%s0] sm:$0xff]
  %v51 = vld [vmem:[%s0 + $0x8] sm:$0xff]
  %v52 = vld [vmem:[%s0 + $0x10] sm:$0xff]
  %v53 = vld [vmem:[%s0 + $0x18] sm:$0xff]
  %v54 = vld [vmem:[%s0 + $0x20] sm:$0xff]
  %v55 = vld [vmem:[%s0 + $0x28] sm:$0xff]
  %v56 = vld [vmem:[%s1] sm:$0xff]
  %v57 = vld [vmem:[%s1 + $0x8] sm:$0xff]
  %v58 = vld [vmem:[%s1 + $0x10] sm:$0xff]
  %v59 = vld [vmem:[%s1 + $0x18] sm:$0xff]
  %v60 = vld [vmem:[%s3] ss:$4 sm:$0x7]
  %v61 = vld [vmem:[%s4] sm:$0xf]
  %vm62 = vcmask 261120
  %v63 = vsel %vm62, %v50, 0.0
  %64 = vadd.xlane.f32.xlu0 %v63
  %v65 = vpop.xlane.xlu0 %64
  %v66 = vsel %vm62, %v51, 0.0
  %67 = vadd.xlane.f32.xlu0 %v66
  %v68 = vpop.xlane.xlu0 %67
  %v69 = vsel %vm62, %v52, 0.0
  %70 = vadd.xlane.f32.xlu0 %v69
  %v71 = vpop.xlane.xlu0 %70
  %v72 = vsel %vm62, %v53, 0.0
  %73 = vadd.xlane.f32.xlu0 %v72
  %v74 = vpop.xlane.xlu0 %73
  %v75 = vsel %vm62, %v54, 0.0
  %76 = vadd.xlane.f32.xlu0 %v75
  %v77 = vpop.xlane.xlu0 %76
  %v78 = vsel %vm62, %v55, 0.0
  %79 = vadd.xlane.f32.xlu0 %v78
  %v80 = vpop.xlane.xlu0 %79
  %v81 = vrcp.pop 32.0
  %v82 = vmul.f32 %v65, %v81
  %v83 = vmul.f32 %v68, %v81
  %v84 = vmul.f32 %v71, %v81
  %v85 = vmul.f32 %v74, %v81
  %v86 = vmul.f32 %v77, %v81
  %v87 = vmul.f32 %v80, %v81
  %v88 = vmul.f32 %v50, %v50
  %v89 = vmul.f32 %v51, %v51
  %v90 = vmul.f32 %v52, %v52
  %v91 = vmul.f32 %v53, %v53
  %v92 = vmul.f32 %v54, %v54
  %v93 = vmul.f32 %v55, %v55
  %v94 = vsel %vm62, %v88, 0.0
  %95 = vadd.xlane.f32.xlu0 %v94
  %v96 = vpop.xlane.xlu0 %95
  %v97 = vsel %vm62, %v89, 0.0
  %98 = vadd.xlane.f32.xlu0 %v97
  %v99 = vpop.xlane.xlu0 %98
  %v100 = vsel %vm62, %v90, 0.0
  %101 = vadd.xlane.f32.xlu0 %v100
  %v102 = vpop.xlane.xlu0 %101
  %v103 = vsel %vm62, %v91, 0.0
  %104 = vadd.xlane.f32.xlu0 %v103
  %v105 = vpop.xlane.xlu0 %104
  %v106 = vsel %vm62, %v92, 0.0
  %107 = vadd.xlane.f32.xlu0 %v106
  %v108 = vpop.xlane.xlu0 %107
  %v109 = vsel %vm62, %v93, 0.0
  %110 = vadd.xlane.f32.xlu0 %v109
  %v111 = vpop.xlane.xlu0 %110
  %v112 = vmul.f32 %v96, %v81
  %v113 = vmul.f32 %v99, %v81
  %v114 = vmul.f32 %v102, %v81
  %v115 = vmul.f32 %v105, %v81
  %v116 = vmul.f32 %v108, %v81
  %v117 = vmul.f32 %v111, %v81
  %v118 = vmul.f32 %v82, %v82
  %v119 = vmul.f32 %v83, %v83
  %v120 = vmul.f32 %v84, %v84
  %v121 = vmul.f32 %v85, %v85
  %v122 = vmul.f32 %v86, %v86
  %v123 = vmul.f32 %v87, %v87
  %v124 = vsub.f32 %v112, %v118
  %v125 = vsub.f32 %v113, %v119
  %v126 = vsub.f32 %v114, %v120
  %v127 = vsub.f32 %v115, %v121
  %v128 = vsub.f32 %v116, %v122
  %v129 = vsub.f32 %v117, %v123
  %v130 = vsub.f32 %v50, %v82
  %v131 = vsub.f32 %v51, %v83
  %v132 = vsub.f32 %v52, %v84
  %v133 = vsub.f32 %v53, %v85
  %v134 = vsub.f32 %v54, %v86
  %v135 = vsub.f32 %v55, %v87
  %v136 = vadd.f32 %v124, 1e-05
  %v137 = vadd.f32 %v125, 1e-05
  %v138 = vadd.f32 %v126, 1e-05
  %v139 = vadd.f32 %v127, 1e-05
  %v140 = vadd.f32 %v128, 1e-05
  %v141 = vadd.f32 %v129, 1e-05
  %v142 = vrsqrt.pop %v136
  %v143 = vrsqrt.pop %v137
  %v144 = vrsqrt.pop %v138
  %v145 = vrsqrt.pop %v139
  %v146 = vrsqrt.pop %v140
  %v147 = vrsqrt.pop %v141
  %v148 = vmul.f32 %v130, %v142
  %v149 = vmul.f32 %v131, %v143
  %v150 = vmul.f32 %v132, %v144
  %v151 = vmul.f32 %v133, %v145
  %v152 = vmul.f32 %v134, %v146
  %v153 = vmul.f32 %v135, %v147
  %v154 = vlaneseq
  %v155 = vshrl.u32 %v154, 7
  %v156 = vsub.s32 0, %v155
  %v157 = vrot.slane %v61, %v156
  %v158 = vmul.f32 %v148, %v157
  %v159 = vmul.f32 %v149, %v157
  %v160 = vmul.f32 %v150, %v157
  %v161 = vmul.f32 %v151, %v157
  %v162 = vmul.f32 %v152, %v157
  %v163 = vmul.f32 %v153, %v157
  %v164 = vlaneseq
  %v165 = vshrl.u32 %v164, 7
  %v166 = vsub.s32 1, %v165
  %v167 = vrot.slane %v61, %v166
  %v168 = vadd.f32 %v158, %v167
  %v169 = vadd.f32 %v159, %v167
  %v170 = vadd.f32 %v160, %v167
  %v171 = vadd.f32 %v161, %v167
  %v172 = vadd.f32 %v162, %v167
  %v173 = vadd.f32 %v163, %v167
  %v174 = vpack.c.bf16 %v169, %v168
  %v175 = vpack.c.bf16 %v171, %v170
  %v176 = vpack.c.bf16 %v173, %v172
  %v178 = vlaneseq
  %v179 = vshrl.u32 %v178, 7
  %v180 = vsub.s32 0, %v179
  %v181 = vrot.slane %v60, %v180
  %v187 = vunpack.c.l.b16 %v56
  %v188 = vunpack.c.l.b16 %v57
  %v189 = vunpack.c.l.b16 %v58
  %v190 = vunpack.c.l.b16 %v59
  %v191 = vpack.c.b16 %v188, %v187
  %v192 = vpack.c.b16 %v190, %v189
  %v196 = vsel %vm62, %v174, 0
  %v199 = vsel %vm62, %v175, 0
  %v202 = vsel %vm62, %v176, 0
  %204 = vmatprep.subr.bf16.mxu0 0
  %205 = vmatpush1.bf16.msra.mxu0 %v191
  %206 = vmatprep.subr.bf16.mxu0 0
  %207 = vmatpush1.bf16.msra.mxu0 %v192
  %208 = vmatprep.subr.bf16.mxu0 0
  %209 = vmatpush1.bf16.msra.mxu0 0
  %210 = vmatprep.subr.bf16.mxu0 0
  %211 = vmatpush1.bf16.msra.mxu0 0
  %212 = vmatprep.subr.bf16.mxu0 0
  %213 = vmatpush1.bf16.msra.mxu0 0
  %214 = vmatprep.subr.bf16.mxu0 0
  %215 = vmatpush1.bf16.msra.mxu0 0
  %216 = vmatprep.subr.bf16.mxu0 0
  %217 = vmatpush1.bf16.msra.mxu0 0
  %218 = vmatprep.subr.bf16.mxu0 0
  %219 = vmatpush1.bf16.msra.mxu0 0
  %220 = vmatprep.subr.bf16.mxu0 0
  %221 = vmatpush1.bf16.msra.mxu0 0
  %222 = vmatprep.subr.bf16.mxu0 0
  %223 = vmatpush1.bf16.msra.mxu0 0
  %224 = vmatprep.subr.bf16.mxu0 0
  %225 = vmatpush1.bf16.msra.mxu0 0
  %226 = vmatprep.subr.bf16.mxu0 0
  %227 = vmatpush1.bf16.msra.mxu0 0
  %228 = vmatprep.subr.bf16.mxu0 0
  %229 = vmatpush1.bf16.msra.mxu0 0
  %230 = vmatprep.subr.bf16.mxu0 0
  %231 = vmatpush1.bf16.msra.mxu0 0
  %232 = vmatprep.subr.bf16.mxu0 0
  %233 = vmatpush1.bf16.msra.mxu0 0
  %234 = vmatprep.subr.bf16.mxu0 0
  %235 = vmatpush1.bf16.msra.mxu0 0
  %236 = vmatprep.mubr.bf16.mxu0 0
  %237 = vmatmul.mubr.bf16.gmra.mrb[0].mxu0 %v196
  %v238 = vpop.f32.mrb[0].mxu0
  %v239 = vadd.f32 %v181, %v238
  %v240 = vpop.f32.mrb[0].mxu0
  %v241 = vpop.f32.mrb[0].mxu0
  %v242 = vadd.f32 %v181, %v241
  %v243 = vpop.f32.mrb[0].mxu0
  %244 = vmatprep.mubr.bf16.mxu0 0
  %245 = vmatmul.mubr.bf16.gmra.mrb[0].mxu0 %v199
  %v246 = vpop.f32.mrb[0].mxu0
  %v247 = vadd.f32 %v181, %v246
  %v248 = vpop.f32.mrb[0].mxu0
  %v249 = vpop.f32.mrb[0].mxu0
  %v250 = vadd.f32 %v181, %v249
  %v251 = vpop.f32.mrb[0].mxu0
  %252 = vmatprep.mubr.bf16.mxu0 0
  %253 = vmatmul.mubr.bf16.gmra.mrb[0].mxu0 %v202
  %v254 = vpop.f32.mrb[0].mxu0
  %v255 = vadd.f32 %v181, %v254
  %v256 = vpop.f32.mrb[0].mxu0
  %v257 = vpop.f32.mrb[0].mxu0
  %v258 = vadd.f32 %v181, %v257
  %v259 = vpop.f32.mrb[0].mxu0
  %260 = vdwg.mxu0
  %v261 = vpack.c.bf16 %v242, %v239
  %v262 = vpack.c.bf16 %v247, %v247
  %263 = vrot.lane.b32.xlu0 %v30, 32
  %v264 = vpop.permute.xlu0 %263
  %265 = vrot.lane.b32.xlu0 %v35, 32
  %v266 = vpop.permute.xlu0 %265
  %267 = vrot.lane.b32.xlu0 %v40, 32
  %v268 = vpop.permute.xlu0 %267
  %269 = vrot.lane.b32.xlu0 %v45, 32
  %v270 = vpop.permute.xlu0 %269
  %v275 = vmul.f32 %v239, %v264
  %v276 = vmul.f32 %v242, %v264
  %v277 = vmul.f32 %v247, %v264
  %v278 = vmul.f32 %v239, %v266
  %v279 = vmul.f32 %v242, %v266
  %v280 = vmul.f32 %v247, %v266
  %v281 = vmul.f32 %v239, %v268
  %v282 = vmul.f32 %v242, %v268
  %v283 = vmul.f32 %v247, %v268
  %v284 = vmul.f32 %v239, %v270
  %v285 = vmul.f32 %v242, %v270
  %v286 = vmul.f32 %v247, %v270
  %v287 = vpack.c.bf16 %v276, %v275
  %v288 = vpack.c.bf16 %v278, %v277
  %v289 = vpack.c.bf16 %v280, %v279
  %v290 = vpack.c.bf16 %v282, %v281
  %v291 = vpack.c.bf16 %v284, %v283
  %v292 = vpack.c.bf16 %v286, %v285
  %293 = vrot.lane.b32.xlu0 %v30, 64
  %v294 = vpop.permute.xlu0 %293
  %295 = vrot.lane.b32.xlu0 %v35, 64
  %v296 = vpop.permute.xlu0 %295
  %297 = vrot.lane.b32.xlu0 %v40, 64
  %v298 = vpop.permute.xlu0 %297
  %299 = vrot.lane.b32.xlu0 %v45, 64
  %v300 = vpop.permute.xlu0 %299
  %v305 = vmul.f32 %v239, %v294
  %v306 = vmul.f32 %v242, %v294
  %v307 = vmul.f32 %v247, %v294
  %v308 = vmul.f32 %v239, %v296
  %v309 = vmul.f32 %v242, %v296
  %v310 = vmul.f32 %v247, %v296
  %v311 = vmul.f32 %v239, %v298
  %v312 = vmul.f32 %v242, %v298
  %v313 = vmul.f32 %v247, %v298
  %v314 = vmul.f32 %v239, %v300
  %v315 = vmul.f32 %v242, %v300
  %v316 = vmul.f32 %v247, %v300
  %v317 = vpack.c.bf16 %v306, %v305
  %v318 = vpack.c.bf16 %v308, %v307
  %v319 = vpack.c.bf16 %v310, %v309
  %v320 = vpack.c.bf16 %v312, %v311
  %v321 = vpack.c.bf16 %v314, %v313
  %v322 = vpack.c.bf16 %v316, %v315
  %329 = vrot.lane.b32.xlu0 %v287, 96
  %v330 = vpop.permute.xlu0 %329
  %331 = vrot.lane.b32.xlu0 %v288, 96
  %v332 = vpop.permute.xlu0 %331
  %333 = vrot.lane.b32.xlu0 %v289, 96
  %v334 = vpop.permute.xlu0 %333
  %335 = vrot.lane.b32.xlu0 %v290, 96
  %v336 = vpop.permute.xlu0 %335
  %337 = vrot.lane.b32.xlu0 %v291, 96
  %v338 = vpop.permute.xlu0 %337
  %339 = vrot.lane.b32.xlu0 %v292, 96
  %v340 = vpop.permute.xlu0 %339
  %v342 = vsel %vm62, %v261, 0
  %v345 = vsel %vm62, %v262, 0
  %v348 = vsel %vm62, %v330, 0
  %v351 = vsel %vm62, %v332, 0
  %v354 = vsel %vm62, %v334, 0
  %v357 = vsel %vm62, %v336, 0
  %v360 = vsel %vm62, %v338, 0
  %v363 = vsel %vm62, %v340, 0
  %365 = vmatprep.subr.bf16.mxu0 0
  %366 = vmatpush1.bf16.xpose.msra.mxu0 %v348
  %367 = vmatprep.subr.bf16.mxu0 0
  %368 = vmatpush1.bf16.xpose.msra.mxu0 %v351
  %369 = vmatprep.subr.bf16.mxu0 0
  %370 = vmatpush1.bf16.xpose.msra.mxu0 %v354
  %371 = vmatprep.subr.bf16.mxu0 0
  %372 = vmatpush1.bf16.xpose.msra.mxu0 %v357
  %373 = vmatprep.subr.bf16.mxu0 0
  %374 = vmatpush1.bf16.xpose.msra.mxu0 %v360
  %375 = vmatprep.subr.bf16.mxu0 0
  %376 = vmatpush1.bf16.xpose.msra.mxu0 %v363
  %377 = vmatprep.subr.bf16.mxu0 0
  %378 = vmatpush1.bf16.xpose.msra.mxu0 0
  %379 = vmatprep.subr.bf16.mxu0 0
  %380 = vmatpush1.bf16.xpose.msra.mxu0 0
  %381 = vmatprep.subr.bf16.mxu0 0
  %382 = vmatpush1.bf16.xpose.msra.mxu0 0
  %383 = vmatprep.subr.bf16.mxu0 0
  %384 = vmatpush1.bf16.xpose.msra.mxu0 0
  %385 = vmatprep.subr.bf16.mxu0 0
  %386 = vmatpush1.bf16.xpose.msra.mxu0 0
  %387 = vmatprep.subr.bf16.mxu0 0
  %388 = vmatpush1.bf16.xpose.msra.mxu0 0
  %389 = vmatprep.subr.bf16.mxu0 0
  %390 = vmatpush1.bf16.xpose.msra.mxu0 0
  %391 = vmatprep.subr.bf16.mxu0 0
  %392 = vmatpush1.bf16.xpose.msra.mxu0 0
  %393 = vmatprep.subr.bf16.mxu0 0
  %394 = vmatpush1.bf16.xpose.msra.mxu0 0
  %395 = vmatprep.subr.bf16.mxu0 0
  %396 = vmatpush1.bf16.xpose.msra.mxu0 0
  %397 = vmatprep.mubr.bf16.mxu0 0
  %398 = vmatmul.mubr.bf16.gmra.mrb[0].mxu0 %v342
  %v399 = vpop.f32.mrb[0].mxu0
  %v400 = vadd.f32 0.0, %v399
  %v401 = vpop.f32.mrb[0].mxu0
  %v402 = vpop.f32.mrb[0].mxu0
  %v403 = vadd.f32 0.0, %v402
  %v404 = vpop.f32.mrb[0].mxu0
  %405 = vmatprep.mubr.bf16.mxu0 0
  %406 = vmatmul.mubr.bf16.gmra.mrb[0].mxu0 %v345
  %v407 = vpop.f32.mrb[0].mxu0
  %v408 = vadd.f32 0.0, %v407
  %v409 = vpop.f32.mrb[0].mxu0
  %v410 = vpop.f32.mrb[0].mxu0
  %v411 = vpop.f32.mrb[0].mxu0
  %412 = vdwg.mxu0
  %vm413 = vcmask 785408
  %v414 = vsel %vm413, %v400, -inf
  %415 = vmax.xlane.f32.xlu0 %v414
  %v416 = vpop.xlane.xlu0 %415
  %v417 = vsel %vm413, %v403, -inf
  %418 = vmax.xlane.f32.xlu0 %v417
  %v419 = vpop.xlane.xlu0 %418
  %v420 = vsel %vm413, %v408, -inf
  %421 = vmax.xlane.f32.xlu0 %v420
  %v422 = vpop.xlane.xlu0 %421
  %v423 = vsub.f32 %v400, %v416
  %v424 = vsub.f32 %v403, %v419
  %v425 = vsub.f32 %v408, %v422
  %v426 = vmul.f32 %v423, 1.442695
  %v427 = vpow.pop %v426
  %v428 = vmul.f32 %v424, 1.442695
  %v429 = vpow.pop %v428
  %v430 = vmul.f32 %v425, 1.442695
  %v431 = vpow.pop %v430
  %vm432 = vcmask 195584
  %v433 = vsel %vm432, %v427, 0.0
  %434 = vadd.xlane.f32.xlu0 %v433
  %v435 = vpop.xlane.xlu0 %434
  %v436 = vsel %vm432, %v429, 0.0
  %437 = vadd.xlane.f32.xlu0 %v436
  %v438 = vpop.xlane.xlu0 %437
  %v439 = vsel %vm432, %v431, 0.0
  %440 = vadd.xlane.f32.xlu0 %v439
  %v441 = vpop.xlane.xlu0 %440
  %v442 = vrcp.pop %v435
  %v443 = vrcp.pop %v438
  %v444 = vrcp.pop %v441
  %448 = vrot.lane.b32.xlu0 %v427, 104
  %v449 = vpop.permute.xlu0 %448
  %450 = vrot.lane.b32.xlu0 %v429, 104
  %v451 = vpop.permute.xlu0 %450
  %452 = vrot.lane.b32.xlu0 %v431, 104
  %v453 = vpop.permute.xlu0 %452
  %v457 = vsel %vm432, %v449, 0.0
  %458 = vadd.xlane.f32.xlu0 %v457
  %v459 = vpop.xlane.xlu0 %458
  %v460 = vsel %vm432, %v451, 0.0
  %461 = vadd.xlane.f32.xlu0 %v460
  %v462 = vpop.xlane.xlu0 %461
  %v463 = vsel %vm432, %v453, 0.0
  %464 = vadd.xlane.f32.xlu0 %v463
  %v465 = vpop.xlane.xlu0 %464
  %v466 = vrcp.pop %v459
  %v467 = vrcp.pop %v462
  %v468 = vrcp.pop %v465
  %469 = vrot.lane.b32.xlu0 %v427, 80
  %v470 = vpop.permute.xlu0 %469
  %471 = vrot.lane.b32.xlu0 %v429, 80
  %v472 = vpop.permute.xlu0 %471
  %473 = vrot.lane.b32.xlu0 %v431, 80
  %v474 = vpop.permute.xlu0 %473
  %v478 = vsel %vm432, %v470, 0.0
  %479 = vadd.xlane.f32.xlu0 %v478
  %v480 = vpop.xlane.xlu0 %479
  %v481 = vsel %vm432, %v472, 0.0
  %482 = vadd.xlane.f32.xlu0 %v481
  %v483 = vpop.xlane.xlu0 %482
  %v484 = vsel %vm432, %v474, 0.0
  %485 = vadd.xlane.f32.xlu0 %v484
  %v486 = vpop.xlane.xlu0 %485
  %v487 = vrcp.pop %v480
  %v488 = vrcp.pop %v483
  %v489 = vrcp.pop %v486
  %490 = vrot.lane.b32.xlu0 %v427, 56
  %v491 = vpop.permute.xlu0 %490
  %492 = vrot.lane.b32.xlu0 %v429, 56
  %v493 = vpop.permute.xlu0 %492
  %494 = vrot.lane.b32.xlu0 %v431, 56
  %v495 = vpop.permute.xlu0 %494
  %v499 = vsel %vm432, %v491, 0.0
  %500 = vadd.xlane.f32.xlu0 %v499
  %v501 = vpop.xlane.xlu0 %500
  %v502 = vsel %vm432, %v493, 0.0
  %503 = vadd.xlane.f32.xlu0 %v502
  %v504 = vpop.xlane.xlu0 %503
  %v505 = vsel %vm432, %v495, 0.0
  %506 = vadd.xlane.f32.xlu0 %v505
  %v507 = vpop.xlane.xlu0 %506
  %v508 = vrcp.pop %v501
  %v509 = vrcp.pop %v504
  %v510 = vrcp.pop %v507
  %v511 = vsel %vm432, %v442, %v466
  %v512 = vsel %vm432, %v443, %v467
  %v513 = vsel %vm432, %v444, %v468
  %vm514 = vcmask 392192
  %v515 = vsel %vm514, %v511, %v487
  %v516 = vsel %vm514, %v512, %v488
  %v517 = vsel %vm514, %v513, %v489
  %vm518 = vcmask 588800
  %v519 = vsel %vm518, %v515, %v508
  %v520 = vsel %vm518, %v516, %v509
  %v521 = vsel %vm518, %v517, %v510
  %v522 = vmul.f32 %v427, %v519
  %v523 = vmul.f32 %v429, %v520
  %v524 = vmul.f32 %v431, %v521
  %v525 = vpack.c.bf16 %v523, %v522
  %v526 = vpack.c.bf16 %v524, %v524
  %533 = vrot.lane.b32.xlu0 %v317, 64
  %v534 = vpop.permute.xlu0 %533
  %535 = vrot.lane.b32.xlu0 %v318, 64
  %v536 = vpop.permute.xlu0 %535
  %537 = vrot.lane.b32.xlu0 %v319, 64
  %v538 = vpop.permute.xlu0 %537
  %539 = vrot.lane.b32.xlu0 %v320, 64
  %v540 = vpop.permute.xlu0 %539
  %541 = vrot.lane.b32.xlu0 %v321, 64
  %v542 = vpop.permute.xlu0 %541
  %543 = vrot.lane.b32.xlu0 %v322, 64
  %v544 = vpop.permute.xlu0 %543
  %v552 = vsel %vm413, %v525, 0
  %v555 = vsel %vm413, %v526, 0
  %557 = vmatprep.subr.bf16.mxu0 0
  %558 = vmatpush1.bf16.msra.mxu0 %v534
  %559 = vmatprep.subr.bf16.mxu0 0
  %560 = vmatpush1.bf16.msra.mxu0 %v536
  %561 = vmatprep.subr.bf16.mxu0 0
  %562 = vmatpush1.bf16.msra.mxu0 %v538
  %563 = vmatprep.subr.bf16.mxu0 0
  %564 = vmatpush1.bf16.msra.mxu0 %v540
  %565 = vmatprep.subr.bf16.mxu0 0
  %566 = vmatpush1.bf16.msra.mxu0 %v542
  %567 = vmatprep.subr.bf16.mxu0 0
  %568 = vmatpush1.bf16.msra.mxu0 %v544
  %569 = vmatprep.subr.bf16.mxu0 0
  %570 = vmatpush1.bf16.msra.mxu0 0
  %571 = vmatprep.subr.bf16.mxu0 0
  %572 = vmatpush1.bf16.msra.mxu0 0
  %573 = vmatprep.subr.bf16.mxu0 0
  %574 = vmatpush1.bf16.msra.mxu0 0
  %575 = vmatprep.subr.bf16.mxu0 0
  %576 = vmatpush1.bf16.msra.mxu0 0
  %577 = vmatprep.subr.bf16.mxu0 0
  %578 = vmatpush1.bf16.msra.mxu0 0
  %579 = vmatprep.subr.bf16.mxu0 0
  %580 = vmatpush1.bf16.msra.mxu0 0
  %581 = vmatprep.subr.bf16.mxu0 0
  %582 = vmatpush1.bf16.msra.mxu0 0
  %583 = vmatprep.subr.bf16.mxu0 0
  %584 = vmatpush1.bf16.msra.mxu0 0
  %585 = vmatprep.subr.bf16.mxu0 0
  %586 = vmatpush1.bf16.msra.mxu0 0
  %587 = vmatprep.subr.bf16.mxu0 0
  %588 = vmatpush1.bf16.msra.mxu0 0
  %589 = vmatprep.mubr.bf16.mxu0 0
  %590 = vmatmul.mubr.bf16.gmra.mrb[0].mxu0 %v552
  %v591 = vpop.f32.mrb[0].mxu0
  %v592 = vadd.f32 0.0, %v591
  %v593 = vpop.f32.mrb[0].mxu0
  %v594 = vpop.f32.mrb[0].mxu0
  %v595 = vadd.f32 0.0, %v594
  %v596 = vpop.f32.mrb[0].mxu0
  %597 = vmatprep.mubr.bf16.mxu0 0
  %598 = vmatmul.mubr.bf16.gmra.mrb[0].mxu0 %v555
  %v599 = vpop.f32.mrb[0].mxu0
  %v600 = vadd.f32 0.0, %v599
  %v601 = vpop.f32.mrb[0].mxu0
  %v602 = vpop.f32.mrb[0].mxu0
  %v603 = vpop.f32.mrb[0].mxu0
  %604 = vdwg.mxu0
  %v605 = vpack.c.bf16 %v255, %v250
  %v606 = vpack.c.bf16 %v258, %v258
  %v607 = vmul.f32 %v250, %v264
  %v608 = vmul.f32 %v255, %v264
  %v609 = vmul.f32 %v258, %v264
  %v610 = vmul.f32 %v250, %v266
  %v611 = vmul.f32 %v255, %v266
  %v612 = vmul.f32 %v258, %v266
  %v613 = vmul.f32 %v250, %v268
  %v614 = vmul.f32 %v255, %v268
  %v615 = vmul.f32 %v258, %v268
  %v616 = vmul.f32 %v250, %v270
  %v617 = vmul.f32 %v255, %v270
  %v618 = vmul.f32 %v258, %v270
  %v619 = vpack.c.bf16 %v608, %v607
  %v620 = vpack.c.bf16 %v610, %v609
  %v621 = vpack.c.bf16 %v612, %v611
  %v622 = vpack.c.bf16 %v614, %v613
  %v623 = vpack.c.bf16 %v616, %v615
  %v624 = vpack.c.bf16 %v618, %v617
  %v625 = vmul.f32 %v250, %v294
  %v626 = vmul.f32 %v255, %v294
  %v627 = vmul.f32 %v258, %v294
  %v628 = vmul.f32 %v250, %v296
  %v629 = vmul.f32 %v255, %v296
  %v630 = vmul.f32 %v258, %v296
  %v631 = vmul.f32 %v250, %v298
  %v632 = vmul.f32 %v255, %v298
  %v633 = vmul.f32 %v258, %v298
  %v634 = vmul.f32 %v250, %v300
  %v635 = vmul.f32 %v255, %v300
  %v636 = vmul.f32 %v258, %v300
  %v637 = vpack.c.bf16 %v626, %v625
  %v638 = vpack.c.bf16 %v628, %v627
  %v639 = vpack.c.bf16 %v630, %v629
  %v640 = vpack.c.bf16 %v632, %v631
  %v641 = vpack.c.bf16 %v634, %v633
  %v642 = vpack.c.bf16 %v636, %v635
  %649 = vrot.lane.b32.xlu0 %v619, 96
  %v650 = vpop.permute.xlu0 %649
  %651 = vrot.lane.b32.xlu0 %v620, 96
  %v652 = vpop.permute.xlu0 %651
  %653 = vrot.lane.b32.xlu0 %v621, 96
  %v654 = vpop.permute.xlu0 %653
  %655 = vrot.lane.b32.xlu0 %v622, 96
  %v656 = vpop.permute.xlu0 %655
  %657 = vrot.lane.b32.xlu0 %v623, 96
  %v658 = vpop.permute.xlu0 %657
  %659 = vrot.lane.b32.xlu0 %v624, 96
  %v660 = vpop.permute.xlu0 %659
  %v662 = vsel %vm62, %v605, 0
  %v665 = vsel %vm62, %v606, 0
  %v668 = vsel %vm62, %v650, 0
  %v671 = vsel %vm62, %v652, 0
  %v674 = vsel %vm62, %v654, 0
  %v677 = vsel %vm62, %v656, 0
  %v680 = vsel %vm62, %v658, 0
  %v683 = vsel %vm62, %v660, 0
  %685 = vmatprep.subr.bf16.mxu0 0
  %686 = vmatpush1.bf16.xpose.msra.mxu0 %v668
  %687 = vmatprep.subr.bf16.mxu0 0
  %688 = vmatpush1.bf16.xpose.msra.mxu0 %v671
  %689 = vmatprep.subr.bf16.mxu0 0
  %690 = vmatpush1.bf16.xpose.msra.mxu0 %v674
  %691 = vmatprep.subr.bf16.mxu0 0
  %692 = vmatpush1.bf16.xpose.msra.mxu0 %v677
  %693 = vmatprep.subr.bf16.mxu0 0
  %694 = vmatpush1.bf16.xpose.msra.mxu0 %v680
  %695 = vmatprep.subr.bf16.mxu0 0
  %696 = vmatpush1.bf16.xpose.msra.mxu0 %v683
  %697 = vmatprep.subr.bf16.mxu0 0
  %698 = vmatpush1.bf16.xpose.msra.mxu0 0
  %699 = vmatprep.subr.bf16.mxu0 0
  %700 = vmatpush1.bf16.xpose.msra.mxu0 0
  %701 = vmatprep.subr.bf16.mxu0 0
  %702 = vmatpush1.bf16.xpose.msra.mxu0 0
  %703 = vmatprep.subr.bf16.mxu0 0
  %704 = vmatpush1.bf16.xpose.msra.mxu0 0
  %705 = vmatprep.subr.bf16.mxu0 0
  %706 = vmatpush1.bf16.xpose.msra.mxu0 0
  %707 = vmatprep.subr.bf16.mxu0 0
  %708 = vmatpush1.bf16.xpose.msra.mxu0 0
  %709 = vmatprep.subr.bf16.mxu0 0
  %710 = vmatpush1.bf16.xpose.msra.mxu0 0
  %711 = vmatprep.subr.bf16.mxu0 0
  %712 = vmatpush1.bf16.xpose.msra.mxu0 0
  %713 = vmatprep.subr.bf16.mxu0 0
  %714 = vmatpush1.bf16.xpose.msra.mxu0 0
  %715 = vmatprep.subr.bf16.mxu0 0
  %716 = vmatpush1.bf16.xpose.msra.mxu0 0
  %717 = vmatprep.mubr.bf16.mxu0 0
  %718 = vmatmul.mubr.bf16.gmra.mrb[0].mxu0 %v662
  %v719 = vpop.f32.mrb[0].mxu0
  %v720 = vadd.f32 0.0, %v719
  %v721 = vpop.f32.mrb[0].mxu0
  %v722 = vpop.f32.mrb[0].mxu0
  %v723 = vadd.f32 0.0, %v722
  %v724 = vpop.f32.mrb[0].mxu0
  %725 = vmatprep.mubr.bf16.mxu0 0
  %726 = vmatmul.mubr.bf16.gmra.mrb[0].mxu0 %v665
  %v727 = vpop.f32.mrb[0].mxu0
  %v728 = vadd.f32 0.0, %v727
  %v729 = vpop.f32.mrb[0].mxu0
  %v730 = vpop.f32.mrb[0].mxu0
  %v731 = vpop.f32.mrb[0].mxu0
  %732 = vdwg.mxu0
  %v733 = vsel %vm413, %v720, -inf
  %734 = vmax.xlane.f32.xlu0 %v733
  %v735 = vpop.xlane.xlu0 %734
  %v736 = vsel %vm413, %v723, -inf
  %737 = vmax.xlane.f32.xlu0 %v736
  %v738 = vpop.xlane.xlu0 %737
  %v739 = vsel %vm413, %v728, -inf
  %740 = vmax.xlane.f32.xlu0 %v739
  %v741 = vpop.xlane.xlu0 %740
  %v742 = vsub.f32 %v720, %v735
  %v743 = vsub.f32 %v723, %v738
  %v744 = vsub.f32 %v728, %v741
  %v745 = vmul.f32 %v742, 1.442695
  %v746 = vpow.pop %v745
  %v747 = vmul.f32 %v743, 1.442695
  %v748 = vpow.pop %v747
  %v749 = vmul.f32 %v744, 1.442695
  %v750 = vpow.pop %v749
  %v751 = vsel %vm432, %v746, 0.0
  %752 = vadd.xlane.f32.xlu0 %v751
  %v753 = vpop.xlane.xlu0 %752
  %v754 = vsel %vm432, %v748, 0.0
  %755 = vadd.xlane.f32.xlu0 %v754
  %v756 = vpop.xlane.xlu0 %755
  %v757 = vsel %vm432, %v750, 0.0
  %758 = vadd.xlane.f32.xlu0 %v757
  %v759 = vpop.xlane.xlu0 %758
  %v760 = vrcp.pop %v753
  %v761 = vrcp.pop %v756
  %v762 = vrcp.pop %v759
  %766 = vrot.lane.b32.xlu0 %v746, 104
  %v767 = vpop.permute.xlu0 %766
  %768 = vrot.lane.b32.xlu0 %v748, 104
  %v769 = vpop.permute.xlu0 %768
  %770 = vrot.lane.b32.xlu0 %v750, 104
  %v771 = vpop.permute.xlu0 %770
  %v775 = vsel %vm432, %v767, 0.0
  %776 = vadd.xlane.f32.xlu0 %v775
  %v777 = vpop.xlane.xlu0 %776
  %v778 = vsel %vm432, %v769, 0.0
  %779 = vadd.xlane.f32.xlu0 %v778
  %v780 = vpop.xlane.xlu0 %779
  %v781 = vsel %vm432, %v771, 0.0
  %782 = vadd.xlane.f32.xlu0 %v781
  %v783 = vpop.xlane.xlu0 %782
  %v784 = vrcp.pop %v777
  %v785 = vrcp.pop %v780
  %v786 = vrcp.pop %v783
  %787 = vrot.lane.b32.xlu0 %v746, 80
  %v788 = vpop.permute.xlu0 %787
  %789 = vrot.lane.b32.xlu0 %v748, 80
  %v790 = vpop.permute.xlu0 %789
  %791 = vrot.lane.b32.xlu0 %v750, 80
  %v792 = vpop.permute.xlu0 %791
  %v796 = vsel %vm432, %v788, 0.0
  %797 = vadd.xlane.f32.xlu0 %v796
  %v798 = vpop.xlane.xlu0 %797
  %v799 = vsel %vm432, %v790, 0.0
  %800 = vadd.xlane.f32.xlu0 %v799
  %v801 = vpop.xlane.xlu0 %800
  %v802 = vsel %vm432, %v792, 0.0
  %803 = vadd.xlane.f32.xlu0 %v802
  %v804 = vpop.xlane.xlu0 %803
  %v805 = vrcp.pop %v798
  %v806 = vrcp.pop %v801
  %v807 = vrcp.pop %v804
  %808 = vrot.lane.b32.xlu0 %v746, 56
  %v809 = vpop.permute.xlu0 %808
  %810 = vrot.lane.b32.xlu0 %v748, 56
  %v811 = vpop.permute.xlu0 %810
  %812 = vrot.lane.b32.xlu0 %v750, 56
  %v813 = vpop.permute.xlu0 %812
  %v817 = vsel %vm432, %v809, 0.0
  %818 = vadd.xlane.f32.xlu0 %v817
  %v819 = vpop.xlane.xlu0 %818
  %v820 = vsel %vm432, %v811, 0.0
  %821 = vadd.xlane.f32.xlu0 %v820
  %v822 = vpop.xlane.xlu0 %821
  %v823 = vsel %vm432, %v813, 0.0
  %824 = vadd.xlane.f32.xlu0 %v823
  %v825 = vpop.xlane.xlu0 %824
  %v826 = vrcp.pop %v819
  %v827 = vrcp.pop %v822
  %v828 = vrcp.pop %v825
  %v829 = vsel %vm432, %v760, %v784
  %v830 = vsel %vm432, %v761, %v785
  %v831 = vsel %vm432, %v762, %v786
  %v832 = vsel %vm514, %v829, %v805
  %v833 = vsel %vm514, %v830, %v806
  %v834 = vsel %vm514, %v831, %v807
  %v835 = vsel %vm518, %v832, %v826
  %v836 = vsel %vm518, %v833, %v827
  %v837 = vsel %vm518, %v834, %v828
  %v838 = vmul.f32 %v746, %v835
  %v839 = vmul.f32 %v748, %v836
  %v840 = vmul.f32 %v750, %v837
  %v841 = vpack.c.bf16 %v839, %v838
  %v842 = vpack.c.bf16 %v840, %v840
  %849 = vrot.lane.b32.xlu0 %v637, 64
  %v850 = vpop.permute.xlu0 %849
  %851 = vrot.lane.b32.xlu0 %v638, 64
  %v852 = vpop.permute.xlu0 %851
  %853 = vrot.lane.b32.xlu0 %v639, 64
  %v854 = vpop.permute.xlu0 %853
  %855 = vrot.lane.b32.xlu0 %v640, 64
  %v856 = vpop.permute.xlu0 %855
  %857 = vrot.lane.b32.xlu0 %v641, 64
  %v858 = vpop.permute.xlu0 %857
  %859 = vrot.lane.b32.xlu0 %v642, 64
  %v860 = vpop.permute.xlu0 %859
  %v868 = vsel %vm413, %v841, 0
  %v871 = vsel %vm413, %v842, 0
  %873 = vmatprep.subr.bf16.mxu0 0
  %874 = vmatpush1.bf16.msra.mxu0 %v850
  %875 = vmatprep.subr.bf16.mxu0 0
  %876 = vmatpush1.bf16.msra.mxu0 %v852
  %877 = vmatprep.subr.bf16.mxu0 0
  %878 = vmatpush1.bf16.msra.mxu0 %v854
  %879 = vmatprep.subr.bf16.mxu0 0
  %880 = vmatpush1.bf16.msra.mxu0 %v856
  %881 = vmatprep.subr.bf16.mxu0 0
  %882 = vmatpush1.bf16.msra.mxu0 %v858
  %883 = vmatprep.subr.bf16.mxu0 0
  %884 = vmatpush1.bf16.msra.mxu0 %v860
  %885 = vmatprep.subr.bf16.mxu0 0
  %886 = vmatpush1.bf16.msra.mxu0 0
  %887 = vmatprep.subr.bf16.mxu0 0
  %888 = vmatpush1.bf16.msra.mxu0 0
  %889 = vmatprep.subr.bf16.mxu0 0
  %890 = vmatpush1.bf16.msra.mxu0 0
  %891 = vmatprep.subr.bf16.mxu0 0
  %892 = vmatpush1.bf16.msra.mxu0 0
  %893 = vmatprep.subr.bf16.mxu0 0
  %894 = vmatpush1.bf16.msra.mxu0 0
  %895 = vmatprep.subr.bf16.mxu0 0
  %896 = vmatpush1.bf16.msra.mxu0 0
  %897 = vmatprep.subr.bf16.mxu0 0
  %898 = vmatpush1.bf16.msra.mxu0 0
  %899 = vmatprep.subr.bf16.mxu0 0
  %900 = vmatpush1.bf16.msra.mxu0 0
  %901 = vmatprep.subr.bf16.mxu0 0
  %902 = vmatpush1.bf16.msra.mxu0 0
  %903 = vmatprep.subr.bf16.mxu0 0
  %904 = vmatpush1.bf16.msra.mxu0 0
  %905 = vmatprep.mubr.bf16.mxu0 0
  %906 = vmatmul.mubr.bf16.gmra.mrb[0].mxu0 %v868
  %v907 = vpop.f32.mrb[0].mxu0
  %v908 = vadd.f32 0.0, %v907
  %v909 = vpop.f32.mrb[0].mxu0
  %v910 = vpop.f32.mrb[0].mxu0
  %v911 = vadd.f32 0.0, %v910
  %v912 = vpop.f32.mrb[0].mxu0
  %913 = vmatprep.mubr.bf16.mxu0 0
  %914 = vmatmul.mubr.bf16.gmra.mrb[0].mxu0 %v871
  %v915 = vpop.f32.mrb[0].mxu0
  %v916 = vadd.f32 0.0, %v915
  %v917 = vpop.f32.mrb[0].mxu0
  %v918 = vpop.f32.mrb[0].mxu0
  %v919 = vpop.f32.mrb[0].mxu0
  %920 = vdwg.mxu0
  %v921 = vpack.c.bf16 %v595, %v592
  %v922 = vpack.c.bf16 %v908, %v600
  %v923 = vpack.c.bf16 %v916, %v911
  %924 = vrot.lane.b32.xlu0 %v191, 32
  %v925 = vpop.permute.xlu0 %924
  %926 = vrot.lane.b32.xlu0 %v192, 32
  %v927 = vpop.permute.xlu0 %926
  %v931 = vsel %vm62, %v921, 0
  %v934 = vsel %vm62, %v922, 0
  %v937 = vsel %vm62, %v923, 0
  %939 = vmatprep.subr.bf16.mxu0 0
  %940 = vmatpush1.bf16.msra.mxu0 %v925
  %941 = vmatprep.subr.bf16.mxu0 0
  %942 = vmatpush1.bf16.msra.mxu0 %v927
  %943 = vmatprep.subr.bf16.mxu0 0
  %944 = vmatpush1.bf16.msra.mxu0 0
  %945 = vmatprep.subr.bf16.mxu0 0
  %946 = vmatpush1.bf16.msra.mxu0 0
  %947 = vmatprep.subr.bf16.mxu0 0
  %948 = vmatpush1.bf16.msra.mxu0 0
  %949 = vmatprep.subr.bf16.mxu0 0
  %950 = vmatpush1.bf16.msra.mxu0 0
  %951 = vmatprep.subr.bf16.mxu0 0
  %952 = vmatpush1.bf16.msra.mxu0 0
  %953 = vmatprep.subr.bf16.mxu0 0
  %954 = vmatpush1.bf16.msra.mxu0 0
  %955 = vmatprep.subr.bf16.mxu0 0
  %956 = vmatpush1.bf16.msra.mxu0 0
  %957 = vmatprep.subr.bf16.mxu0 0
  %958 = vmatpush1.bf16.msra.mxu0 0
  %959 = vmatprep.subr.bf16.mxu0 0
  %960 = vmatpush1.bf16.msra.mxu0 0
  %961 = vmatprep.subr.bf16.mxu0 0
  %962 = vmatpush1.bf16.msra.mxu0 0
  %963 = vmatprep.subr.bf16.mxu0 0
  %964 = vmatpush1.bf16.msra.mxu0 0
  %965 = vmatprep.subr.bf16.mxu0 0
  %966 = vmatpush1.bf16.msra.mxu0 0
  %967 = vmatprep.subr.bf16.mxu0 0
  %968 = vmatpush1.bf16.msra.mxu0 0
  %969 = vmatprep.subr.bf16.mxu0 0
  %970 = vmatpush1.bf16.msra.mxu0 0
  %971 = vmatprep.mubr.bf16.mxu0 0
  %972 = vmatmul.mubr.bf16.gmra.mrb[0].mxu0 %v931
  %v973 = vpop.f32.mrb[0].mxu0
  %v974 = vadd.f32 0.0, %v973
  %v975 = vpop.f32.mrb[0].mxu0
  %v976 = vpop.f32.mrb[0].mxu0
  %v977 = vadd.f32 0.0, %v976
  %v978 = vpop.f32.mrb[0].mxu0
  %979 = vmatprep.mubr.bf16.mxu0 0
  %980 = vmatmul.mubr.bf16.gmra.mrb[0].mxu0 %v934
  %v981 = vpop.f32.mrb[0].mxu0
  %v982 = vadd.f32 0.0, %v981
  %v983 = vpop.f32.mrb[0].mxu0
  %v984 = vpop.f32.mrb[0].mxu0
  %v985 = vadd.f32 0.0, %v984
  %v986 = vpop.f32.mrb[0].mxu0
  %987 = vmatprep.mubr.bf16.mxu0 0
  %988 = vmatmul.mubr.bf16.gmra.mrb[0].mxu0 %v937
  %v989 = vpop.f32.mrb[0].mxu0
  %v990 = vadd.f32 0.0, %v989
  %v991 = vpop.f32.mrb[0].mxu0
  %v992 = vpop.f32.mrb[0].mxu0
  %v993 = vadd.f32 0.0, %v992
  %v994 = vpop.f32.mrb[0].mxu0
  %995 = vdwg.mxu0
  %v996 = vadd.f32 %v50, %v974
  %v997 = vadd.f32 %v51, %v977
  %v998 = vadd.f32 %v52, %v982
  %v999 = vadd.f32 %v53, %v985
  %v1000 = vadd.f32 %v54, %v990
  %v1001 = vadd.f32 %v55, %v993
  %1002 = vrot.lane.b32.xlu0 %v181, 32
  %v1003 = vpop.permute.xlu0 %1002
  %v1005 = vadd.f32 %v996, %v1003
  %v1006 = vadd.f32 %v997, %v1003
  %v1007 = vadd.f32 %v998, %v1003
  %v1008 = vadd.f32 %v999, %v1003
  %v1009 = vadd.f32 %v1000, %v1003
  %v1010 = vadd.f32 %v1001, %v1003
  %v1011 = vsel %vm62, %v1005, 0.0
  %1012 = vadd.xlane.f32.xlu0 %v1011
  %v1013 = vpop.xlane.xlu0 %1012
  %v1014 = vsel %vm62, %v1006, 0.0
  %1015 = vadd.xlane.f32.xlu0 %v1014
  %v1016 = vpop.xlane.xlu0 %1015
  %v1017 = vsel %vm62, %v1007, 0.0
  %1018 = vadd.xlane.f32.xlu0 %v1017
  %v1019 = vpop.xlane.xlu0 %1018
  %v1020 = vsel %vm62, %v1008, 0.0
  %1021 = vadd.xlane.f32.xlu0 %v1020
  %v1022 = vpop.xlane.xlu0 %1021
  %v1023 = vsel %vm62, %v1009, 0.0
  %1024 = vadd.xlane.f32.xlu0 %v1023
  %v1025 = vpop.xlane.xlu0 %1024
  %v1026 = vsel %vm62, %v1010, 0.0
  %1027 = vadd.xlane.f32.xlu0 %v1026
  %v1028 = vpop.xlane.xlu0 %1027
  %v1029 = vmul.f32 %v1013, %v81
  %v1030 = vmul.f32 %v1016, %v81
  %v1031 = vmul.f32 %v1019, %v81
  %v1032 = vmul.f32 %v1022, %v81
  %v1033 = vmul.f32 %v1025, %v81
  %v1034 = vmul.f32 %v1028, %v81
  %v1035 = vmul.f32 %v1005, %v1005
  %v1036 = vmul.f32 %v1006, %v1006
  %v1037 = vmul.f32 %v1007, %v1007
  %v1038 = vmul.f32 %v1008, %v1008
  %v1039 = vmul.f32 %v1009, %v1009
  %v1040 = vmul.f32 %v1010, %v1010
  %v1041 = vsel %vm62, %v1035, 0.0
  %1042 = vadd.xlane.f32.xlu0 %v1041
  %v1043 = vpop.xlane.xlu0 %1042
  %v1044 = vsel %vm62, %v1036, 0.0
  %1045 = vadd.xlane.f32.xlu0 %v1044
  %v1046 = vpop.xlane.xlu0 %1045
  %v1047 = vsel %vm62, %v1037, 0.0
  %1048 = vadd.xlane.f32.xlu0 %v1047
  %v1049 = vpop.xlane.xlu0 %1048
  %v1050 = vsel %vm62, %v1038, 0.0
  %1051 = vadd.xlane.f32.xlu0 %v1050
  %v1052 = vpop.xlane.xlu0 %1051
  %v1053 = vsel %vm62, %v1039, 0.0
  %1054 = vadd.xlane.f32.xlu0 %v1053
  %v1055 = vpop.xlane.xlu0 %1054
  %v1056 = vsel %vm62, %v1040, 0.0
  %1057 = vadd.xlane.f32.xlu0 %v1056
  %v1058 = vpop.xlane.xlu0 %1057
  %v1059 = vmul.f32 %v1043, %v81
  %v1060 = vmul.f32 %v1046, %v81
  %v1061 = vmul.f32 %v1049, %v81
  %v1062 = vmul.f32 %v1052, %v81
  %v1063 = vmul.f32 %v1055, %v81
  %v1064 = vmul.f32 %v1058, %v81
  %v1065 = vmul.f32 %v1029, %v1029
  %v1066 = vmul.f32 %v1030, %v1030
  %v1067 = vmul.f32 %v1031, %v1031
  %v1068 = vmul.f32 %v1032, %v1032
  %v1069 = vmul.f32 %v1033, %v1033
  %v1070 = vmul.f32 %v1034, %v1034
  %v1071 = vsub.f32 %v1059, %v1065
  %v1072 = vsub.f32 %v1060, %v1066
  %v1073 = vsub.f32 %v1061, %v1067
  %v1074 = vsub.f32 %v1062, %v1068
  %v1075 = vsub.f32 %v1063, %v1069
  %v1076 = vsub.f32 %v1064, %v1070
  %v1077 = vsub.f32 %v1005, %v1029
  %v1078 = vsub.f32 %v1006, %v1030
  %v1079 = vsub.f32 %v1007, %v1031
  %v1080 = vsub.f32 %v1008, %v1032
  %v1081 = vsub.f32 %v1009, %v1033
  %v1082 = vsub.f32 %v1010, %v1034
  %v1083 = vadd.f32 %v1071, 1e-05
  %v1084 = vadd.f32 %v1072, 1e-05
  %v1085 = vadd.f32 %v1073, 1e-05
  %v1086 = vadd.f32 %v1074, 1e-05
  %v1087 = vadd.f32 %v1075, 1e-05
  %v1088 = vadd.f32 %v1076, 1e-05
  %v1089 = vrsqrt.pop %v1083
  %v1090 = vrsqrt.pop %v1084
  %v1091 = vrsqrt.pop %v1085
  %v1092 = vrsqrt.pop %v1086
  %v1093 = vrsqrt.pop %v1087
  %v1094 = vrsqrt.pop %v1088
  %v1095 = vmul.f32 %v1077, %v1089
  %v1096 = vmul.f32 %v1078, %v1090
  %v1097 = vmul.f32 %v1079, %v1091
  %v1098 = vmul.f32 %v1080, %v1092
  %v1099 = vmul.f32 %v1081, %v1093
  %v1100 = vmul.f32 %v1082, %v1094
  %v1101 = vlaneseq
  %v1102 = vshrl.u32 %v1101, 7
  %v1103 = vsub.s32 2, %v1102
  %v1104 = vrot.slane %v61, %v1103
  %v1105 = vmul.f32 %v1095, %v1104
  %v1106 = vmul.f32 %v1096, %v1104
  %v1107 = vmul.f32 %v1097, %v1104
  %v1108 = vmul.f32 %v1098, %v1104
  %v1109 = vmul.f32 %v1099, %v1104
  %v1110 = vmul.f32 %v1100, %v1104
  %v1111 = vlaneseq
  %v1112 = vshrl.u32 %v1111, 7
  %v1113 = vsub.s32 3, %v1112
  %v1114 = vrot.slane %v61, %v1113
  %v1115 = vadd.f32 %v1105, %v1114
  %v1116 = vadd.f32 %v1106, %v1114
  %v1117 = vadd.f32 %v1107, %v1114
  %v1118 = vadd.f32 %v1108, %v1114
  %v1119 = vadd.f32 %v1109, %v1114
  %v1120 = vadd.f32 %v1110, %v1114
  %v1121 = vpack.c.bf16 %v1116, %v1115
  %v1122 = vpack.c.bf16 %v1118, %v1117
  %v1123 = vpack.c.bf16 %v1120, %v1119
  %v1124 = vrot.slane %v60, 1
  %v1125 = vlaneseq
  %v1126 = vshrl.u32 %v1125, 7
  %v1127 = vsub.s32 0, %v1126
  %v1128 = vrot.slane %v1124, %v1127
  %v1130 = vunpack.c.h.b16 %v56
  %v1131 = vunpack.c.h.b16 %v57
  %v1132 = vunpack.c.h.b16 %v58
  %v1133 = vunpack.c.h.b16 %v59
  %v1134 = vpack.c.b16 %v1131, %v1130
  %v1135 = vpack.c.b16 %v1133, %v1132
  %v1139 = vsel %vm62, %v1121, 0
  %v1142 = vsel %vm62, %v1122, 0
  %v1145 = vsel %vm62, %v1123, 0
  %1147 = vmatprep.subr.bf16.mxu0 0
  %1148 = vmatpush1.bf16.msra.mxu0 %v1134
  %1149 = vmatprep.subr.bf16.mxu0 0
  %1150 = vmatpush1.bf16.msra.mxu0 %v1135
  %1151 = vmatprep.subr.bf16.mxu0 0
  %1152 = vmatpush1.bf16.msra.mxu0 0
  %1153 = vmatprep.subr.bf16.mxu0 0
  %1154 = vmatpush1.bf16.msra.mxu0 0
  %1155 = vmatprep.subr.bf16.mxu0 0
  %1156 = vmatpush1.bf16.msra.mxu0 0
  %1157 = vmatprep.subr.bf16.mxu0 0
  %1158 = vmatpush1.bf16.msra.mxu0 0
  %1159 = vmatprep.subr.bf16.mxu0 0
  %1160 = vmatpush1.bf16.msra.mxu0 0
  %1161 = vmatprep.subr.bf16.mxu0 0
  %1162 = vmatpush1.bf16.msra.mxu0 0
  %1163 = vmatprep.subr.bf16.mxu0 0
  %1164 = vmatpush1.bf16.msra.mxu0 0
  %1165 = vmatprep.subr.bf16.mxu0 0
  %1166 = vmatpush1.bf16.msra.mxu0 0
  %1167 = vmatprep.subr.bf16.mxu0 0
  %1168 = vmatpush1.bf16.msra.mxu0 0
  %1169 = vmatprep.subr.bf16.mxu0 0
  %1170 = vmatpush1.bf16.msra.mxu0 0
  %1171 = vmatprep.subr.bf16.mxu0 0
  %1172 = vmatpush1.bf16.msra.mxu0 0
  %1173 = vmatprep.subr.bf16.mxu0 0
  %1174 = vmatpush1.bf16.msra.mxu0 0
  %1175 = vmatprep.subr.bf16.mxu0 0
  %1176 = vmatpush1.bf16.msra.mxu0 0
  %1177 = vmatprep.subr.bf16.mxu0 0
  %1178 = vmatpush1.bf16.msra.mxu0 0
  %1179 = vmatprep.mubr.bf16.mxu0 0
  %1180 = vmatmul.mubr.bf16.gmra.mrb[0].mxu0 %v1139
  %v1181 = vpop.f32.mrb[0].mxu0
  %v1182 = vadd.f32 %v1128, %v1181
  %v1183 = vpop.f32.mrb[0].mxu0
  %v1184 = vpop.f32.mrb[0].mxu0
  %v1185 = vadd.f32 %v1128, %v1184
  %v1186 = vpop.f32.mrb[0].mxu0
  %1187 = vmatprep.mubr.bf16.mxu0 0
  %1188 = vmatmul.mubr.bf16.gmra.mrb[0].mxu0 %v1142
  %v1189 = vpop.f32.mrb[0].mxu0
  %v1190 = vadd.f32 %v1128, %v1189
  %v1191 = vpop.f32.mrb[0].mxu0
  %v1192 = vpop.f32.mrb[0].mxu0
  %v1193 = vadd.f32 %v1128, %v1192
  %v1194 = vpop.f32.mrb[0].mxu0
  %1195 = vmatprep.mubr.bf16.mxu0 0
  %1196 = vmatmul.mubr.bf16.gmra.mrb[0].mxu0 %v1145
  %v1197 = vpop.f32.mrb[0].mxu0
  %v1198 = vadd.f32 %v1128, %v1197
  %v1199 = vpop.f32.mrb[0].mxu0
  %v1200 = vpop.f32.mrb[0].mxu0
  %v1201 = vadd.f32 %v1128, %v1200
  %v1202 = vpop.f32.mrb[0].mxu0
  %1203 = vdwg.mxu0
  %v1204 = vmul.f32 %v1182, %v1182
  %v1205 = vmul.f32 %v1185, %v1185
  %v1206 = vmul.f32 %v1190, %v1190
  %v1207 = vmul.f32 %v1193, %v1193
  %v1208 = vmul.f32 %v1198, %v1198
  %v1209 = vmul.f32 %v1201, %v1201
  %v1210 = vmul.f32 %v1182, %v1204
  %v1211 = vmul.f32 %v1185, %v1205
  %v1212 = vmul.f32 %v1190, %v1206
  %v1213 = vmul.f32 %v1193, %v1207
  %v1214 = vmul.f32 %v1198, %v1208
  %v1215 = vmul.f32 %v1201, %v1209
  %v1216 = vmul.f32 %v1210, 0.044715
  %v1217 = vmul.f32 %v1211, 0.044715
  %v1218 = vmul.f32 %v1212, 0.044715
  %v1219 = vmul.f32 %v1213, 0.044715
  %v1220 = vmul.f32 %v1214, 0.044715
  %v1221 = vmul.f32 %v1215, 0.044715
  %v1222 = vadd.f32 %v1182, %v1216
  %v1223 = vadd.f32 %v1185, %v1217
  %v1224 = vadd.f32 %v1190, %v1218
  %v1225 = vadd.f32 %v1193, %v1219
  %v1226 = vadd.f32 %v1198, %v1220
  %v1227 = vadd.f32 %v1201, %v1221
  %v1228 = vmul.f32 %v1222, 0.7978846
  %v1229 = vmul.f32 %v1223, 0.7978846
  %v1230 = vmul.f32 %v1224, 0.7978846
  %v1231 = vmul.f32 %v1225, 0.7978846
  %v1232 = vmul.f32 %v1226, 0.7978846
  %v1233 = vmul.f32 %v1227, 0.7978846
  %v1234 = vtanh.pop %v1228
  %v1235 = vtanh.pop %v1229
  %v1236 = vtanh.pop %v1230
  %v1237 = vtanh.pop %v1231
  %v1238 = vtanh.pop %v1232
  %v1239 = vtanh.pop %v1233
  %v1240 = vadd.f32 %v1234, 1.0
  %v1241 = vadd.f32 %v1235, 1.0
  %v1242 = vadd.f32 %v1236, 1.0
  %v1243 = vadd.f32 %v1237, 1.0
  %v1244 = vadd.f32 %v1238, 1.0
  %v1245 = vadd.f32 %v1239, 1.0
  %v1246 = vmul.f32 %v1240, 0.5
  %v1247 = vmul.f32 %v1241, 0.5
  %v1248 = vmul.f32 %v1242, 0.5
  %v1249 = vmul.f32 %v1243, 0.5
  %v1250 = vmul.f32 %v1244, 0.5
  %v1251 = vmul.f32 %v1245, 0.5
  %v1252 = vmul.f32 %v1182, %v1246
  %v1253 = vmul.f32 %v1185, %v1247
  %v1254 = vmul.f32 %v1190, %v1248
  %v1255 = vmul.f32 %v1193, %v1249
  %v1256 = vmul.f32 %v1198, %v1250
  %v1257 = vmul.f32 %v1201, %v1251
  %v1258 = vld [vmem:[%s2] sm:$0xf]
  %v1259 = vld [vmem:[%s2 + $0x4] sm:$0xf]
  %v1260 = vld [vmem:[%s2 + $0x8] sm:$0xf]
  %v1261 = vld [vmem:[%s2 + $0xc] sm:$0xf]
  %v1262 = vld [vmem:[%s2 + $0x10] sm:$0xf]
  %v1263 = vld [vmem:[%s2 + $0x14] sm:$0xf]
  %v1264 = vld [vmem:[%s2 + $0x18] sm:$0xf]
  %v1265 = vld [vmem:[%s2 + $0x1c] sm:$0xf]
  %v1266 = vld [vmem:[%s2 + $0x20] sm:$0xf]
  %v1267 = vld [vmem:[%s2 + $0x24] sm:$0xf]
  %v1268 = vld [vmem:[%s2 + $0x28] sm:$0xf]
  %v1269 = vld [vmem:[%s2 + $0x2c] sm:$0xf]
  %v1270 = vld [vmem:[%s2 + $0x30] sm:$0xf]
  %v1271 = vld [vmem:[%s2 + $0x34] sm:$0xf]
  %v1272 = vld [vmem:[%s2 + $0x38] sm:$0xf]
  %v1273 = vld [vmem:[%s2 + $0x3c] sm:$0xf]
  %v1274 = vpack.c.bf16 %v1253, %v1252
  %v1275 = vpack.c.bf16 %v1255, %v1254
  %v1276 = vpack.c.bf16 %v1257, %v1256
  %v1293 = vunpack.c.l.b16 %v1258
  %v1294 = vunpack.c.l.b16 %v1259
  %v1295 = vunpack.c.l.b16 %v1260
  %v1296 = vunpack.c.l.b16 %v1261
  %v1297 = vunpack.c.l.b16 %v1262
  %v1298 = vunpack.c.l.b16 %v1263
  %v1299 = vunpack.c.l.b16 %v1264
  %v1300 = vunpack.c.l.b16 %v1265
  %v1301 = vunpack.c.l.b16 %v1266
  %v1302 = vunpack.c.l.b16 %v1267
  %v1303 = vunpack.c.l.b16 %v1268
  %v1304 = vunpack.c.l.b16 %v1269
  %v1305 = vunpack.c.l.b16 %v1270
  %v1306 = vunpack.c.l.b16 %v1271
  %v1307 = vunpack.c.l.b16 %v1272
  %v1308 = vunpack.c.l.b16 %v1273
  %v1309 = vpack.c.b16 %v1294, %v1293
  %v1310 = vpack.c.b16 %v1296, %v1295
  %v1311 = vpack.c.b16 %v1298, %v1297
  %v1312 = vpack.c.b16 %v1300, %v1299
  %v1313 = vpack.c.b16 %v1302, %v1301
  %v1314 = vpack.c.b16 %v1304, %v1303
  %v1315 = vpack.c.b16 %v1306, %v1305
  %v1316 = vpack.c.b16 %v1308, %v1307
  %1325 = vmatprep.subr.bf16.mxu0 0
  %1326 = vmatpush1.bf16.msra.mxu0 %v1309
  %1327 = vmatprep.subr.bf16.mxu0 0
  %1328 = vmatpush1.bf16.msra.mxu0 %v1310
  %1329 = vmatprep.subr.bf16.mxu0 0
  %1330 = vmatpush1.bf16.msra.mxu0 %v1311
  %1331 = vmatprep.subr.bf16.mxu0 0
  %1332 = vmatpush1.bf16.msra.mxu0 %v1312
  %1333 = vmatprep.subr.bf16.mxu0 0
  %1334 = vmatpush1.bf16.msra.mxu0 %v1313
  %1335 = vmatprep.subr.bf16.mxu0 0
  %1336 = vmatpush1.bf16.msra.mxu0 %v1314
  %1337 = vmatprep.subr.bf16.mxu0 0
  %1338 = vmatpush1.bf16.msra.mxu0 %v1315
  %1339 = vmatprep.subr.bf16.mxu0 0
  %1340 = vmatpush1.bf16.msra.mxu0 %v1316
  %1341 = vmatprep.subr.bf16.mxu0 0
  %1342 = vmatpush1.bf16.msra.mxu0 0
  %1343 = vmatprep.subr.bf16.mxu0 0
  %1344 = vmatpush1.bf16.msra.mxu0 0
  %1345 = vmatprep.subr.bf16.mxu0 0
  %1346 = vmatpush1.bf16.msra.mxu0 0
  %1347 = vmatprep.subr.bf16.mxu0 0
  %1348 = vmatpush1.bf16.msra.mxu0 0
  %1349 = vmatprep.subr.bf16.mxu0 0
  %1350 = vmatpush1.bf16.msra.mxu0 0
  %1351 = vmatprep.subr.bf16.mxu0 0
  %1352 = vmatpush1.bf16.msra.mxu0 0
  %1353 = vmatprep.subr.bf16.mxu0 0
  %1354 = vmatpush1.bf16.msra.mxu0 0
  %1355 = vmatprep.subr.bf16.mxu0 0
  %1356 = vmatpush1.bf16.msra.mxu0 0
  %1357 = vmatprep.mubr.bf16.mxu0 0
  %1358 = vmatmul.mubr.bf16.gmra.mrb[0].mxu0 %v1274
  %v1359 = vpop.f32.mrb[0].mxu0
  %v1360 = vadd.f32 0.0, %v1359
  %v1361 = vpop.f32.mrb[0].mxu0
  %v1362 = vpop.f32.mrb[0].mxu0
  %v1363 = vadd.f32 0.0, %v1362
  %v1364 = vpop.f32.mrb[0].mxu0
  %1365 = vmatprep.mubr.bf16.mxu0 0
  %1366 = vmatmul.mubr.bf16.gmra.mrb[0].mxu0 %v1275
  %v1367 = vpop.f32.mrb[0].mxu0
  %v1368 = vadd.f32 0.0, %v1367
  %v1369 = vpop.f32.mrb[0].mxu0
  %v1370 = vpop.f32.mrb[0].mxu0
  %v1371 = vadd.f32 0.0, %v1370
  %v1372 = vpop.f32.mrb[0].mxu0
  %1373 = vmatprep.mubr.bf16.mxu0 0
  %1374 = vmatmul.mubr.bf16.gmra.mrb[0].mxu0 %v1276
  %v1375 = vpop.f32.mrb[0].mxu0
  %v1376 = vadd.f32 0.0, %v1375
  %v1377 = vpop.f32.mrb[0].mxu0
  %v1378 = vpop.f32.mrb[0].mxu0
  %v1379 = vadd.f32 0.0, %v1378
  %v1380 = vpop.f32.mrb[0].mxu0
  %1381 = vdwg.mxu0
  %v1382 = vadd.f32 %v1005, %v1360
  %v1383 = vadd.f32 %v1006, %v1363
  %v1384 = vadd.f32 %v1007, %v1368
  %v1385 = vadd.f32 %v1008, %v1371
  %v1386 = vadd.f32 %v1009, %v1376
  %v1387 = vadd.f32 %v1010, %v1379
  %v1388 = vrot.slane %v60, 2
  %v1389 = vlaneseq
  %v1390 = vshrl.u32 %v1389, 7
  %v1391 = vsub.s32 0, %v1390
  %v1392 = vrot.slane %v1388, %v1391
  %v1394 = vadd.f32 %v1382, %v1392
  %v1395 = vadd.f32 %v1383, %v1392
  %v1396 = vadd.f32 %v1384, %v1392
  %v1397 = vadd.f32 %v1385, %v1392
  %v1398 = vadd.f32 %v1386, %v1392
  %v1399 = vadd.f32 %v1387, %v1392
  %s1400 = scalar_lea.vmem %s1, 32
  %v1401 = vld [vmem:[%s1400] sm:$0xff]
  %v1402 = vld [vmem:[%s1400 + $0x8] sm:$0xff]
  %v1403 = vld [vmem:[%s1400 + $0x10] sm:$0xff]
  %v1404 = vld [vmem:[%s1400 + $0x18] sm:$0xff]
  %s1405 = scalar_lea.vmem %s3, 1
  %v1406 = vld [vmem:[%s1405] ss:$4 sm:$0x7]
  %s1407 = scalar_lea.vmem %s4, 4
  %v1408 = vld [vmem:[%s1407] sm:$0xf]
  %v1409 = vsel %vm62, %v1394, 0.0
  %1410 = vadd.xlane.f32.xlu0 %v1409
  %v1411 = vpop.xlane.xlu0 %1410
  %v1412 = vsel %vm62, %v1395, 0.0
  %1413 = vadd.xlane.f32.xlu0 %v1412
  %v1414 = vpop.xlane.xlu0 %1413
  %v1415 = vsel %vm62, %v1396, 0.0
  %1416 = vadd.xlane.f32.xlu0 %v1415
  %v1417 = vpop.xlane.xlu0 %1416
  %v1418 = vsel %vm62, %v1397, 0.0
  %1419 = vadd.xlane.f32.xlu0 %v1418
  %v1420 = vpop.xlane.xlu0 %1419
  %v1421 = vsel %vm62, %v1398, 0.0
  %1422 = vadd.xlane.f32.xlu0 %v1421
  %v1423 = vpop.xlane.xlu0 %1422
  %v1424 = vsel %vm62, %v1399, 0.0
  %1425 = vadd.xlane.f32.xlu0 %v1424
  %v1426 = vpop.xlane.xlu0 %1425
  %v1427 = vmul.f32 %v1411, %v81
  %v1428 = vmul.f32 %v1414, %v81
  %v1429 = vmul.f32 %v1417, %v81
  %v1430 = vmul.f32 %v1420, %v81
  %v1431 = vmul.f32 %v1423, %v81
  %v1432 = vmul.f32 %v1426, %v81
  %v1433 = vmul.f32 %v1394, %v1394
  %v1434 = vmul.f32 %v1395, %v1395
  %v1435 = vmul.f32 %v1396, %v1396
  %v1436 = vmul.f32 %v1397, %v1397
  %v1437 = vmul.f32 %v1398, %v1398
  %v1438 = vmul.f32 %v1399, %v1399
  %v1439 = vsel %vm62, %v1433, 0.0
  %1440 = vadd.xlane.f32.xlu0 %v1439
  %v1441 = vpop.xlane.xlu0 %1440
  %v1442 = vsel %vm62, %v1434, 0.0
  %1443 = vadd.xlane.f32.xlu0 %v1442
  %v1444 = vpop.xlane.xlu0 %1443
  %v1445 = vsel %vm62, %v1435, 0.0
  %1446 = vadd.xlane.f32.xlu0 %v1445
  %v1447 = vpop.xlane.xlu0 %1446
  %v1448 = vsel %vm62, %v1436, 0.0
  %1449 = vadd.xlane.f32.xlu0 %v1448
  %v1450 = vpop.xlane.xlu0 %1449
  %v1451 = vsel %vm62, %v1437, 0.0
  %1452 = vadd.xlane.f32.xlu0 %v1451
  %v1453 = vpop.xlane.xlu0 %1452
  %v1454 = vsel %vm62, %v1438, 0.0
  %1455 = vadd.xlane.f32.xlu0 %v1454
  %v1456 = vpop.xlane.xlu0 %1455
  %v1457 = vmul.f32 %v1441, %v81
  %v1458 = vmul.f32 %v1444, %v81
  %v1459 = vmul.f32 %v1447, %v81
  %v1460 = vmul.f32 %v1450, %v81
  %v1461 = vmul.f32 %v1453, %v81
  %v1462 = vmul.f32 %v1456, %v81
  %v1463 = vmul.f32 %v1427, %v1427
  %v1464 = vmul.f32 %v1428, %v1428
  %v1465 = vmul.f32 %v1429, %v1429
  %v1466 = vmul.f32 %v1430, %v1430
  %v1467 = vmul.f32 %v1431, %v1431
  %v1468 = vmul.f32 %v1432, %v1432
  %v1469 = vsub.f32 %v1457, %v1463
  %v1470 = vsub.f32 %v1458, %v1464
  %v1471 = vsub.f32 %v1459, %v1465
  %v1472 = vsub.f32 %v1460, %v1466
  %v1473 = vsub.f32 %v1461, %v1467
  %v1474 = vsub.f32 %v1462, %v1468
  %v1475 = vsub.f32 %v1394, %v1427
  %v1476 = vsub.f32 %v1395, %v1428
  %v1477 = vsub.f32 %v1396, %v1429
  %v1478 = vsub.f32 %v1397, %v1430
  %v1479 = vsub.f32 %v1398, %v1431
  %v1480 = vsub.f32 %v1399, %v1432
  %v1481 = vadd.f32 %v1469, 1e-05
  %v1482 = vadd.f32 %v1470, 1e-05
  %v1483 = vadd.f32 %v1471, 1e-05
  %v1484 = vadd.f32 %v1472, 1e-05
  %v1485 = vadd.f32 %v1473, 1e-05
  %v1486 = vadd.f32 %v1474, 1e-05
  %v1487 = vrsqrt.pop %v1481
  %v1488 = vrsqrt.pop %v1482
  %v1489 = vrsqrt.pop %v1483
  %v1490 = vrsqrt.pop %v1484
  %v1491 = vrsqrt.pop %v1485
  %v1492 = vrsqrt.pop %v1486
  %v1493 = vmul.f32 %v1475, %v1487
  %v1494 = vmul.f32 %v1476, %v1488
  %v1495 = vmul.f32 %v1477, %v1489
  %v1496 = vmul.f32 %v1478, %v1490
  %v1497 = vmul.f32 %v1479, %v1491
  %v1498 = vmul.f32 %v1480, %v1492
  %v1499 = vlaneseq
  %v1500 = vshrl.u32 %v1499, 7
  %v1501 = vsub.s32 0, %v1500
  %v1502 = vrot.slane %v1408, %v1501
  %v1503 = vmul.f32 %v1493, %v1502
  %v1504 = vmul.f32 %v1494, %v1502
  %v1505 = vmul.f32 %v1495, %v1502
  %v1506 = vmul.f32 %v1496, %v1502
  %v1507 = vmul.f32 %v1497, %v1502
  %v1508 = vmul.f32 %v1498, %v1502
  %v1509 = vlaneseq
  %v1510 = vshrl.u32 %v1509, 7
  %v1511 = vsub.s32 1, %v1510
  %v1512 = vrot.slane %v1408, %v1511
  %v1513 = vadd.f32 %v1503, %v1512
  %v1514 = vadd.f32 %v1504, %v1512
  %v1515 = vadd.f32 %v1505, %v1512
  %v1516 = vadd.f32 %v1506, %v1512
  %v1517 = vadd.f32 %v1507, %v1512
  %v1518 = vadd.f32 %v1508, %v1512
  %v1519 = vpack.c.bf16 %v1514, %v1513
  %v1520 = vpack.c.bf16 %v1516, %v1515
  %v1521 = vpack.c.bf16 %v1518, %v1517
  %v1523 = vlaneseq
  %v1524 = vshrl.u32 %v1523, 7
  %v1525 = vsub.s32 0, %v1524
  %v1526 = vrot.slane %v1406, %v1525
  %v1532 = vunpack.c.l.b16 %v1401
  %v1533 = vunpack.c.l.b16 %v1402
  %v1534 = vunpack.c.l.b16 %v1403
  %v1535 = vunpack.c.l.b16 %v1404
  %v1536 = vpack.c.b16 %v1533, %v1532
  %v1537 = vpack.c.b16 %v1535, %v1534
  %v1541 = vsel %vm62, %v1519, 0
  %v1544 = vsel %vm62, %v1520, 0
  %v1547 = vsel %vm62, %v1521, 0
  %1549 = vmatprep.subr.bf16.mxu0 0
  %1550 = vmatpush1.bf16.msra.mxu0 %v1536
  %1551 = vmatprep.subr.bf16.mxu0 0
  %1552 = vmatpush1.bf16.msra.mxu0 %v1537
  %1553 = vmatprep.subr.bf16.mxu0 0
  %1554 = vmatpush1.bf16.msra.mxu0 0
  %1555 = vmatprep.subr.bf16.mxu0 0
  %1556 = vmatpush1.bf16.msra.mxu0 0
  %1557 = vmatprep.subr.bf16.mxu0 0
  %1558 = vmatpush1.bf16.msra.mxu0 0
  %1559 = vmatprep.subr.bf16.mxu0 0
  %1560 = vmatpush1.bf16.msra.mxu0 0
  %1561 = vmatprep.subr.bf16.mxu0 0
  %1562 = vmatpush1.bf16.msra.mxu0 0
  %1563 = vmatprep.subr.bf16.mxu0 0
  %1564 = vmatpush1.bf16.msra.mxu0 0
  %1565 = vmatprep.subr.bf16.mxu0 0
  %1566 = vmatpush1.bf16.msra.mxu0 0
  %1567 = vmatprep.subr.bf16.mxu0 0
  %1568 = vmatpush1.bf16.msra.mxu0 0
  %1569 = vmatprep.subr.bf16.mxu0 0
  %1570 = vmatpush1.bf16.msra.mxu0 0
  %1571 = vmatprep.subr.bf16.mxu0 0
  %1572 = vmatpush1.bf16.msra.mxu0 0
  %1573 = vmatprep.subr.bf16.mxu0 0
  %1574 = vmatpush1.bf16.msra.mxu0 0
  %1575 = vmatprep.subr.bf16.mxu0 0
  %1576 = vmatpush1.bf16.msra.mxu0 0
  %1577 = vmatprep.subr.bf16.mxu0 0
  %1578 = vmatpush1.bf16.msra.mxu0 0
  %1579 = vmatprep.subr.bf16.mxu0 0
  %1580 = vmatpush1.bf16.msra.mxu0 0
  %1581 = vmatprep.mubr.bf16.mxu0 0
  %1582 = vmatmul.mubr.bf16.gmra.mrb[0].mxu0 %v1541
  %v1583 = vpop.f32.mrb[0].mxu0
  %v1584 = vadd.f32 %v1526, %v1583
  %v1585 = vpop.f32.mrb[0].mxu0
  %v1586 = vpop.f32.mrb[0].mxu0
  %v1587 = vadd.f32 %v1526, %v1586
  %v1588 = vpop.f32.mrb[0].mxu0
  %1589 = vmatprep.mubr.bf16.mxu0 0
  %1590 = vmatmul.mubr.bf16.gmra.mrb[0].mxu0 %v1544
  %v1591 = vpop.f32.mrb[0].mxu0
  %v1592 = vadd.f32 %v1526, %v1591
  %v1593 = vpop.f32.mrb[0].mxu0
  %v1594 = vpop.f32.mrb[0].mxu0
  %v1595 = vadd.f32 %v1526, %v1594
  %v1596 = vpop.f32.mrb[0].mxu0
  %1597 = vmatprep.mubr.bf16.mxu0 0
  %1598 = vmatmul.mubr.bf16.gmra.mrb[0].mxu0 %v1547
  %v1599 = vpop.f32.mrb[0].mxu0
  %v1600 = vadd.f32 %v1526, %v1599
  %v1601 = vpop.f32.mrb[0].mxu0
  %v1602 = vpop.f32.mrb[0].mxu0
  %v1603 = vadd.f32 %v1526, %v1602
  %v1604 = vpop.f32.mrb[0].mxu0
  %1605 = vdwg.mxu0
  %v1606 = vpack.c.bf16 %v1587, %v1584
  %v1607 = vpack.c.bf16 %v1592, %v1592
  %v1608 = vmul.f32 %v1584, %v264
  %v1609 = vmul.f32 %v1587, %v264
  %v1610 = vmul.f32 %v1592, %v264
  %v1611 = vmul.f32 %v1584, %v266
  %v1612 = vmul.f32 %v1587, %v266
  %v1613 = vmul.f32 %v1592, %v266
  %v1614 = vmul.f32 %v1584, %v268
  %v1615 = vmul.f32 %v1587, %v268
  %v1616 = vmul.f32 %v1592, %v268
  %v1617 = vmul.f32 %v1584, %v270
  %v1618 = vmul.f32 %v1587, %v270
  %v1619 = vmul.f32 %v1592, %v270
  %v1620 = vpack.c.bf16 %v1609, %v1608
  %v1621 = vpack.c.bf16 %v1611, %v1610
  %v1622 = vpack.c.bf16 %v1613, %v1612
  %v1623 = vpack.c.bf16 %v1615, %v1614
  %v1624 = vpack.c.bf16 %v1617, %v1616
  %v1625 = vpack.c.bf16 %v1619, %v1618
  %v1626 = vmul.f32 %v1584, %v294
  %v1627 = vmul.f32 %v1587, %v294
  %v1628 = vmul.f32 %v1592, %v294
  %v1629 = vmul.f32 %v1584, %v296
  %v1630 = vmul.f32 %v1587, %v296
  %v1631 = vmul.f32 %v1592, %v296
  %v1632 = vmul.f32 %v1584, %v298
  %v1633 = vmul.f32 %v1587, %v298
  %v1634 = vmul.f32 %v1592, %v298
  %v1635 = vmul.f32 %v1584, %v300
  %v1636 = vmul.f32 %v1587, %v300
  %v1637 = vmul.f32 %v1592, %v300
  %v1638 = vpack.c.bf16 %v1627, %v1626
  %v1639 = vpack.c.bf16 %v1629, %v1628
  %v1640 = vpack.c.bf16 %v1631, %v1630
  %v1641 = vpack.c.bf16 %v1633, %v1632
  %v1642 = vpack.c.bf16 %v1635, %v1634
  %v1643 = vpack.c.bf16 %v1637, %v1636
  %1650 = vrot.lane.b32.xlu0 %v1620, 96
  %v1651 = vpop.permute.xlu0 %1650
  %1652 = vrot.lane.b32.xlu0 %v1621, 96
  %v1653 = vpop.permute.xlu0 %1652
  %1654 = vrot.lane.b32.xlu0 %v1622, 96
  %v1655 = vpop.permute.xlu0 %1654
  %1656 = vrot.lane.b32.xlu0 %v1623, 96
  %v1657 = vpop.permute.xlu0 %1656
  %1658 = vrot.lane.b32.xlu0 %v1624, 96
  %v1659 = vpop.permute.xlu0 %1658
  %1660 = vrot.lane.b32.xlu0 %v1625, 96
  %v1661 = vpop.permute.xlu0 %1660
  %v1663 = vsel %vm62, %v1606, 0
  %v1666 = vsel %vm62, %v1607, 0
  %v1669 = vsel %vm62, %v1651, 0
  %v1672 = vsel %vm62, %v1653, 0
  %v1675 = vsel %vm62, %v1655, 0
  %v1678 = vsel %vm62, %v1657, 0
  %v1681 = vsel %vm62, %v1659, 0
  %v1684 = vsel %vm62, %v1661, 0
  %1686 = vmatprep.subr.bf16.mxu0 0
  %1687 = vmatpush1.bf16.xpose.msra.mxu0 %v1669
  %1688 = vmatprep.subr.bf16.mxu0 0
  %1689 = vmatpush1.bf16.xpose.msra.mxu0 %v1672
  %1690 = vmatprep.subr.bf16.mxu0 0
  %1691 = vmatpush1.bf16.xpose.msra.mxu0 %v1675
  %1692 = vmatprep.subr.bf16.mxu0 0
  %1693 = vmatpush1.bf16.xpose.msra.mxu0 %v1678
  %1694 = vmatprep.subr.bf16.mxu0 0
  %1695 = vmatpush1.bf16.xpose.msra.mxu0 %v1681
  %1696 = vmatprep.subr.bf16.mxu0 0
  %1697 = vmatpush1.bf16.xpose.msra.mxu0 %v1684
  %1698 = vmatprep.subr.bf16.mxu0 0
  %1699 = vmatpush1.bf16.xpose.msra.mxu0 0
  %1700 = vmatprep.subr.bf16.mxu0 0
  %1701 = vmatpush1.bf16.xpose.msra.mxu0 0
  %1702 = vmatprep.subr.bf16.mxu0 0
  %1703 = vmatpush1.bf16.xpose.msra.mxu0 0
  %1704 = vmatprep.subr.bf16.mxu0 0
  %1705 = vmatpush1.bf16.xpose.msra.mxu0 0
  %1706 = vmatprep.subr.bf16.mxu0 0
  %1707 = vmatpush1.bf16.xpose.msra.mxu0 0
  %1708 = vmatprep.subr.bf16.mxu0 0
  %1709 = vmatpush1.bf16.xpose.msra.mxu0 0
  %1710 = vmatprep.subr.bf16.mxu0 0
  %1711 = vmatpush1.bf16.xpose.msra.mxu0 0
  %1712 = vmatprep.subr.bf16.mxu0 0
  %1713 = vmatpush1.bf16.xpose.msra.mxu0 0
  %1714 = vmatprep.subr.bf16.mxu0 0
  %1715 = vmatpush1.bf16.xpose.msra.mxu0 0
  %1716 = vmatprep.subr.bf16.mxu0 0
  %1717 = vmatpush1.bf16.xpose.msra.mxu0 0
  %1718 = vmatprep.mubr.bf16.mxu0 0
  %1719 = vmatmul.mubr.bf16.gmra.mrb[0].mxu0 %v1663
  %v1720 = vpop.f32.mrb[0].mxu0
  %v1721 = vadd.f32 0.0, %v1720
  %v1722 = vpop.f32.mrb[0].mxu0
  %v1723 = vpop.f32.mrb[0].mxu0
  %v1724 = vadd.f32 0.0, %v1723
  %v1725 = vpop.f32.mrb[0].mxu0
  %1726 = vmatprep.mubr.bf16.mxu0 0
  %1727 = vmatmul.mubr.bf16.gmra.mrb[0].mxu0 %v1666
  %v1728 = vpop.f32.mrb[0].mxu0
  %v1729 = vadd.f32 0.0, %v1728
  %v1730 = vpop.f32.mrb[0].mxu0
  %v1731 = vpop.f32.mrb[0].mxu0
  %v1732 = vpop.f32.mrb[0].mxu0
  %1733 = vdwg.mxu0
  %v1734 = vsel %vm413, %v1721, -inf
  %1735 = vmax.xlane.f32.xlu0 %v1734
  %v1736 = vpop.xlane.xlu0 %1735
  %v1737 = vsel %vm413, %v1724, -inf
  %1738 = vmax.xlane.f32.xlu0 %v1737
  %v1739 = vpop.xlane.xlu0 %1738
  %v1740 = vsel %vm413, %v1729, -inf
  %1741 = vmax.xlane.f32.xlu0 %v1740
  %v1742 = vpop.xlane.xlu0 %1741
  %v1743 = vsub.f32 %v1721, %v1736
  %v1744 = vsub.f32 %v1724, %v1739
  %v1745 = vsub.f32 %v1729, %v1742
  %v1746 = vmul.f32 %v1743, 1.442695
  %v1747 = vpow.pop %v1746
  %v1748 = vmul.f32 %v1744, 1.442695
  %v1749 = vpow.pop %v1748
  %v1750 = vmul.f32 %v1745, 1.442695
  %v1751 = vpow.pop %v1750
  %v1752 = vsel %vm432, %v1747, 0.0
  %1753 = vadd.xlane.f32.xlu0 %v1752
  %v1754 = vpop.xlane.xlu0 %1753
  %v1755 = vsel %vm432, %v1749, 0.0
  %1756 = vadd.xlane.f32.xlu0 %v1755
  %v1757 = vpop.xlane.xlu0 %1756
  %v1758 = vsel %vm432, %v1751, 0.0
  %1759 = vadd.xlane.f32.xlu0 %v1758
  %v1760 = vpop.xlane.xlu0 %1759
  %v1761 = vrcp.pop %v1754
  %v1762 = vrcp.pop %v1757
  %v1763 = vrcp.pop %v1760
  %1767 = vrot.lane.b32.xlu0 %v1747, 104
  %v1768 = vpop.permute.xlu0 %1767
  %1769 = vrot.lane.b32.xlu0 %v1749, 104
  %v1770 = vpop.permute.xlu0 %1769
  %1771 = vrot.lane.b32.xlu0 %v1751, 104
  %v1772 = vpop.permute.xlu0 %1771
  %v1776 = vsel %vm432, %v1768, 0.0
  %1777 = vadd.xlane.f32.xlu0 %v1776
  %v1778 = vpop.xlane.xlu0 %1777
  %v1779 = vsel %vm432, %v1770, 0.0
  %1780 = vadd.xlane.f32.xlu0 %v1779
  %v1781 = vpop.xlane.xlu0 %1780
  %v1782 = vsel %vm432, %v1772, 0.0
  %1783 = vadd.xlane.f32.xlu0 %v1782
  %v1784 = vpop.xlane.xlu0 %1783
  %v1785 = vrcp.pop %v1778
  %v1786 = vrcp.pop %v1781
  %v1787 = vrcp.pop %v1784
  %1788 = vrot.lane.b32.xlu0 %v1747, 80
  %v1789 = vpop.permute.xlu0 %1788
  %1790 = vrot.lane.b32.xlu0 %v1749, 80
  %v1791 = vpop.permute.xlu0 %1790
  %1792 = vrot.lane.b32.xlu0 %v1751, 80
  %v1793 = vpop.permute.xlu0 %1792
  %v1797 = vsel %vm432, %v1789, 0.0
  %1798 = vadd.xlane.f32.xlu0 %v1797
  %v1799 = vpop.xlane.xlu0 %1798
  %v1800 = vsel %vm432, %v1791, 0.0
  %1801 = vadd.xlane.f32.xlu0 %v1800
  %v1802 = vpop.xlane.xlu0 %1801
  %v1803 = vsel %vm432, %v1793, 0.0
  %1804 = vadd.xlane.f32.xlu0 %v1803
  %v1805 = vpop.xlane.xlu0 %1804
  %v1806 = vrcp.pop %v1799
  %v1807 = vrcp.pop %v1802
  %v1808 = vrcp.pop %v1805
  %1809 = vrot.lane.b32.xlu0 %v1747, 56
  %v1810 = vpop.permute.xlu0 %1809
  %1811 = vrot.lane.b32.xlu0 %v1749, 56
  %v1812 = vpop.permute.xlu0 %1811
  %1813 = vrot.lane.b32.xlu0 %v1751, 56
  %v1814 = vpop.permute.xlu0 %1813
  %v1818 = vsel %vm432, %v1810, 0.0
  %1819 = vadd.xlane.f32.xlu0 %v1818
  %v1820 = vpop.xlane.xlu0 %1819
  %v1821 = vsel %vm432, %v1812, 0.0
  %1822 = vadd.xlane.f32.xlu0 %v1821
  %v1823 = vpop.xlane.xlu0 %1822
  %v1824 = vsel %vm432, %v1814, 0.0
  %1825 = vadd.xlane.f32.xlu0 %v1824
  %v1826 = vpop.xlane.xlu0 %1825
  %v1827 = vrcp.pop %v1820
  %v1828 = vrcp.pop %v1823
  %v1829 = vrcp.pop %v1826
  %v1830 = vsel %vm432, %v1761, %v1785
  %v1831 = vsel %vm432, %v1762, %v1786
  %v1832 = vsel %vm432, %v1763, %v1787
  %v1833 = vsel %vm514, %v1830, %v1806
  %v1834 = vsel %vm514, %v1831, %v1807
  %v1835 = vsel %vm514, %v1832, %v1808
  %v1836 = vsel %vm518, %v1833, %v1827
  %v1837 = vsel %vm518, %v1834, %v1828
  %v1838 = vsel %vm518, %v1835, %v1829
  %v1839 = vmul.f32 %v1747, %v1836
  %v1840 = vmul.f32 %v1749, %v1837
  %v1841 = vmul.f32 %v1751, %v1838
  %v1842 = vpack.c.bf16 %v1840, %v1839
  %v1843 = vpack.c.bf16 %v1841, %v1841
  %1850 = vrot.lane.b32.xlu0 %v1638, 64
  %v1851 = vpop.permute.xlu0 %1850
  %1852 = vrot.lane.b32.xlu0 %v1639, 64
  %v1853 = vpop.permute.xlu0 %1852
  %1854 = vrot.lane.b32.xlu0 %v1640, 64
  %v1855 = vpop.permute.xlu0 %1854
  %1856 = vrot.lane.b32.xlu0 %v1641, 64
  %v1857 = vpop.permute.xlu0 %1856
  %1858 = vrot.lane.b32.xlu0 %v1642, 64
  %v1859 = vpop.permute.xlu0 %1858
  %1860 = vrot.lane.b32.xlu0 %v1643, 64
  %v1861 = vpop.permute.xlu0 %1860
  %v1869 = vsel %vm413, %v1842, 0
  %v1872 = vsel %vm413, %v1843, 0
  %1874 = vmatprep.subr.bf16.mxu0 0
  %1875 = vmatpush1.bf16.msra.mxu0 %v1851
  %1876 = vmatprep.subr.bf16.mxu0 0
  %1877 = vmatpush1.bf16.msra.mxu0 %v1853
  %1878 = vmatprep.subr.bf16.mxu0 0
  %1879 = vmatpush1.bf16.msra.mxu0 %v1855
  %1880 = vmatprep.subr.bf16.mxu0 0
  %1881 = vmatpush1.bf16.msra.mxu0 %v1857
  %1882 = vmatprep.subr.bf16.mxu0 0
  %1883 = vmatpush1.bf16.msra.mxu0 %v1859
  %1884 = vmatprep.subr.bf16.mxu0 0
  %1885 = vmatpush1.bf16.msra.mxu0 %v1861
  %1886 = vmatprep.subr.bf16.mxu0 0
  %1887 = vmatpush1.bf16.msra.mxu0 0
  %1888 = vmatprep.subr.bf16.mxu0 0
  %1889 = vmatpush1.bf16.msra.mxu0 0
  %1890 = vmatprep.subr.bf16.mxu0 0
  %1891 = vmatpush1.bf16.msra.mxu0 0
  %1892 = vmatprep.subr.bf16.mxu0 0
  %1893 = vmatpush1.bf16.msra.mxu0 0
  %1894 = vmatprep.subr.bf16.mxu0 0
  %1895 = vmatpush1.bf16.msra.mxu0 0
  %1896 = vmatprep.subr.bf16.mxu0 0
  %1897 = vmatpush1.bf16.msra.mxu0 0
  %1898 = vmatprep.subr.bf16.mxu0 0
  %1899 = vmatpush1.bf16.msra.mxu0 0
  %1900 = vmatprep.subr.bf16.mxu0 0
  %1901 = vmatpush1.bf16.msra.mxu0 0
  %1902 = vmatprep.subr.bf16.mxu0 0
  %1903 = vmatpush1.bf16.msra.mxu0 0
  %1904 = vmatprep.subr.bf16.mxu0 0
  %1905 = vmatpush1.bf16.msra.mxu0 0
  %1906 = vmatprep.mubr.bf16.mxu0 0
  %1907 = vmatmul.mubr.bf16.gmra.mrb[0].mxu0 %v1869
  %v1908 = vpop.f32.mrb[0].mxu0
  %v1909 = vadd.f32 0.0, %v1908
  %v1910 = vpop.f32.mrb[0].mxu0
  %v1911 = vpop.f32.mrb[0].mxu0
  %v1912 = vadd.f32 0.0, %v1911
  %v1913 = vpop.f32.mrb[0].mxu0
  %1914 = vmatprep.mubr.bf16.mxu0 0
  %1915 = vmatmul.mubr.bf16.gmra.mrb[0].mxu0 %v1872
  %v1916 = vpop.f32.mrb[0].mxu0
  %v1917 = vadd.f32 0.0, %v1916
  %v1918 = vpop.f32.mrb[0].mxu0
  %v1919 = vpop.f32.mrb[0].mxu0
  %v1920 = vpop.f32.mrb[0].mxu0
  %1921 = vdwg.mxu0
  %v1922 = vpack.c.bf16 %v1600, %v1595
  %v1923 = vpack.c.bf16 %v1603, %v1603
  %v1924 = vmul.f32 %v1595, %v264
  %v1925 = vmul.f32 %v1600, %v264
  %v1926 = vmul.f32 %v1603, %v264
  %v1927 = vmul.f32 %v1595, %v266
  %v1928 = vmul.f32 %v1600, %v266
  %v1929 = vmul.f32 %v1603, %v266
  %v1930 = vmul.f32 %v1595, %v268
  %v1931 = vmul.f32 %v1600, %v268
  %v1932 = vmul.f32 %v1603, %v268
  %v1933 = vmul.f32 %v1595, %v270
  %v1934 = vmul.f32 %v1600, %v270
  %v1935 = vmul.f32 %v1603, %v270
  %v1936 = vpack.c.bf16 %v1925, %v1924
  %v1937 = vpack.c.bf16 %v1927, %v1926
  %v1938 = vpack.c.bf16 %v1929, %v1928
  %v1939 = vpack.c.bf16 %v1931, %v1930
  %v1940 = vpack.c.bf16 %v1933, %v1932
  %v1941 = vpack.c.bf16 %v1935, %v1934
  %v1942 = vmul.f32 %v1595, %v294
  %v1943 = vmul.f32 %v1600, %v294
  %v1944 = vmul.f32 %v1603, %v294
  %v1945 = vmul.f32 %v1595, %v296
  %v1946 = vmul.f32 %v1600, %v296
  %v1947 = vmul.f32 %v1603, %v296
  %v1948 = vmul.f32 %v1595, %v298
  %v1949 = vmul.f32 %v1600, %v298
  %v1950 = vmul.f32 %v1603, %v298
  %v1951 = vmul.f32 %v1595, %v300
  %v1952 = vmul.f32 %v1600, %v300
  %v1953 = vmul.f32 %v1603, %v300
  %v1954 = vpack.c.bf16 %v1943, %v1942
  %v1955 = vpack.c.bf16 %v1945, %v1944
  %v1956 = vpack.c.bf16 %v1947, %v1946
  %v1957 = vpack.c.bf16 %v1949, %v1948
  %v1958 = vpack.c.bf16 %v1951, %v1950
  %v1959 = vpack.c.bf16 %v1953, %v1952
  %1966 = vrot.lane.b32.xlu0 %v1936, 96
  %v1967 = vpop.permute.xlu0 %1966
  %1968 = vrot.lane.b32.xlu0 %v1937, 96
  %v1969 = vpop.permute.xlu0 %1968
  %1970 = vrot.lane.b32.xlu0 %v1938, 96
  %v1971 = vpop.permute.xlu0 %1970
  %1972 = vrot.lane.b32.xlu0 %v1939, 96
  %v1973 = vpop.permute.xlu0 %1972
  %1974 = vrot.lane.b32.xlu0 %v1940, 96
  %v1975 = vpop.permute.xlu0 %1974
  %1976 = vrot.lane.b32.xlu0 %v1941, 96
  %v1977 = vpop.permute.xlu0 %1976
  %v1979 = vsel %vm62, %v1922, 0
  %v1982 = vsel %vm62, %v1923, 0
  %v1985 = vsel %vm62, %v1967, 0
  %v1988 = vsel %vm62, %v1969, 0
  %v1991 = vsel %vm62, %v1971, 0
  %v1994 = vsel %vm62, %v1973, 0
  %v1997 = vsel %vm62, %v1975, 0
  %v2000 = vsel %vm62, %v1977, 0
  %2002 = vmatprep.subr.bf16.mxu0 0
  %2003 = vmatpush1.bf16.xpose.msra.mxu0 %v1985
  %2004 = vmatprep.subr.bf16.mxu0 0
  %2005 = vmatpush1.bf16.xpose.msra.mxu0 %v1988
  %2006 = vmatprep.subr.bf16.mxu0 0
  %2007 = vmatpush1.bf16.xpose.msra.mxu0 %v1991
  %2008 = vmatprep.subr.bf16.mxu0 0
  %2009 = vmatpush1.bf16.xpose.msra.mxu0 %v1994
  %2010 = vmatprep.subr.bf16.mxu0 0
  %2011 = vmatpush1.bf16.xpose.msra.mxu0 %v1997
  %2012 = vmatprep.subr.bf16.mxu0 0
  %2013 = vmatpush1.bf16.xpose.msra.mxu0 %v2000
  %2014 = vmatprep.subr.bf16.mxu0 0
  %2015 = vmatpush1.bf16.xpose.msra.mxu0 0
  %2016 = vmatprep.subr.bf16.mxu0 0
  %2017 = vmatpush1.bf16.xpose.msra.mxu0 0
  %2018 = vmatprep.subr.bf16.mxu0 0
  %2019 = vmatpush1.bf16.xpose.msra.mxu0 0
  %2020 = vmatprep.subr.bf16.mxu0 0
  %2021 = vmatpush1.bf16.xpose.msra.mxu0 0
  %2022 = vmatprep.subr.bf16.mxu0 0
  %2023 = vmatpush1.bf16.xpose.msra.mxu0 0
  %2024 = vmatprep.subr.bf16.mxu0 0
  %2025 = vmatpush1.bf16.xpose.msra.mxu0 0
  %2026 = vmatprep.subr.bf16.mxu0 0
  %2027 = vmatpush1.bf16.xpose.msra.mxu0 0
  %2028 = vmatprep.subr.bf16.mxu0 0
  %2029 = vmatpush1.bf16.xpose.msra.mxu0 0
  %2030 = vmatprep.subr.bf16.mxu0 0
  %2031 = vmatpush1.bf16.xpose.msra.mxu0 0
  %2032 = vmatprep.subr.bf16.mxu0 0
  %2033 = vmatpush1.bf16.xpose.msra.mxu0 0
  %2034 = vmatprep.mubr.bf16.mxu0 0
  %2035 = vmatmul.mubr.bf16.gmra.mrb[0].mxu0 %v1979
  %v2036 = vpop.f32.mrb[0].mxu0
  %v2037 = vadd.f32 0.0, %v2036
  %v2038 = vpop.f32.mrb[0].mxu0
  %v2039 = vpop.f32.mrb[0].mxu0
  %v2040 = vadd.f32 0.0, %v2039
  %v2041 = vpop.f32.mrb[0].mxu0
  %2042 = vmatprep.mubr.bf16.mxu0 0
  %2043 = vmatmul.mubr.bf16.gmra.mrb[0].mxu0 %v1982
  %v2044 = vpop.f32.mrb[0].mxu0
  %v2045 = vadd.f32 0.0, %v2044
  %v2046 = vpop.f32.mrb[0].mxu0
  %v2047 = vpop.f32.mrb[0].mxu0
  %v2048 = vpop.f32.mrb[0].mxu0
  %2049 = vdwg.mxu0
  %v2050 = vsel %vm413, %v2037, -inf
  %2051 = vmax.xlane.f32.xlu0 %v2050
  %v2052 = vpop.xlane.xlu0 %2051
  %v2053 = vsel %vm413, %v2040, -inf
  %2054 = vmax.xlane.f32.xlu0 %v2053
  %v2055 = vpop.xlane.xlu0 %2054
  %v2056 = vsel %vm413, %v2045, -inf
  %2057 = vmax.xlane.f32.xlu0 %v2056
  %v2058 = vpop.xlane.xlu0 %2057
  %v2059 = vsub.f32 %v2037, %v2052
  %v2060 = vsub.f32 %v2040, %v2055
  %v2061 = vsub.f32 %v2045, %v2058
  %v2062 = vmul.f32 %v2059, 1.442695
  %v2063 = vpow.pop %v2062
  %v2064 = vmul.f32 %v2060, 1.442695
  %v2065 = vpow.pop %v2064
  %v2066 = vmul.f32 %v2061, 1.442695
  %v2067 = vpow.pop %v2066
  %v2068 = vsel %vm432, %v2063, 0.0
  %2069 = vadd.xlane.f32.xlu0 %v2068
  %v2070 = vpop.xlane.xlu0 %2069
  %v2071 = vsel %vm432, %v2065, 0.0
  %2072 = vadd.xlane.f32.xlu0 %v2071
  %v2073 = vpop.xlane.xlu0 %2072
  %v2074 = vsel %vm432, %v2067, 0.0
  %2075 = vadd.xlane.f32.xlu0 %v2074
  %v2076 = vpop.xlane.xlu0 %2075
  %v2077 = vrcp.pop %v2070
  %v2078 = vrcp.pop %v2073
  %v2079 = vrcp.pop %v2076
  %2083 = vrot.lane.b32.xlu0 %v2063, 104
  %v2084 = vpop.permute.xlu0 %2083
  %2085 = vrot.lane.b32.xlu0 %v2065, 104
  %v2086 = vpop.permute.xlu0 %2085
  %2087 = vrot.lane.b32.xlu0 %v2067, 104
  %v2088 = vpop.permute.xlu0 %2087
  %v2092 = vsel %vm432, %v2084, 0.0
  %2093 = vadd.xlane.f32.xlu0 %v2092
  %v2094 = vpop.xlane.xlu0 %2093
  %v2095 = vsel %vm432, %v2086, 0.0
  %2096 = vadd.xlane.f32.xlu0 %v2095
  %v2097 = vpop.xlane.xlu0 %2096
  %v2098 = vsel %vm432, %v2088, 0.0
  %2099 = vadd.xlane.f32.xlu0 %v2098
  %v2100 = vpop.xlane.xlu0 %2099
  %v2101 = vrcp.pop %v2094
  %v2102 = vrcp.pop %v2097
  %v2103 = vrcp.pop %v2100
  %2104 = vrot.lane.b32.xlu0 %v2063, 80
  %v2105 = vpop.permute.xlu0 %2104
  %2106 = vrot.lane.b32.xlu0 %v2065, 80
  %v2107 = vpop.permute.xlu0 %2106
  %2108 = vrot.lane.b32.xlu0 %v2067, 80
  %v2109 = vpop.permute.xlu0 %2108
  %v2113 = vsel %vm432, %v2105, 0.0
  %2114 = vadd.xlane.f32.xlu0 %v2113
  %v2115 = vpop.xlane.xlu0 %2114
  %v2116 = vsel %vm432, %v2107, 0.0
  %2117 = vadd.xlane.f32.xlu0 %v2116
  %v2118 = vpop.xlane.xlu0 %2117
  %v2119 = vsel %vm432, %v2109, 0.0
  %2120 = vadd.xlane.f32.xlu0 %v2119
  %v2121 = vpop.xlane.xlu0 %2120
  %v2122 = vrcp.pop %v2115
  %v2123 = vrcp.pop %v2118
  %v2124 = vrcp.pop %v2121
  %2125 = vrot.lane.b32.xlu0 %v2063, 56
  %v2126 = vpop.permute.xlu0 %2125
  %2127 = vrot.lane.b32.xlu0 %v2065, 56
  %v2128 = vpop.permute.xlu0 %2127
  %2129 = vrot.lane.b32.xlu0 %v2067, 56
  %v2130 = vpop.permute.xlu0 %2129
  %v2134 = vsel %vm432, %v2126, 0.0
  %2135 = vadd.xlane.f32.xlu0 %v2134
  %v2136 = vpop.xlane.xlu0 %2135
  %v2137 = vsel %vm432, %v2128, 0.0
  %2138 = vadd.xlane.f32.xlu0 %v2137
  %v2139 = vpop.xlane.xlu0 %2138
  %v2140 = vsel %vm432, %v2130, 0.0
  %2141 = vadd.xlane.f32.xlu0 %v2140
  %v2142 = vpop.xlane.xlu0 %2141
  %v2143 = vrcp.pop %v2136
  %v2144 = vrcp.pop %v2139
  %v2145 = vrcp.pop %v2142
  %v2146 = vsel %vm432, %v2077, %v2101
  %v2147 = vsel %vm432, %v2078, %v2102
  %v2148 = vsel %vm432, %v2079, %v2103
  %v2149 = vsel %vm514, %v2146, %v2122
  %v2150 = vsel %vm514, %v2147, %v2123
  %v2151 = vsel %vm514, %v2148, %v2124
  %v2152 = vsel %vm518, %v2149, %v2143
  %v2153 = vsel %vm518, %v2150, %v2144
  %v2154 = vsel %vm518, %v2151, %v2145
  %v2155 = vmul.f32 %v2063, %v2152
  %v2156 = vmul.f32 %v2065, %v2153
  %v2157 = vmul.f32 %v2067, %v2154
  %v2158 = vpack.c.bf16 %v2156, %v2155
  %v2159 = vpack.c.bf16 %v2157, %v2157
  %2166 = vrot.lane.b32.xlu0 %v1954, 64
  %v2167 = vpop.permute.xlu0 %2166
  %2168 = vrot.lane.b32.xlu0 %v1955, 64
  %v2169 = vpop.permute.xlu0 %2168
  %2170 = vrot.lane.b32.xlu0 %v1956, 64
  %v2171 = vpop.permute.xlu0 %2170
  %2172 = vrot.lane.b32.xlu0 %v1957, 64
  %v2173 = vpop.permute.xlu0 %2172
  %2174 = vrot.lane.b32.xlu0 %v1958, 64
  %v2175 = vpop.permute.xlu0 %2174
  %2176 = vrot.lane.b32.xlu0 %v1959, 64
  %v2177 = vpop.permute.xlu0 %2176
  %v2185 = vsel %vm413, %v2158, 0
  %v2188 = vsel %vm413, %v2159, 0
  %2190 = vmatprep.subr.bf16.mxu0 0
  %2191 = vmatpush1.bf16.msra.mxu0 %v2167
  %2192 = vmatprep.subr.bf16.mxu0 0
  %2193 = vmatpush1.bf16.msra.mxu0 %v2169
  %2194 = vmatprep.subr.bf16.mxu0 0
  %2195 = vmatpush1.bf16.msra.mxu0 %v2171
  %2196 = vmatprep.subr.bf16.mxu0 0
  %2197 = vmatpush1.bf16.msra.mxu0 %v2173
  %2198 = vmatprep.subr.bf16.mxu0 0
  %2199 = vmatpush1.bf16.msra.mxu0 %v2175
  %2200 = vmatprep.subr.bf16.mxu0 0
  %2201 = vmatpush1.bf16.msra.mxu0 %v2177
  %2202 = vmatprep.subr.bf16.mxu0 0
  %2203 = vmatpush1.bf16.msra.mxu0 0
  %2204 = vmatprep.subr.bf16.mxu0 0
  %2205 = vmatpush1.bf16.msra.mxu0 0
  %2206 = vmatprep.subr.bf16.mxu0 0
  %2207 = vmatpush1.bf16.msra.mxu0 0
  %2208 = vmatprep.subr.bf16.mxu0 0
  %2209 = vmatpush1.bf16.msra.mxu0 0
  %2210 = vmatprep.subr.bf16.mxu0 0
  %2211 = vmatpush1.bf16.msra.mxu0 0
  %2212 = vmatprep.subr.bf16.mxu0 0
  %2213 = vmatpush1.bf16.msra.mxu0 0
  %2214 = vmatprep.subr.bf16.mxu0 0
  %2215 = vmatpush1.bf16.msra.mxu0 0
  %2216 = vmatprep.subr.bf16.mxu0 0
  %2217 = vmatpush1.bf16.msra.mxu0 0
  %2218 = vmatprep.subr.bf16.mxu0 0
  %2219 = vmatpush1.bf16.msra.mxu0 0
  %2220 = vmatprep.subr.bf16.mxu0 0
  %2221 = vmatpush1.bf16.msra.mxu0 0
  %2222 = vmatprep.mubr.bf16.mxu0 0
  %2223 = vmatmul.mubr.bf16.gmra.mrb[0].mxu0 %v2185
  %v2224 = vpop.f32.mrb[0].mxu0
  %v2225 = vadd.f32 0.0, %v2224
  %v2226 = vpop.f32.mrb[0].mxu0
  %v2227 = vpop.f32.mrb[0].mxu0
  %v2228 = vadd.f32 0.0, %v2227
  %v2229 = vpop.f32.mrb[0].mxu0
  %2230 = vmatprep.mubr.bf16.mxu0 0
  %2231 = vmatmul.mubr.bf16.gmra.mrb[0].mxu0 %v2188
  %v2232 = vpop.f32.mrb[0].mxu0
  %v2233 = vadd.f32 0.0, %v2232
  %v2234 = vpop.f32.mrb[0].mxu0
  %v2235 = vpop.f32.mrb[0].mxu0
  %v2236 = vpop.f32.mrb[0].mxu0
  %2237 = vdwg.mxu0
  %v2238 = vpack.c.bf16 %v1912, %v1909
  %v2239 = vpack.c.bf16 %v2225, %v1917
  %v2240 = vpack.c.bf16 %v2233, %v2228
  %2241 = vrot.lane.b32.xlu0 %v1536, 32
  %v2242 = vpop.permute.xlu0 %2241
  %2243 = vrot.lane.b32.xlu0 %v1537, 32
  %v2244 = vpop.permute.xlu0 %2243
  %v2248 = vsel %vm62, %v2238, 0
  %v2251 = vsel %vm62, %v2239, 0
  %v2254 = vsel %vm62, %v2240, 0
  %2256 = vmatprep.subr.bf16.mxu0 0
  %2257 = vmatpush1.bf16.msra.mxu0 %v2242
  %2258 = vmatprep.subr.bf16.mxu0 0
  %2259 = vmatpush1.bf16.msra.mxu0 %v2244
  %2260 = vmatprep.subr.bf16.mxu0 0
  %2261 = vmatpush1.bf16.msra.mxu0 0
  %2262 = vmatprep.subr.bf16.mxu0 0
  %2263 = vmatpush1.bf16.msra.mxu0 0
  %2264 = vmatprep.subr.bf16.mxu0 0
  %2265 = vmatpush1.bf16.msra.mxu0 0
  %2266 = vmatprep.subr.bf16.mxu0 0
  %2267 = vmatpush1.bf16.msra.mxu0 0
  %2268 = vmatprep.subr.bf16.mxu0 0
  %2269 = vmatpush1.bf16.msra.mxu0 0
  %2270 = vmatprep.subr.bf16.mxu0 0
  %2271 = vmatpush1.bf16.msra.mxu0 0
  %2272 = vmatprep.subr.bf16.mxu0 0
  %2273 = vmatpush1.bf16.msra.mxu0 0
  %2274 = vmatprep.subr.bf16.mxu0 0
  %2275 = vmatpush1.bf16.msra.mxu0 0
  %2276 = vmatprep.subr.bf16.mxu0 0
  %2277 = vmatpush1.bf16.msra.mxu0 0
  %2278 = vmatprep.subr.bf16.mxu0 0
  %2279 = vmatpush1.bf16.msra.mxu0 0
  %2280 = vmatprep.subr.bf16.mxu0 0
  %2281 = vmatpush1.bf16.msra.mxu0 0
  %2282 = vmatprep.subr.bf16.mxu0 0
  %2283 = vmatpush1.bf16.msra.mxu0 0
  %2284 = vmatprep.subr.bf16.mxu0 0
  %2285 = vmatpush1.bf16.msra.mxu0 0
  %2286 = vmatprep.subr.bf16.mxu0 0
  %2287 = vmatpush1.bf16.msra.mxu0 0
  %2288 = vmatprep.mubr.bf16.mxu0 0
  %2289 = vmatmul.mubr.bf16.gmra.mrb[0].mxu0 %v2248
  %v2290 = vpop.f32.mrb[0].mxu0
  %v2291 = vadd.f32 0.0, %v2290
  %v2292 = vpop.f32.mrb[0].mxu0
  %v2293 = vpop.f32.mrb[0].mxu0
  %v2294 = vadd.f32 0.0, %v2293
  %v2295 = vpop.f32.mrb[0].mxu0
  %2296 = vmatprep.mubr.bf16.mxu0 0
  %2297 = vmatmul.mubr.bf16.gmra.mrb[0].mxu0 %v2251
  %v2298 = vpop.f32.mrb[0].mxu0
  %v2299 = vadd.f32 0.0, %v2298
  %v2300 = vpop.f32.mrb[0].mxu0
  %v2301 = vpop.f32.mrb[0].mxu0
  %v2302 = vadd.f32 0.0, %v2301
  %v2303 = vpop.f32.mrb[0].mxu0
  %2304 = vmatprep.mubr.bf16.mxu0 0
  %2305 = vmatmul.mubr.bf16.gmra.mrb[0].mxu0 %v2254
  %v2306 = vpop.f32.mrb[0].mxu0
  %v2307 = vadd.f32 0.0, %v2306
  %v2308 = vpop.f32.mrb[0].mxu0
  %v2309 = vpop.f32.mrb[0].mxu0
  %v2310 = vadd.f32 0.0, %v2309
  %v2311 = vpop.f32.mrb[0].mxu0
  %2312 = vdwg.mxu0
  %v2313 = vadd.f32 %v1394, %v2291
  %v2314 = vadd.f32 %v1395, %v2294
  %v2315 = vadd.f32 %v1396, %v2299
  %v2316 = vadd.f32 %v1397, %v2302
  %v2317 = vadd.f32 %v1398, %v2307
  %v2318 = vadd.f32 %v1399, %v2310
  %2319 = vrot.lane.b32.xlu0 %v1526, 32
  %v2320 = vpop.permute.xlu0 %2319
  %v2322 = vadd.f32 %v2313, %v2320
  %v2323 = vadd.f32 %v2314, %v2320
  %v2324 = vadd.f32 %v2315, %v2320
  %v2325 = vadd.f32 %v2316, %v2320
  %v2326 = vadd.f32 %v2317, %v2320
  %v2327 = vadd.f32 %v2318, %v2320
  %v2328 = vsel %vm62, %v2322, 0.0
  %2329 = vadd.xlane.f32.xlu0 %v2328
  %v2330 = vpop.xlane.xlu0 %2329
  %v2331 = vsel %vm62, %v2323, 0.0
  %2332 = vadd.xlane.f32.xlu0 %v2331
  %v2333 = vpop.xlane.xlu0 %2332
  %v2334 = vsel %vm62, %v2324, 0.0
  %2335 = vadd.xlane.f32.xlu0 %v2334
  %v2336 = vpop.xlane.xlu0 %2335
  %v2337 = vsel %vm62, %v2325, 0.0
  %2338 = vadd.xlane.f32.xlu0 %v2337
  %v2339 = vpop.xlane.xlu0 %2338
  %v2340 = vsel %vm62, %v2326, 0.0
  %2341 = vadd.xlane.f32.xlu0 %v2340
  %v2342 = vpop.xlane.xlu0 %2341
  %v2343 = vsel %vm62, %v2327, 0.0
  %2344 = vadd.xlane.f32.xlu0 %v2343
  %v2345 = vpop.xlane.xlu0 %2344
  %v2346 = vmul.f32 %v2330, %v81
  %v2347 = vmul.f32 %v2333, %v81
  %v2348 = vmul.f32 %v2336, %v81
  %v2349 = vmul.f32 %v2339, %v81
  %v2350 = vmul.f32 %v2342, %v81
  %v2351 = vmul.f32 %v2345, %v81
  %v2352 = vmul.f32 %v2322, %v2322
  %v2353 = vmul.f32 %v2323, %v2323
  %v2354 = vmul.f32 %v2324, %v2324
  %v2355 = vmul.f32 %v2325, %v2325
  %v2356 = vmul.f32 %v2326, %v2326
  %v2357 = vmul.f32 %v2327, %v2327
  %v2358 = vsel %vm62, %v2352, 0.0
  %2359 = vadd.xlane.f32.xlu0 %v2358
  %v2360 = vpop.xlane.xlu0 %2359
  %v2361 = vsel %vm62, %v2353, 0.0
  %2362 = vadd.xlane.f32.xlu0 %v2361
  %v2363 = vpop.xlane.xlu0 %2362
  %v2364 = vsel %vm62, %v2354, 0.0
  %2365 = vadd.xlane.f32.xlu0 %v2364
  %v2366 = vpop.xlane.xlu0 %2365
  %v2367 = vsel %vm62, %v2355, 0.0
  %2368 = vadd.xlane.f32.xlu0 %v2367
  %v2369 = vpop.xlane.xlu0 %2368
  %v2370 = vsel %vm62, %v2356, 0.0
  %2371 = vadd.xlane.f32.xlu0 %v2370
  %v2372 = vpop.xlane.xlu0 %2371
  %v2373 = vsel %vm62, %v2357, 0.0
  %2374 = vadd.xlane.f32.xlu0 %v2373
  %v2375 = vpop.xlane.xlu0 %2374
  %v2376 = vmul.f32 %v2360, %v81
  %v2377 = vmul.f32 %v2363, %v81
  %v2378 = vmul.f32 %v2366, %v81
  %v2379 = vmul.f32 %v2369, %v81
  %v2380 = vmul.f32 %v2372, %v81
  %v2381 = vmul.f32 %v2375, %v81
  %v2382 = vmul.f32 %v2346, %v2346
  %v2383 = vmul.f32 %v2347, %v2347
  %v2384 = vmul.f32 %v2348, %v2348
  %v2385 = vmul.f32 %v2349, %v2349
  %v2386 = vmul.f32 %v2350, %v2350
  %v2387 = vmul.f32 %v2351, %v2351
  %v2388 = vsub.f32 %v2376, %v2382
  %v2389 = vsub.f32 %v2377, %v2383
  %v2390 = vsub.f32 %v2378, %v2384
  %v2391 = vsub.f32 %v2379, %v2385
  %v2392 = vsub.f32 %v2380, %v2386
  %v2393 = vsub.f32 %v2381, %v2387
  %v2394 = vsub.f32 %v2322, %v2346
  %v2395 = vsub.f32 %v2323, %v2347
  %v2396 = vsub.f32 %v2324, %v2348
  %v2397 = vsub.f32 %v2325, %v2349
  %v2398 = vsub.f32 %v2326, %v2350
  %v2399 = vsub.f32 %v2327, %v2351
  %v2400 = vadd.f32 %v2388, 1e-05
  %v2401 = vadd.f32 %v2389, 1e-05
  %v2402 = vadd.f32 %v2390, 1e-05
  %v2403 = vadd.f32 %v2391, 1e-05
  %v2404 = vadd.f32 %v2392, 1e-05
  %v2405 = vadd.f32 %v2393, 1e-05
  %v2406 = vrsqrt.pop %v2400
  %v2407 = vrsqrt.pop %v2401
  %v2408 = vrsqrt.pop %v2402
  %v2409 = vrsqrt.pop %v2403
  %v2410 = vrsqrt.pop %v2404
  %v2411 = vrsqrt.pop %v2405
  %v2412 = vmul.f32 %v2394, %v2406
  %v2413 = vmul.f32 %v2395, %v2407
  %v2414 = vmul.f32 %v2396, %v2408
  %v2415 = vmul.f32 %v2397, %v2409
  %v2416 = vmul.f32 %v2398, %v2410
  %v2417 = vmul.f32 %v2399, %v2411
  %v2418 = vlaneseq
  %v2419 = vshrl.u32 %v2418, 7
  %v2420 = vsub.s32 2, %v2419
  %v2421 = vrot.slane %v1408, %v2420
  %v2422 = vmul.f32 %v2412, %v2421
  %v2423 = vmul.f32 %v2413, %v2421
  %v2424 = vmul.f32 %v2414, %v2421
  %v2425 = vmul.f32 %v2415, %v2421
  %v2426 = vmul.f32 %v2416, %v2421
  %v2427 = vmul.f32 %v2417, %v2421
  %v2428 = vlaneseq
  %v2429 = vshrl.u32 %v2428, 7
  %v2430 = vsub.s32 3, %v2429
  %v2431 = vrot.slane %v1408, %v2430
  %v2432 = vadd.f32 %v2422, %v2431
  %v2433 = vadd.f32 %v2423, %v2431
  %v2434 = vadd.f32 %v2424, %v2431
  %v2435 = vadd.f32 %v2425, %v2431
  %v2436 = vadd.f32 %v2426, %v2431
  %v2437 = vadd.f32 %v2427, %v2431
  %v2438 = vpack.c.bf16 %v2433, %v2432
  %v2439 = vpack.c.bf16 %v2435, %v2434
  %v2440 = vpack.c.bf16 %v2437, %v2436
  %v2441 = vrot.slane %v1406, 1
  %v2442 = vlaneseq
  %v2443 = vshrl.u32 %v2442, 7
  %v2444 = vsub.s32 0, %v2443
  %v2445 = vrot.slane %v2441, %v2444
  %v2447 = vunpack.c.h.b16 %v1401
  %v2448 = vunpack.c.h.b16 %v1402
  %v2449 = vunpack.c.h.b16 %v1403
  %v2450 = vunpack.c.h.b16 %v1404
  %v2451 = vpack.c.b16 %v2448, %v2447
  %v2452 = vpack.c.b16 %v2450, %v2449
  %v2456 = vsel %vm62, %v2438, 0
  %v2459 = vsel %vm62, %v2439, 0
  %v2462 = vsel %vm62, %v2440, 0
  %2464 = vmatprep.subr.bf16.mxu0 0
  %2465 = vmatpush1.bf16.msra.mxu0 %v2451
  %2466 = vmatprep.subr.bf16.mxu0 0
  %2467 = vmatpush1.bf16.msra.mxu0 %v2452
  %2468 = vmatprep.subr.bf16.mxu0 0
  %2469 = vmatpush1.bf16.msra.mxu0 0
  %2470 = vmatprep.subr.bf16.mxu0 0
  %2471 = vmatpush1.bf16.msra.mxu0 0
  %2472 = vmatprep.subr.bf16.mxu0 0
  %2473 = vmatpush1.bf16.msra.mxu0 0
  %2474 = vmatprep.subr.bf16.mxu0 0
  %2475 = vmatpush1.bf16.msra.mxu0 0
  %2476 = vmatprep.subr.bf16.mxu0 0
  %2477 = vmatpush1.bf16.msra.mxu0 0
  %2478 = vmatprep.subr.bf16.mxu0 0
  %2479 = vmatpush1.bf16.msra.mxu0 0
  %2480 = vmatprep.subr.bf16.mxu0 0
  %2481 = vmatpush1.bf16.msra.mxu0 0
  %2482 = vmatprep.subr.bf16.mxu0 0
  %2483 = vmatpush1.bf16.msra.mxu0 0
  %2484 = vmatprep.subr.bf16.mxu0 0
  %2485 = vmatpush1.bf16.msra.mxu0 0
  %2486 = vmatprep.subr.bf16.mxu0 0
  %2487 = vmatpush1.bf16.msra.mxu0 0
  %2488 = vmatprep.subr.bf16.mxu0 0
  %2489 = vmatpush1.bf16.msra.mxu0 0
  %2490 = vmatprep.subr.bf16.mxu0 0
  %2491 = vmatpush1.bf16.msra.mxu0 0
  %2492 = vmatprep.subr.bf16.mxu0 0
  %2493 = vmatpush1.bf16.msra.mxu0 0
  %2494 = vmatprep.subr.bf16.mxu0 0
  %2495 = vmatpush1.bf16.msra.mxu0 0
  %2496 = vmatprep.mubr.bf16.mxu0 0
  %2497 = vmatmul.mubr.bf16.gmra.mrb[0].mxu0 %v2456
  %v2498 = vpop.f32.mrb[0].mxu0
  %v2499 = vadd.f32 %v2445, %v2498
  %v2500 = vpop.f32.mrb[0].mxu0
  %v2501 = vpop.f32.mrb[0].mxu0
  %v2502 = vadd.f32 %v2445, %v2501
  %v2503 = vpop.f32.mrb[0].mxu0
  %2504 = vmatprep.mubr.bf16.mxu0 0
  %2505 = vmatmul.mubr.bf16.gmra.mrb[0].mxu0 %v2459
  %v2506 = vpop.f32.mrb[0].mxu0
  %v2507 = vadd.f32 %v2445, %v2506
  %v2508 = vpop.f32.mrb[0].mxu0
  %v2509 = vpop.f32.mrb[0].mxu0
  %v2510 = vadd.f32 %v2445, %v2509
  %v2511 = vpop.f32.mrb[0].mxu0
  %2512 = vmatprep.mubr.bf16.mxu0 0
  %2513 = vmatmul.mubr.bf16.gmra.mrb[0].mxu0 %v2462
  %v2514 = vpop.f32.mrb[0].mxu0
  %v2515 = vadd.f32 %v2445, %v2514
  %v2516 = vpop.f32.mrb[0].mxu0
  %v2517 = vpop.f32.mrb[0].mxu0
  %v2518 = vadd.f32 %v2445, %v2517
  %v2519 = vpop.f32.mrb[0].mxu0
  %2520 = vdwg.mxu0
  %v2521 = vmul.f32 %v2499, %v2499
  %v2522 = vmul.f32 %v2502, %v2502
  %v2523 = vmul.f32 %v2507, %v2507
  %v2524 = vmul.f32 %v2510, %v2510
  %v2525 = vmul.f32 %v2515, %v2515
  %v2526 = vmul.f32 %v2518, %v2518
  %v2527 = vmul.f32 %v2499, %v2521
  %v2528 = vmul.f32 %v2502, %v2522
  %v2529 = vmul.f32 %v2507, %v2523
  %v2530 = vmul.f32 %v2510, %v2524
  %v2531 = vmul.f32 %v2515, %v2525
  %v2532 = vmul.f32 %v2518, %v2526
  %v2533 = vmul.f32 %v2527, 0.044715
  %v2534 = vmul.f32 %v2528, 0.044715
  %v2535 = vmul.f32 %v2529, 0.044715
  %v2536 = vmul.f32 %v2530, 0.044715
  %v2537 = vmul.f32 %v2531, 0.044715
  %v2538 = vmul.f32 %v2532, 0.044715
  %v2539 = vadd.f32 %v2499, %v2533
  %v2540 = vadd.f32 %v2502, %v2534
  %v2541 = vadd.f32 %v2507, %v2535
  %v2542 = vadd.f32 %v2510, %v2536
  %v2543 = vadd.f32 %v2515, %v2537
  %v2544 = vadd.f32 %v2518, %v2538
  %v2545 = vmul.f32 %v2539, 0.7978846
  %v2546 = vmul.f32 %v2540, 0.7978846
  %v2547 = vmul.f32 %v2541, 0.7978846
  %v2548 = vmul.f32 %v2542, 0.7978846
  %v2549 = vmul.f32 %v2543, 0.7978846
  %v2550 = vmul.f32 %v2544, 0.7978846
  %v2551 = vtanh.pop %v2545
  %v2552 = vtanh.pop %v2546
  %v2553 = vtanh.pop %v2547
  %v2554 = vtanh.pop %v2548
  %v2555 = vtanh.pop %v2549
  %v2556 = vtanh.pop %v2550
  %v2557 = vadd.f32 %v2551, 1.0
  %v2558 = vadd.f32 %v2552, 1.0
  %v2559 = vadd.f32 %v2553, 1.0
  %v2560 = vadd.f32 %v2554, 1.0
  %v2561 = vadd.f32 %v2555, 1.0
  %v2562 = vadd.f32 %v2556, 1.0
  %v2563 = vmul.f32 %v2557, 0.5
  %v2564 = vmul.f32 %v2558, 0.5
  %v2565 = vmul.f32 %v2559, 0.5
  %v2566 = vmul.f32 %v2560, 0.5
  %v2567 = vmul.f32 %v2561, 0.5
  %v2568 = vmul.f32 %v2562, 0.5
  %v2569 = vmul.f32 %v2499, %v2563
  %v2570 = vmul.f32 %v2502, %v2564
  %v2571 = vmul.f32 %v2507, %v2565
  %v2572 = vmul.f32 %v2510, %v2566
  %v2573 = vmul.f32 %v2515, %v2567
  %v2574 = vmul.f32 %v2518, %v2568
  %s2575 = scalar_lea.vmem %s2, 64
  %v2576 = vld [vmem:[%s2575] sm:$0xf]
  %v2577 = vld [vmem:[%s2575 + $0x4] sm:$0xf]
  %v2578 = vld [vmem:[%s2575 + $0x8] sm:$0xf]
  %v2579 = vld [vmem:[%s2575 + $0xc] sm:$0xf]
  %v2580 = vld [vmem:[%s2575 + $0x10] sm:$0xf]
  %v2581 = vld [vmem:[%s2575 + $0x14] sm:$0xf]
  %v2582 = vld [vmem:[%s2575 + $0x18] sm:$0xf]
  %v2583 = vld [vmem:[%s2575 + $0x1c] sm:$0xf]
  %v2584 = vld [vmem:[%s2575 + $0x20] sm:$0xf]
  %v2585 = vld [vmem:[%s2575 + $0x24] sm:$0xf]
  %v2586 = vld [vmem:[%s2575 + $0x28] sm:$0xf]
  %v2587 = vld [vmem:[%s2575 + $0x2c] sm:$0xf]
  %v2588 = vld [vmem:[%s2575 + $0x30] sm:$0xf]
  %v2589 = vld [vmem:[%s2575 + $0x34] sm:$0xf]
  %v2590 = vld [vmem:[%s2575 + $0x38] sm:$0xf]
  %v2591 = vld [vmem:[%s2575 + $0x3c] sm:$0xf]
  %v2592 = vpack.c.bf16 %v2570, %v2569
  %v2593 = vpack.c.bf16 %v2572, %v2571
  %v2594 = vpack.c.bf16 %v2574, %v2573
  %v2611 = vunpack.c.l.b16 %v2576
  %v2612 = vunpack.c.l.b16 %v2577
  %v2613 = vunpack.c.l.b16 %v2578
  %v2614 = vunpack.c.l.b16 %v2579
  %v2615 = vunpack.c.l.b16 %v2580
  %v2616 = vunpack.c.l.b16 %v2581
  %v2617 = vunpack.c.l.b16 %v2582
  %v2618 = vunpack.c.l.b16 %v2583
  %v2619 = vunpack.c.l.b16 %v2584
  %v2620 = vunpack.c.l.b16 %v2585
  %v2621 = vunpack.c.l.b16 %v2586
  %v2622 = vunpack.c.l.b16 %v2587
  %v2623 = vunpack.c.l.b16 %v2588
  %v2624 = vunpack.c.l.b16 %v2589
  %v2625 = vunpack.c.l.b16 %v2590
  %v2626 = vunpack.c.l.b16 %v2591
  %v2627 = vpack.c.b16 %v2612, %v2611
  %v2628 = vpack.c.b16 %v2614, %v2613
  %v2629 = vpack.c.b16 %v2616, %v2615
  %v2630 = vpack.c.b16 %v2618, %v2617
  %v2631 = vpack.c.b16 %v2620, %v2619
  %v2632 = vpack.c.b16 %v2622, %v2621
  %v2633 = vpack.c.b16 %v2624, %v2623
  %v2634 = vpack.c.b16 %v2626, %v2625
  %2643 = vmatprep.subr.bf16.mxu0 0
  %2644 = vmatpush1.bf16.msra.mxu0 %v2627
  %2645 = vmatprep.subr.bf16.mxu0 0
  %2646 = vmatpush1.bf16.msra.mxu0 %v2628
  %2647 = vmatprep.subr.bf16.mxu0 0
  %2648 = vmatpush1.bf16.msra.mxu0 %v2629
  %2649 = vmatprep.subr.bf16.mxu0 0
  %2650 = vmatpush1.bf16.msra.mxu0 %v2630
  %2651 = vmatprep.subr.bf16.mxu0 0
  %2652 = vmatpush1.bf16.msra.mxu0 %v2631
  %2653 = vmatprep.subr.bf16.mxu0 0
  %2654 = vmatpush1.bf16.msra.mxu0 %v2632
  %2655 = vmatprep.subr.bf16.mxu0 0
  %2656 = vmatpush1.bf16.msra.mxu0 %v2633
  %2657 = vmatprep.subr.bf16.mxu0 0
  %2658 = vmatpush1.bf16.msra.mxu0 %v2634
  %2659 = vmatprep.subr.bf16.mxu0 0
  %2660 = vmatpush1.bf16.msra.mxu0 0
  %2661 = vmatprep.subr.bf16.mxu0 0
  %2662 = vmatpush1.bf16.msra.mxu0 0
  %2663 = vmatprep.subr.bf16.mxu0 0
  %2664 = vmatpush1.bf16.msra.mxu0 0
  %2665 = vmatprep.subr.bf16.mxu0 0
  %2666 = vmatpush1.bf16.msra.mxu0 0
  %2667 = vmatprep.subr.bf16.mxu0 0
  %2668 = vmatpush1.bf16.msra.mxu0 0
  %2669 = vmatprep.subr.bf16.mxu0 0
  %2670 = vmatpush1.bf16.msra.mxu0 0
  %2671 = vmatprep.subr.bf16.mxu0 0
  %2672 = vmatpush1.bf16.msra.mxu0 0
  %2673 = vmatprep.subr.bf16.mxu0 0
  %2674 = vmatpush1.bf16.msra.mxu0 0
  %2675 = vmatprep.mubr.bf16.mxu0 0
  %2676 = vmatmul.mubr.bf16.gmra.mrb[0].mxu0 %v2592
  %v2677 = vpop.f32.mrb[0].mxu0
  %v2678 = vadd.f32 0.0, %v2677
  %v2679 = vpop.f32.mrb[0].mxu0
  %v2680 = vpop.f32.mrb[0].mxu0
  %v2681 = vadd.f32 0.0, %v2680
  %v2682 = vpop.f32.mrb[0].mxu0
  %2683 = vmatprep.mubr.bf16.mxu0 0
  %2684 = vmatmul.mubr.bf16.gmra.mrb[0].mxu0 %v2593
  %v2685 = vpop.f32.mrb[0].mxu0
  %v2686 = vadd.f32 0.0, %v2685
  %v2687 = vpop.f32.mrb[0].mxu0
  %v2688 = vpop.f32.mrb[0].mxu0
  %v2689 = vadd.f32 0.0, %v2688
  %v2690 = vpop.f32.mrb[0].mxu0
  %2691 = vmatprep.mubr.bf16.mxu0 0
  %2692 = vmatmul.mubr.bf16.gmra.mrb[0].mxu0 %v2594
  %v2693 = vpop.f32.mrb[0].mxu0
  %v2694 = vadd.f32 0.0, %v2693
  %v2695 = vpop.f32.mrb[0].mxu0
  %v2696 = vpop.f32.mrb[0].mxu0
  %v2697 = vadd.f32 0.0, %v2696
  %v2698 = vpop.f32.mrb[0].mxu0
  %2699 = vdwg.mxu0
  %v2700 = vadd.f32 %v2322, %v2678
  %v2701 = vadd.f32 %v2323, %v2681
  %v2702 = vadd.f32 %v2324, %v2686
  %v2703 = vadd.f32 %v2325, %v2689
  %v2704 = vadd.f32 %v2326, %v2694
  %v2705 = vadd.f32 %v2327, %v2697
  %v2706 = vrot.slane %v1406, 2
  %v2707 = vlaneseq
  %v2708 = vshrl.u32 %v2707, 7
  %v2709 = vsub.s32 0, %v2708
  %v2710 = vrot.slane %v2706, %v2709
  %v2712 = vadd.f32 %v2700, %v2710
  %v2713 = vadd.f32 %v2701, %v2710
  %v2714 = vadd.f32 %v2702, %v2710
  %v2715 = vadd.f32 %v2703, %v2710
  %v2716 = vadd.f32 %v2704, %v2710
  %v2717 = vadd.f32 %v2705, %v2710
  %s2718 = scalar_lea.vmem %s1, 64
  %v2719 = vld [vmem:[%s2718] sm:$0xff]
  %v2720 = vld [vmem:[%s2718 + $0x8] sm:$0xff]
  %v2721 = vld [vmem:[%s2718 + $0x10] sm:$0xff]
  %v2722 = vld [vmem:[%s2718 + $0x18] sm:$0xff]
  %s2723 = scalar_lea.vmem %s3, 2
  %v2724 = vld [vmem:[%s2723] ss:$4 sm:$0x7]
  %s2725 = scalar_lea.vmem %s4, 8
  %v2726 = vld [vmem:[%s2725] sm:$0xf]
  %v2727 = vsel %vm62, %v2712, 0.0
  %2728 = vadd.xlane.f32.xlu0 %v2727
  %v2729 = vpop.xlane.xlu0 %2728
  %v2730 = vsel %vm62, %v2713, 0.0
  %2731 = vadd.xlane.f32.xlu0 %v2730
  %v2732 = vpop.xlane.xlu0 %2731
  %v2733 = vsel %vm62, %v2714, 0.0
  %2734 = vadd.xlane.f32.xlu0 %v2733
  %v2735 = vpop.xlane.xlu0 %2734
  %v2736 = vsel %vm62, %v2715, 0.0
  %2737 = vadd.xlane.f32.xlu0 %v2736
  %v2738 = vpop.xlane.xlu0 %2737
  %v2739 = vsel %vm62, %v2716, 0.0
  %2740 = vadd.xlane.f32.xlu0 %v2739
  %v2741 = vpop.xlane.xlu0 %2740
  %v2742 = vsel %vm62, %v2717, 0.0
  %2743 = vadd.xlane.f32.xlu0 %v2742
  %v2744 = vpop.xlane.xlu0 %2743
  %v2745 = vmul.f32 %v2729, %v81
  %v2746 = vmul.f32 %v2732, %v81
  %v2747 = vmul.f32 %v2735, %v81
  %v2748 = vmul.f32 %v2738, %v81
  %v2749 = vmul.f32 %v2741, %v81
  %v2750 = vmul.f32 %v2744, %v81
  %v2751 = vmul.f32 %v2712, %v2712
  %v2752 = vmul.f32 %v2713, %v2713
  %v2753 = vmul.f32 %v2714, %v2714
  %v2754 = vmul.f32 %v2715, %v2715
  %v2755 = vmul.f32 %v2716, %v2716
  %v2756 = vmul.f32 %v2717, %v2717
  %v2757 = vsel %vm62, %v2751, 0.0
  %2758 = vadd.xlane.f32.xlu0 %v2757
  %v2759 = vpop.xlane.xlu0 %2758
  %v2760 = vsel %vm62, %v2752, 0.0
  %2761 = vadd.xlane.f32.xlu0 %v2760
  %v2762 = vpop.xlane.xlu0 %2761
  %v2763 = vsel %vm62, %v2753, 0.0
  %2764 = vadd.xlane.f32.xlu0 %v2763
  %v2765 = vpop.xlane.xlu0 %2764
  %v2766 = vsel %vm62, %v2754, 0.0
  %2767 = vadd.xlane.f32.xlu0 %v2766
  %v2768 = vpop.xlane.xlu0 %2767
  %v2769 = vsel %vm62, %v2755, 0.0
  %2770 = vadd.xlane.f32.xlu0 %v2769
  %v2771 = vpop.xlane.xlu0 %2770
  %v2772 = vsel %vm62, %v2756, 0.0
  %2773 = vadd.xlane.f32.xlu0 %v2772
  %v2774 = vpop.xlane.xlu0 %2773
  %v2775 = vmul.f32 %v2759, %v81
  %v2776 = vmul.f32 %v2762, %v81
  %v2777 = vmul.f32 %v2765, %v81
  %v2778 = vmul.f32 %v2768, %v81
  %v2779 = vmul.f32 %v2771, %v81
  %v2780 = vmul.f32 %v2774, %v81
  %v2781 = vmul.f32 %v2745, %v2745
  %v2782 = vmul.f32 %v2746, %v2746
  %v2783 = vmul.f32 %v2747, %v2747
  %v2784 = vmul.f32 %v2748, %v2748
  %v2785 = vmul.f32 %v2749, %v2749
  %v2786 = vmul.f32 %v2750, %v2750
  %v2787 = vsub.f32 %v2775, %v2781
  %v2788 = vsub.f32 %v2776, %v2782
  %v2789 = vsub.f32 %v2777, %v2783
  %v2790 = vsub.f32 %v2778, %v2784
  %v2791 = vsub.f32 %v2779, %v2785
  %v2792 = vsub.f32 %v2780, %v2786
  %v2793 = vsub.f32 %v2712, %v2745
  %v2794 = vsub.f32 %v2713, %v2746
  %v2795 = vsub.f32 %v2714, %v2747
  %v2796 = vsub.f32 %v2715, %v2748
  %v2797 = vsub.f32 %v2716, %v2749
  %v2798 = vsub.f32 %v2717, %v2750
  %v2799 = vadd.f32 %v2787, 1e-05
  %v2800 = vadd.f32 %v2788, 1e-05
  %v2801 = vadd.f32 %v2789, 1e-05
  %v2802 = vadd.f32 %v2790, 1e-05
  %v2803 = vadd.f32 %v2791, 1e-05
  %v2804 = vadd.f32 %v2792, 1e-05
  %v2805 = vrsqrt.pop %v2799
  %v2806 = vrsqrt.pop %v2800
  %v2807 = vrsqrt.pop %v2801
  %v2808 = vrsqrt.pop %v2802
  %v2809 = vrsqrt.pop %v2803
  %v2810 = vrsqrt.pop %v2804
  %v2811 = vmul.f32 %v2793, %v2805
  %v2812 = vmul.f32 %v2794, %v2806
  %v2813 = vmul.f32 %v2795, %v2807
  %v2814 = vmul.f32 %v2796, %v2808
  %v2815 = vmul.f32 %v2797, %v2809
  %v2816 = vmul.f32 %v2798, %v2810
  %v2817 = vlaneseq
  %v2818 = vshrl.u32 %v2817, 7
  %v2819 = vsub.s32 0, %v2818
  %v2820 = vrot.slane %v2726, %v2819
  %v2821 = vmul.f32 %v2811, %v2820
  %v2822 = vmul.f32 %v2812, %v2820
  %v2823 = vmul.f32 %v2813, %v2820
  %v2824 = vmul.f32 %v2814, %v2820
  %v2825 = vmul.f32 %v2815, %v2820
  %v2826 = vmul.f32 %v2816, %v2820
  %v2827 = vlaneseq
  %v2828 = vshrl.u32 %v2827, 7
  %v2829 = vsub.s32 1, %v2828
  %v2830 = vrot.slane %v2726, %v2829
  %v2831 = vadd.f32 %v2821, %v2830
  %v2832 = vadd.f32 %v2822, %v2830
  %v2833 = vadd.f32 %v2823, %v2830
  %v2834 = vadd.f32 %v2824, %v2830
  %v2835 = vadd.f32 %v2825, %v2830
  %v2836 = vadd.f32 %v2826, %v2830
  %v2837 = vpack.c.bf16 %v2832, %v2831
  %v2838 = vpack.c.bf16 %v2834, %v2833
  %v2839 = vpack.c.bf16 %v2836, %v2835
  %v2841 = vlaneseq
  %v2842 = vshrl.u32 %v2841, 7
  %v2843 = vsub.s32 0, %v2842
  %v2844 = vrot.slane %v2724, %v2843
  %v2850 = vunpack.c.l.b16 %v2719
  %v2851 = vunpack.c.l.b16 %v2720
  %v2852 = vunpack.c.l.b16 %v2721
  %v2853 = vunpack.c.l.b16 %v2722
  %v2854 = vpack.c.b16 %v2851, %v2850
  %v2855 = vpack.c.b16 %v2853, %v2852
  %v2859 = vsel %vm62, %v2837, 0
  %v2862 = vsel %vm62, %v2838, 0
  %v2865 = vsel %vm62, %v2839, 0
  %2867 = vmatprep.subr.bf16.mxu0 0
  %2868 = vmatpush1.bf16.msra.mxu0 %v2854
  %2869 = vmatprep.subr.bf16.mxu0 0
  %2870 = vmatpush1.bf16.msra.mxu0 %v2855
  %2871 = vmatprep.subr.bf16.mxu0 0
  %2872 = vmatpush1.bf16.msra.mxu0 0
  %2873 = vmatprep.subr.bf16.mxu0 0
  %2874 = vmatpush1.bf16.msra.mxu0 0
  %2875 = vmatprep.subr.bf16.mxu0 0
  %2876 = vmatpush1.bf16.msra.mxu0 0
  %2877 = vmatprep.subr.bf16.mxu0 0
  %2878 = vmatpush1.bf16.msra.mxu0 0
  %2879 = vmatprep.subr.bf16.mxu0 0
  %2880 = vmatpush1.bf16.msra.mxu0 0
  %2881 = vmatprep.subr.bf16.mxu0 0
  %2882 = vmatpush1.bf16.msra.mxu0 0
  %2883 = vmatprep.subr.bf16.mxu0 0
  %2884 = vmatpush1.bf16.msra.mxu0 0
  %2885 = vmatprep.subr.bf16.mxu0 0
  %2886 = vmatpush1.bf16.msra.mxu0 0
  %2887 = vmatprep.subr.bf16.mxu0 0
  %2888 = vmatpush1.bf16.msra.mxu0 0
  %2889 = vmatprep.subr.bf16.mxu0 0
  %2890 = vmatpush1.bf16.msra.mxu0 0
  %2891 = vmatprep.subr.bf16.mxu0 0
  %2892 = vmatpush1.bf16.msra.mxu0 0
  %2893 = vmatprep.subr.bf16.mxu0 0
  %2894 = vmatpush1.bf16.msra.mxu0 0
  %2895 = vmatprep.subr.bf16.mxu0 0
  %2896 = vmatpush1.bf16.msra.mxu0 0
  %2897 = vmatprep.subr.bf16.mxu0 0
  %2898 = vmatpush1.bf16.msra.mxu0 0
  %2899 = vmatprep.mubr.bf16.mxu0 0
  %2900 = vmatmul.mubr.bf16.gmra.mrb[0].mxu0 %v2859
  %v2901 = vpop.f32.mrb[0].mxu0
  %v2902 = vadd.f32 %v2844, %v2901
  %v2903 = vpop.f32.mrb[0].mxu0
  %v2904 = vpop.f32.mrb[0].mxu0
  %v2905 = vadd.f32 %v2844, %v2904
  %v2906 = vpop.f32.mrb[0].mxu0
  %2907 = vmatprep.mubr.bf16.mxu0 0
  %2908 = vmatmul.mubr.bf16.gmra.mrb[0].mxu0 %v2862
  %v2909 = vpop.f32.mrb[0].mxu0
  %v2910 = vadd.f32 %v2844, %v2909
  %v2911 = vpop.f32.mrb[0].mxu0
  %v2912 = vpop.f32.mrb[0].mxu0
  %v2913 = vadd.f32 %v2844, %v2912
  %v2914 = vpop.f32.mrb[0].mxu0
  %2915 = vmatprep.mubr.bf16.mxu0 0
  %2916 = vmatmul.mubr.bf16.gmra.mrb[0].mxu0 %v2865
  %v2917 = vpop.f32.mrb[0].mxu0
  %v2918 = vadd.f32 %v2844, %v2917
  %v2919 = vpop.f32.mrb[0].mxu0
  %v2920 = vpop.f32.mrb[0].mxu0
  %v2921 = vadd.f32 %v2844, %v2920
  %v2922 = vpop.f32.mrb[0].mxu0
  %2923 = vdwg.mxu0
  %v2924 = vpack.c.bf16 %v2905, %v2902
  %v2925 = vpack.c.bf16 %v2910, %v2910
  %v2926 = vmul.f32 %v2902, %v264
  %v2927 = vmul.f32 %v2905, %v264
  %v2928 = vmul.f32 %v2910, %v264
  %v2929 = vmul.f32 %v2902, %v266
  %v2930 = vmul.f32 %v2905, %v266
  %v2931 = vmul.f32 %v2910, %v266
  %v2932 = vmul.f32 %v2902, %v268
  %v2933 = vmul.f32 %v2905, %v268
  %v2934 = vmul.f32 %v2910, %v268
  %v2935 = vmul.f32 %v2902, %v270
  %v2936 = vmul.f32 %v2905, %v270
  %v2937 = vmul.f32 %v2910, %v270
  %v2938 = vpack.c.bf16 %v2927, %v2926
  %v2939 = vpack.c.bf16 %v2929, %v2928
  %v2940 = vpack.c.bf16 %v2931, %v2930
  %v2941 = vpack.c.bf16 %v2933, %v2932
  %v2942 = vpack.c.bf16 %v2935, %v2934
  %v2943 = vpack.c.bf16 %v2937, %v2936
  %v2944 = vmul.f32 %v2902, %v294
  %v2945 = vmul.f32 %v2905, %v294
  %v2946 = vmul.f32 %v2910, %v294
  %v2947 = vmul.f32 %v2902, %v296
  %v2948 = vmul.f32 %v2905, %v296
  %v2949 = vmul.f32 %v2910, %v296
  %v2950 = vmul.f32 %v2902, %v298
  %v2951 = vmul.f32 %v2905, %v298
  %v2952 = vmul.f32 %v2910, %v298
  %v2953 = vmul.f32 %v2902, %v300
  %v2954 = vmul.f32 %v2905, %v300
  %v2955 = vmul.f32 %v2910, %v300
  %v2956 = vpack.c.bf16 %v2945, %v2944
  %v2957 = vpack.c.bf16 %v2947, %v2946
  %v2958 = vpack.c.bf16 %v2949, %v2948
  %v2959 = vpack.c.bf16 %v2951, %v2950
  %v2960 = vpack.c.bf16 %v2953, %v2952
  %v2961 = vpack.c.bf16 %v2955, %v2954
  %2968 = vrot.lane.b32.xlu0 %v2938, 96
  %v2969 = vpop.permute.xlu0 %2968
  %2970 = vrot.lane.b32.xlu0 %v2939, 96
  %v2971 = vpop.permute.xlu0 %2970
  %2972 = vrot.lane.b32.xlu0 %v2940, 96
  %v2973 = vpop.permute.xlu0 %2972
  %2974 = vrot.lane.b32.xlu0 %v2941, 96
  %v2975 = vpop.permute.xlu0 %2974
  %2976 = vrot.lane.b32.xlu0 %v2942, 96
  %v2977 = vpop.permute.xlu0 %2976
  %2978 = vrot.lane.b32.xlu0 %v2943, 96
  %v2979 = vpop.permute.xlu0 %2978
  %v2981 = vsel %vm62, %v2924, 0
  %v2984 = vsel %vm62, %v2925, 0
  %v2987 = vsel %vm62, %v2969, 0
  %v2990 = vsel %vm62, %v2971, 0
  %v2993 = vsel %vm62, %v2973, 0
  %v2996 = vsel %vm62, %v2975, 0
  %v2999 = vsel %vm62, %v2977, 0
  %v3002 = vsel %vm62, %v2979, 0
  %3004 = vmatprep.subr.bf16.mxu0 0
  %3005 = vmatpush1.bf16.xpose.msra.mxu0 %v2987
  %3006 = vmatprep.subr.bf16.mxu0 0
  %3007 = vmatpush1.bf16.xpose.msra.mxu0 %v2990
  %3008 = vmatprep.subr.bf16.mxu0 0
  %3009 = vmatpush1.bf16.xpose.msra.mxu0 %v2993
  %3010 = vmatprep.subr.bf16.mxu0 0
  %3011 = vmatpush1.bf16.xpose.msra.mxu0 %v2996
  %3012 = vmatprep.subr.bf16.mxu0 0
  %3013 = vmatpush1.bf16.xpose.msra.mxu0 %v2999
  %3014 = vmatprep.subr.bf16.mxu0 0
  %3015 = vmatpush1.bf16.xpose.msra.mxu0 %v3002
  %3016 = vmatprep.subr.bf16.mxu0 0
  %3017 = vmatpush1.bf16.xpose.msra.mxu0 0
  %3018 = vmatprep.subr.bf16.mxu0 0
  %3019 = vmatpush1.bf16.xpose.msra.mxu0 0
  %3020 = vmatprep.subr.bf16.mxu0 0
  %3021 = vmatpush1.bf16.xpose.msra.mxu0 0
  %3022 = vmatprep.subr.bf16.mxu0 0
  %3023 = vmatpush1.bf16.xpose.msra.mxu0 0
  %3024 = vmatprep.subr.bf16.mxu0 0
  %3025 = vmatpush1.bf16.xpose.msra.mxu0 0
  %3026 = vmatprep.subr.bf16.mxu0 0
  %3027 = vmatpush1.bf16.xpose.msra.mxu0 0
  %3028 = vmatprep.subr.bf16.mxu0 0
  %3029 = vmatpush1.bf16.xpose.msra.mxu0 0
  %3030 = vmatprep.subr.bf16.mxu0 0
  %3031 = vmatpush1.bf16.xpose.msra.mxu0 0
  %3032 = vmatprep.subr.bf16.mxu0 0
  %3033 = vmatpush1.bf16.xpose.msra.mxu0 0
  %3034 = vmatprep.subr.bf16.mxu0 0
  %3035 = vmatpush1.bf16.xpose.msra.mxu0 0
  %3036 = vmatprep.mubr.bf16.mxu0 0
  %3037 = vmatmul.mubr.bf16.gmra.mrb[0].mxu0 %v2981
  %v3038 = vpop.f32.mrb[0].mxu0
  %v3039 = vadd.f32 0.0, %v3038
  %v3040 = vpop.f32.mrb[0].mxu0
  %v3041 = vpop.f32.mrb[0].mxu0
  %v3042 = vadd.f32 0.0, %v3041
  %v3043 = vpop.f32.mrb[0].mxu0
  %3044 = vmatprep.mubr.bf16.mxu0 0
  %3045 = vmatmul.mubr.bf16.gmra.mrb[0].mxu0 %v2984
  %v3046 = vpop.f32.mrb[0].mxu0
  %v3047 = vadd.f32 0.0, %v3046
  %v3048 = vpop.f32.mrb[0].mxu0
  %v3049 = vpop.f32.mrb[0].mxu0
  %v3050 = vpop.f32.mrb[0].mxu0
  %3051 = vdwg.mxu0
  %v3052 = vsel %vm413, %v3039, -inf
  %3053 = vmax.xlane.f32.xlu0 %v3052
  %v3054 = vpop.xlane.xlu0 %3053
  %v3055 = vsel %vm413, %v3042, -inf
  %3056 = vmax.xlane.f32.xlu0 %v3055
  %v3057 = vpop.xlane.xlu0 %3056
  %v3058 = vsel %vm413, %v3047, -inf
  %3059 = vmax.xlane.f32.xlu0 %v3058
  %v3060 = vpop.xlane.xlu0 %3059
  %v3061 = vsub.f32 %v3039, %v3054
  %v3062 = vsub.f32 %v3042, %v3057
  %v3063 = vsub.f32 %v3047, %v3060
  %v3064 = vmul.f32 %v3061, 1.442695
  %v3065 = vpow.pop %v3064
  %v3066 = vmul.f32 %v3062, 1.442695
  %v3067 = vpow.pop %v3066
  %v3068 = vmul.f32 %v3063, 1.442695
  %v3069 = vpow.pop %v3068
  %v3070 = vsel %vm432, %v3065, 0.0
  %3071 = vadd.xlane.f32.xlu0 %v3070
  %v3072 = vpop.xlane.xlu0 %3071
  %v3073 = vsel %vm432, %v3067, 0.0
  %3074 = vadd.xlane.f32.xlu0 %v3073
  %v3075 = vpop.xlane.xlu0 %3074
  %v3076 = vsel %vm432, %v3069, 0.0
  %3077 = vadd.xlane.f32.xlu0 %v3076
  %v3078 = vpop.xlane.xlu0 %3077
  %v3079 = vrcp.pop %v3072
  %v3080 = vrcp.pop %v3075
  %v3081 = vrcp.pop %v3078
  %3085 = vrot.lane.b32.xlu0 %v3065, 104
  %v3086 = vpop.permute.xlu0 %3085
  %3087 = vrot.lane.b32.xlu0 %v3067, 104
  %v3088 = vpop.permute.xlu0 %3087
  %3089 = vrot.lane.b32.xlu0 %v3069, 104
  %v3090 = vpop.permute.xlu0 %3089
  %v3094 = vsel %vm432, %v3086, 0.0
  %3095 = vadd.xlane.f32.xlu0 %v3094
  %v3096 = vpop.xlane.xlu0 %3095
  %v3097 = vsel %vm432, %v3088, 0.0
  %3098 = vadd.xlane.f32.xlu0 %v3097
  %v3099 = vpop.xlane.xlu0 %3098
  %v3100 = vsel %vm432, %v3090, 0.0
  %3101 = vadd.xlane.f32.xlu0 %v3100
  %v3102 = vpop.xlane.xlu0 %3101
  %v3103 = vrcp.pop %v3096
  %v3104 = vrcp.pop %v3099
  %v3105 = vrcp.pop %v3102
  %3106 = vrot.lane.b32.xlu0 %v3065, 80
  %v3107 = vpop.permute.xlu0 %3106
  %3108 = vrot.lane.b32.xlu0 %v3067, 80
  %v3109 = vpop.permute.xlu0 %3108
  %3110 = vrot.lane.b32.xlu0 %v3069, 80
  %v3111 = vpop.permute.xlu0 %3110
  %v3115 = vsel %vm432, %v3107, 0.0
  %3116 = vadd.xlane.f32.xlu0 %v3115
  %v3117 = vpop.xlane.xlu0 %3116
  %v3118 = vsel %vm432, %v3109, 0.0
  %3119 = vadd.xlane.f32.xlu0 %v3118
  %v3120 = vpop.xlane.xlu0 %3119
  %v3121 = vsel %vm432, %v3111, 0.0
  %3122 = vadd.xlane.f32.xlu0 %v3121
  %v3123 = vpop.xlane.xlu0 %3122
  %v3124 = vrcp.pop %v3117
  %v3125 = vrcp.pop %v3120
  %v3126 = vrcp.pop %v3123
  %3127 = vrot.lane.b32.xlu0 %v3065, 56
  %v3128 = vpop.permute.xlu0 %3127
  %3129 = vrot.lane.b32.xlu0 %v3067, 56
  %v3130 = vpop.permute.xlu0 %3129
  %3131 = vrot.lane.b32.xlu0 %v3069, 56
  %v3132 = vpop.permute.xlu0 %3131
  %v3136 = vsel %vm432, %v3128, 0.0
  %3137 = vadd.xlane.f32.xlu0 %v3136
  %v3138 = vpop.xlane.xlu0 %3137
  %v3139 = vsel %vm432, %v3130, 0.0
  %3140 = vadd.xlane.f32.xlu0 %v3139
  %v3141 = vpop.xlane.xlu0 %3140
  %v3142 = vsel %vm432, %v3132, 0.0
  %3143 = vadd.xlane.f32.xlu0 %v3142
  %v3144 = vpop.xlane.xlu0 %3143
  %v3145 = vrcp.pop %v3138
  %v3146 = vrcp.pop %v3141
  %v3147 = vrcp.pop %v3144
  %v3148 = vsel %vm432, %v3079, %v3103
  %v3149 = vsel %vm432, %v3080, %v3104
  %v3150 = vsel %vm432, %v3081, %v3105
  %v3151 = vsel %vm514, %v3148, %v3124
  %v3152 = vsel %vm514, %v3149, %v3125
  %v3153 = vsel %vm514, %v3150, %v3126
  %v3154 = vsel %vm518, %v3151, %v3145
  %v3155 = vsel %vm518, %v3152, %v3146
  %v3156 = vsel %vm518, %v3153, %v3147
  %v3157 = vmul.f32 %v3065, %v3154
  %v3158 = vmul.f32 %v3067, %v3155
  %v3159 = vmul.f32 %v3069, %v3156
  %v3160 = vpack.c.bf16 %v3158, %v3157
  %v3161 = vpack.c.bf16 %v3159, %v3159
  %3168 = vrot.lane.b32.xlu0 %v2956, 64
  %v3169 = vpop.permute.xlu0 %3168
  %3170 = vrot.lane.b32.xlu0 %v2957, 64
  %v3171 = vpop.permute.xlu0 %3170
  %3172 = vrot.lane.b32.xlu0 %v2958, 64
  %v3173 = vpop.permute.xlu0 %3172
  %3174 = vrot.lane.b32.xlu0 %v2959, 64
  %v3175 = vpop.permute.xlu0 %3174
  %3176 = vrot.lane.b32.xlu0 %v2960, 64
  %v3177 = vpop.permute.xlu0 %3176
  %3178 = vrot.lane.b32.xlu0 %v2961, 64
  %v3179 = vpop.permute.xlu0 %3178
  %v3187 = vsel %vm413, %v3160, 0
  %v3190 = vsel %vm413, %v3161, 0
  %3192 = vmatprep.subr.bf16.mxu0 0
  %3193 = vmatpush1.bf16.msra.mxu0 %v3169
  %3194 = vmatprep.subr.bf16.mxu0 0
  %3195 = vmatpush1.bf16.msra.mxu0 %v3171
  %3196 = vmatprep.subr.bf16.mxu0 0
  %3197 = vmatpush1.bf16.msra.mxu0 %v3173
  %3198 = vmatprep.subr.bf16.mxu0 0
  %3199 = vmatpush1.bf16.msra.mxu0 %v3175
  %3200 = vmatprep.subr.bf16.mxu0 0
  %3201 = vmatpush1.bf16.msra.mxu0 %v3177
  %3202 = vmatprep.subr.bf16.mxu0 0
  %3203 = vmatpush1.bf16.msra.mxu0 %v3179
  %3204 = vmatprep.subr.bf16.mxu0 0
  %3205 = vmatpush1.bf16.msra.mxu0 0
  %3206 = vmatprep.subr.bf16.mxu0 0
  %3207 = vmatpush1.bf16.msra.mxu0 0
  %3208 = vmatprep.subr.bf16.mxu0 0
  %3209 = vmatpush1.bf16.msra.mxu0 0
  %3210 = vmatprep.subr.bf16.mxu0 0
  %3211 = vmatpush1.bf16.msra.mxu0 0
  %3212 = vmatprep.subr.bf16.mxu0 0
  %3213 = vmatpush1.bf16.msra.mxu0 0
  %3214 = vmatprep.subr.bf16.mxu0 0
  %3215 = vmatpush1.bf16.msra.mxu0 0
  %3216 = vmatprep.subr.bf16.mxu0 0
  %3217 = vmatpush1.bf16.msra.mxu0 0
  %3218 = vmatprep.subr.bf16.mxu0 0
  %3219 = vmatpush1.bf16.msra.mxu0 0
  %3220 = vmatprep.subr.bf16.mxu0 0
  %3221 = vmatpush1.bf16.msra.mxu0 0
  %3222 = vmatprep.subr.bf16.mxu0 0
  %3223 = vmatpush1.bf16.msra.mxu0 0
  %3224 = vmatprep.mubr.bf16.mxu0 0
  %3225 = vmatmul.mubr.bf16.gmra.mrb[0].mxu0 %v3187
  %v3226 = vpop.f32.mrb[0].mxu0
  %v3227 = vadd.f32 0.0, %v3226
  %v3228 = vpop.f32.mrb[0].mxu0
  %v3229 = vpop.f32.mrb[0].mxu0
  %v3230 = vadd.f32 0.0, %v3229
  %v3231 = vpop.f32.mrb[0].mxu0
  %3232 = vmatprep.mubr.bf16.mxu0 0
  %3233 = vmatmul.mubr.bf16.gmra.mrb[0].mxu0 %v3190
  %v3234 = vpop.f32.mrb[0].mxu0
  %v3235 = vadd.f32 0.0, %v3234
  %v3236 = vpop.f32.mrb[0].mxu0
  %v3237 = vpop.f32.mrb[0].mxu0
  %v3238 = vpop.f32.mrb[0].mxu0
  %3239 = vdwg.mxu0
  %v3240 = vpack.c.bf16 %v2918, %v2913
  %v3241 = vpack.c.bf16 %v2921, %v2921
  %v3242 = vmul.f32 %v2913, %v264
  %v3243 = vmul.f32 %v2918, %v264
  %v3244 = vmul.f32 %v2921, %v264
  %v3245 = vmul.f32 %v2913, %v266
  %v3246 = vmul.f32 %v2918, %v266
  %v3247 = vmul.f32 %v2921, %v266
  %v3248 = vmul.f32 %v2913, %v268
  %v3249 = vmul.f32 %v2918, %v268
  %v3250 = vmul.f32 %v2921, %v268
  %v3251 = vmul.f32 %v2913, %v270
  %v3252 = vmul.f32 %v2918, %v270
  %v3253 = vmul.f32 %v2921, %v270
  %v3254 = vpack.c.bf16 %v3243, %v3242
  %v3255 = vpack.c.bf16 %v3245, %v3244
  %v3256 = vpack.c.bf16 %v3247, %v3246
  %v3257 = vpack.c.bf16 %v3249, %v3248
  %v3258 = vpack.c.bf16 %v3251, %v3250
  %v3259 = vpack.c.bf16 %v3253, %v3252
  %v3260 = vmul.f32 %v2913, %v294
  %v3261 = vmul.f32 %v2918, %v294
  %v3262 = vmul.f32 %v2921, %v294
  %v3263 = vmul.f32 %v2913, %v296
  %v3264 = vmul.f32 %v2918, %v296
  %v3265 = vmul.f32 %v2921, %v296
  %v3266 = vmul.f32 %v2913, %v298
  %v3267 = vmul.f32 %v2918, %v298
  %v3268 = vmul.f32 %v2921, %v298
  %v3269 = vmul.f32 %v2913, %v300
  %v3270 = vmul.f32 %v2918, %v300
  %v3271 = vmul.f32 %v2921, %v300
  %v3272 = vpack.c.bf16 %v3261, %v3260
  %v3273 = vpack.c.bf16 %v3263, %v3262
  %v3274 = vpack.c.bf16 %v3265, %v3264
  %v3275 = vpack.c.bf16 %v3267, %v3266
  %v3276 = vpack.c.bf16 %v3269, %v3268
  %v3277 = vpack.c.bf16 %v3271, %v3270
  %3284 = vrot.lane.b32.xlu0 %v3254, 96
  %v3285 = vpop.permute.xlu0 %3284
  %3286 = vrot.lane.b32.xlu0 %v3255, 96
  %v3287 = vpop.permute.xlu0 %3286
  %3288 = vrot.lane.b32.xlu0 %v3256, 96
  %v3289 = vpop.permute.xlu0 %3288
  %3290 = vrot.lane.b32.xlu0 %v3257, 96
  %v3291 = vpop.permute.xlu0 %3290
  %3292 = vrot.lane.b32.xlu0 %v3258, 96
  %v3293 = vpop.permute.xlu0 %3292
  %3294 = vrot.lane.b32.xlu0 %v3259, 96
  %v3295 = vpop.permute.xlu0 %3294
  %v3297 = vsel %vm62, %v3240, 0
  %v3300 = vsel %vm62, %v3241, 0
  %v3303 = vsel %vm62, %v3285, 0
  %v3306 = vsel %vm62, %v3287, 0
  %v3309 = vsel %vm62, %v3289, 0
  %v3312 = vsel %vm62, %v3291, 0
  %v3315 = vsel %vm62, %v3293, 0
  %v3318 = vsel %vm62, %v3295, 0
  %3320 = vmatprep.subr.bf16.mxu0 0
  %3321 = vmatpush1.bf16.xpose.msra.mxu0 %v3303
  %3322 = vmatprep.subr.bf16.mxu0 0
  %3323 = vmatpush1.bf16.xpose.msra.mxu0 %v3306
  %3324 = vmatprep.subr.bf16.mxu0 0
  %3325 = vmatpush1.bf16.xpose.msra.mxu0 %v3309
  %3326 = vmatprep.subr.bf16.mxu0 0
  %3327 = vmatpush1.bf16.xpose.msra.mxu0 %v3312
  %3328 = vmatprep.subr.bf16.mxu0 0
  %3329 = vmatpush1.bf16.xpose.msra.mxu0 %v3315
  %3330 = vmatprep.subr.bf16.mxu0 0
  %3331 = vmatpush1.bf16.xpose.msra.mxu0 %v3318
  %3332 = vmatprep.subr.bf16.mxu0 0
  %3333 = vmatpush1.bf16.xpose.msra.mxu0 0
  %3334 = vmatprep.subr.bf16.mxu0 0
  %3335 = vmatpush1.bf16.xpose.msra.mxu0 0
  %3336 = vmatprep.subr.bf16.mxu0 0
  %3337 = vmatpush1.bf16.xpose.msra.mxu0 0
  %3338 = vmatprep.subr.bf16.mxu0 0
  %3339 = vmatpush1.bf16.xpose.msra.mxu0 0
  %3340 = vmatprep.subr.bf16.mxu0 0
  %3341 = vmatpush1.bf16.xpose.msra.mxu0 0
  %3342 = vmatprep.subr.bf16.mxu0 0
  %3343 = vmatpush1.bf16.xpose.msra.mxu0 0
  %3344 = vmatprep.subr.bf16.mxu0 0
  %3345 = vmatpush1.bf16.xpose.msra.mxu0 0
  %3346 = vmatprep.subr.bf16.mxu0 0
  %3347 = vmatpush1.bf16.xpose.msra.mxu0 0
  %3348 = vmatprep.subr.bf16.mxu0 0
  %3349 = vmatpush1.bf16.xpose.msra.mxu0 0
  %3350 = vmatprep.subr.bf16.mxu0 0
  %3351 = vmatpush1.bf16.xpose.msra.mxu0 0
  %3352 = vmatprep.mubr.bf16.mxu0 0
  %3353 = vmatmul.mubr.bf16.gmra.mrb[0].mxu0 %v3297
  %v3354 = vpop.f32.mrb[0].mxu0
  %v3355 = vadd.f32 0.0, %v3354
  %v3356 = vpop.f32.mrb[0].mxu0
  %v3357 = vpop.f32.mrb[0].mxu0
  %v3358 = vadd.f32 0.0, %v3357
  %v3359 = vpop.f32.mrb[0].mxu0
  %3360 = vmatprep.mubr.bf16.mxu0 0
  %3361 = vmatmul.mubr.bf16.gmra.mrb[0].mxu0 %v3300
  %v3362 = vpop.f32.mrb[0].mxu0
  %v3363 = vadd.f32 0.0, %v3362
  %v3364 = vpop.f32.mrb[0].mxu0
  %v3365 = vpop.f32.mrb[0].mxu0
  %v3366 = vpop.f32.mrb[0].mxu0
  %3367 = vdwg.mxu0
  %v3368 = vsel %vm413, %v3355, -inf
  %3369 = vmax.xlane.f32.xlu0 %v3368
  %v3370 = vpop.xlane.xlu0 %3369
  %v3371 = vsel %vm413, %v3358, -inf
  %3372 = vmax.xlane.f32.xlu0 %v3371
  %v3373 = vpop.xlane.xlu0 %3372
  %v3374 = vsel %vm413, %v3363, -inf
  %3375 = vmax.xlane.f32.xlu0 %v3374
  %v3376 = vpop.xlane.xlu0 %3375
  %v3377 = vsub.f32 %v3355, %v3370
  %v3378 = vsub.f32 %v3358, %v3373
  %v3379 = vsub.f32 %v3363, %v3376
  %v3380 = vmul.f32 %v3377, 1.442695
  %v3381 = vpow.pop %v3380
  %v3382 = vmul.f32 %v3378, 1.442695
  %v3383 = vpow.pop %v3382
  %v3384 = vmul.f32 %v3379, 1.442695
  %v3385 = vpow.pop %v3384
  %v3386 = vsel %vm432, %v3381, 0.0
  %3387 = vadd.xlane.f32.xlu0 %v3386
  %v3388 = vpop.xlane.xlu0 %3387
  %v3389 = vsel %vm432, %v3383, 0.0
  %3390 = vadd.xlane.f32.xlu0 %v3389
  %v3391 = vpop.xlane.xlu0 %3390
  %v3392 = vsel %vm432, %v3385, 0.0
  %3393 = vadd.xlane.f32.xlu0 %v3392
  %v3394 = vpop.xlane.xlu0 %3393
  %v3395 = vrcp.pop %v3388
  %v3396 = vrcp.pop %v3391
  %v3397 = vrcp.pop %v3394
  %3401 = vrot.lane.b32.xlu0 %v3381, 104
  %v3402 = vpop.permute.xlu0 %3401
  %3403 = vrot.lane.b32.xlu0 %v3383, 104
  %v3404 = vpop.permute.xlu0 %3403
  %3405 = vrot.lane.b32.xlu0 %v3385, 104
  %v3406 = vpop.permute.xlu0 %3405
  %v3410 = vsel %vm432, %v3402, 0.0
  %3411 = vadd.xlane.f32.xlu0 %v3410
  %v3412 = vpop.xlane.xlu0 %3411
  %v3413 = vsel %vm432, %v3404, 0.0
  %3414 = vadd.xlane.f32.xlu0 %v3413
  %v3415 = vpop.xlane.xlu0 %3414
  %v3416 = vsel %vm432, %v3406, 0.0
  %3417 = vadd.xlane.f32.xlu0 %v3416
  %v3418 = vpop.xlane.xlu0 %3417
  %v3419 = vrcp.pop %v3412
  %v3420 = vrcp.pop %v3415
  %v3421 = vrcp.pop %v3418
  %3422 = vrot.lane.b32.xlu0 %v3381, 80
  %v3423 = vpop.permute.xlu0 %3422
  %3424 = vrot.lane.b32.xlu0 %v3383, 80
  %v3425 = vpop.permute.xlu0 %3424
  %3426 = vrot.lane.b32.xlu0 %v3385, 80
  %v3427 = vpop.permute.xlu0 %3426
  %v3431 = vsel %vm432, %v3423, 0.0
  %3432 = vadd.xlane.f32.xlu0 %v3431
  %v3433 = vpop.xlane.xlu0 %3432
  %v3434 = vsel %vm432, %v3425, 0.0
  %3435 = vadd.xlane.f32.xlu0 %v3434
  %v3436 = vpop.xlane.xlu0 %3435
  %v3437 = vsel %vm432, %v3427, 0.0
  %3438 = vadd.xlane.f32.xlu0 %v3437
  %v3439 = vpop.xlane.xlu0 %3438
  %v3440 = vrcp.pop %v3433
  %v3441 = vrcp.pop %v3436
  %v3442 = vrcp.pop %v3439
  %3443 = vrot.lane.b32.xlu0 %v3381, 56
  %v3444 = vpop.permute.xlu0 %3443
  %3445 = vrot.lane.b32.xlu0 %v3383, 56
  %v3446 = vpop.permute.xlu0 %3445
  %3447 = vrot.lane.b32.xlu0 %v3385, 56
  %v3448 = vpop.permute.xlu0 %3447
  %v3452 = vsel %vm432, %v3444, 0.0
  %3453 = vadd.xlane.f32.xlu0 %v3452
  %v3454 = vpop.xlane.xlu0 %3453
  %v3455 = vsel %vm432, %v3446, 0.0
  %3456 = vadd.xlane.f32.xlu0 %v3455
  %v3457 = vpop.xlane.xlu0 %3456
  %v3458 = vsel %vm432, %v3448, 0.0
  %3459 = vadd.xlane.f32.xlu0 %v3458
  %v3460 = vpop.xlane.xlu0 %3459
  %v3461 = vrcp.pop %v3454
  %v3462 = vrcp.pop %v3457
  %v3463 = vrcp.pop %v3460
  %v3464 = vsel %vm432, %v3395, %v3419
  %v3465 = vsel %vm432, %v3396, %v3420
  %v3466 = vsel %vm432, %v3397, %v3421
  %v3467 = vsel %vm514, %v3464, %v3440
  %v3468 = vsel %vm514, %v3465, %v3441
  %v3469 = vsel %vm514, %v3466, %v3442
  %v3470 = vsel %vm518, %v3467, %v3461
  %v3471 = vsel %vm518, %v3468, %v3462
  %v3472 = vsel %vm518, %v3469, %v3463
  %v3473 = vmul.f32 %v3381, %v3470
  %v3474 = vmul.f32 %v3383, %v3471
  %v3475 = vmul.f32 %v3385, %v3472
  %v3476 = vpack.c.bf16 %v3474, %v3473
  %v3477 = vpack.c.bf16 %v3475, %v3475
  %3484 = vrot.lane.b32.xlu0 %v3272, 64
  %v3485 = vpop.permute.xlu0 %3484
  %3486 = vrot.lane.b32.xlu0 %v3273, 64
  %v3487 = vpop.permute.xlu0 %3486
  %3488 = vrot.lane.b32.xlu0 %v3274, 64
  %v3489 = vpop.permute.xlu0 %3488
  %3490 = vrot.lane.b32.xlu0 %v3275, 64
  %v3491 = vpop.permute.xlu0 %3490
  %3492 = vrot.lane.b32.xlu0 %v3276, 64
  %v3493 = vpop.permute.xlu0 %3492
  %3494 = vrot.lane.b32.xlu0 %v3277, 64
  %v3495 = vpop.permute.xlu0 %3494
  %v3503 = vsel %vm413, %v3476, 0
  %v3506 = vsel %vm413, %v3477, 0
  %3508 = vmatprep.subr.bf16.mxu0 0
  %3509 = vmatpush1.bf16.msra.mxu0 %v3485
  %3510 = vmatprep.subr.bf16.mxu0 0
  %3511 = vmatpush1.bf16.msra.mxu0 %v3487
  %3512 = vmatprep.subr.bf16.mxu0 0
  %3513 = vmatpush1.bf16.msra.mxu0 %v3489
  %3514 = vmatprep.subr.bf16.mxu0 0
  %3515 = vmatpush1.bf16.msra.mxu0 %v3491
  %3516 = vmatprep.subr.bf16.mxu0 0
  %3517 = vmatpush1.bf16.msra.mxu0 %v3493
  %3518 = vmatprep.subr.bf16.mxu0 0
  %3519 = vmatpush1.bf16.msra.mxu0 %v3495
  %3520 = vmatprep.subr.bf16.mxu0 0
  %3521 = vmatpush1.bf16.msra.mxu0 0
  %3522 = vmatprep.subr.bf16.mxu0 0
  %3523 = vmatpush1.bf16.msra.mxu0 0
  %3524 = vmatprep.subr.bf16.mxu0 0
  %3525 = vmatpush1.bf16.msra.mxu0 0
  %3526 = vmatprep.subr.bf16.mxu0 0
  %3527 = vmatpush1.bf16.msra.mxu0 0
  %3528 = vmatprep.subr.bf16.mxu0 0
  %3529 = vmatpush1.bf16.msra.mxu0 0
  %3530 = vmatprep.subr.bf16.mxu0 0
  %3531 = vmatpush1.bf16.msra.mxu0 0
  %3532 = vmatprep.subr.bf16.mxu0 0
  %3533 = vmatpush1.bf16.msra.mxu0 0
  %3534 = vmatprep.subr.bf16.mxu0 0
  %3535 = vmatpush1.bf16.msra.mxu0 0
  %3536 = vmatprep.subr.bf16.mxu0 0
  %3537 = vmatpush1.bf16.msra.mxu0 0
  %3538 = vmatprep.subr.bf16.mxu0 0
  %3539 = vmatpush1.bf16.msra.mxu0 0
  %3540 = vmatprep.mubr.bf16.mxu0 0
  %3541 = vmatmul.mubr.bf16.gmra.mrb[0].mxu0 %v3503
  %v3542 = vpop.f32.mrb[0].mxu0
  %v3543 = vadd.f32 0.0, %v3542
  %v3544 = vpop.f32.mrb[0].mxu0
  %v3545 = vpop.f32.mrb[0].mxu0
  %v3546 = vadd.f32 0.0, %v3545
  %v3547 = vpop.f32.mrb[0].mxu0
  %3548 = vmatprep.mubr.bf16.mxu0 0
  %3549 = vmatmul.mubr.bf16.gmra.mrb[0].mxu0 %v3506
  %v3550 = vpop.f32.mrb[0].mxu0
  %v3551 = vadd.f32 0.0, %v3550
  %v3552 = vpop.f32.mrb[0].mxu0
  %v3553 = vpop.f32.mrb[0].mxu0
  %v3554 = vpop.f32.mrb[0].mxu0
  %3555 = vdwg.mxu0
  %v3556 = vpack.c.bf16 %v3230, %v3227
  %v3557 = vpack.c.bf16 %v3543, %v3235
  %v3558 = vpack.c.bf16 %v3551, %v3546
  %3559 = vrot.lane.b32.xlu0 %v2854, 32
  %v3560 = vpop.permute.xlu0 %3559
  %3561 = vrot.lane.b32.xlu0 %v2855, 32
  %v3562 = vpop.permute.xlu0 %3561
  %v3566 = vsel %vm62, %v3556, 0
  %v3569 = vsel %vm62, %v3557, 0
  %v3572 = vsel %vm62, %v3558, 0
  %3574 = vmatprep.subr.bf16.mxu0 0
  %3575 = vmatpush1.bf16.msra.mxu0 %v3560
  %3576 = vmatprep.subr.bf16.mxu0 0
  %3577 = vmatpush1.bf16.msra.mxu0 %v3562
  %3578 = vmatprep.subr.bf16.mxu0 0
  %3579 = vmatpush1.bf16.msra.mxu0 0
  %3580 = vmatprep.subr.bf16.mxu0 0
  %3581 = vmatpush1.bf16.msra.mxu0 0
  %3582 = vmatprep.subr.bf16.mxu0 0
  %3583 = vmatpush1.bf16.msra.mxu0 0
  %3584 = vmatprep.subr.bf16.mxu0 0
  %3585 = vmatpush1.bf16.msra.mxu0 0
  %3586 = vmatprep.subr.bf16.mxu0 0
  %3587 = vmatpush1.bf16.msra.mxu0 0
  %3588 = vmatprep.subr.bf16.mxu0 0
  %3589 = vmatpush1.bf16.msra.mxu0 0
  %3590 = vmatprep.subr.bf16.mxu0 0
  %3591 = vmatpush1.bf16.msra.mxu0 0
  %3592 = vmatprep.subr.bf16.mxu0 0
  %3593 = vmatpush1.bf16.msra.mxu0 0
  %3594 = vmatprep.subr.bf16.mxu0 0
  %3595 = vmatpush1.bf16.msra.mxu0 0
  %3596 = vmatprep.subr.bf16.mxu0 0
  %3597 = vmatpush1.bf16.msra.mxu0 0
  %3598 = vmatprep.subr.bf16.mxu0 0
  %3599 = vmatpush1.bf16.msra.mxu0 0
  %3600 = vmatprep.subr.bf16.mxu0 0
  %3601 = vmatpush1.bf16.msra.mxu0 0
  %3602 = vmatprep.subr.bf16.mxu0 0
  %3603 = vmatpush1.bf16.msra.mxu0 0
  %3604 = vmatprep.subr.bf16.mxu0 0
  %3605 = vmatpush1.bf16.msra.mxu0 0
  %3606 = vmatprep.mubr.bf16.mxu0 0
  %3607 = vmatmul.mubr.bf16.gmra.mrb[0].mxu0 %v3566
  %v3608 = vpop.f32.mrb[0].mxu0
  %v3609 = vadd.f32 0.0, %v3608
  %v3610 = vpop.f32.mrb[0].mxu0
  %v3611 = vpop.f32.mrb[0].mxu0
  %v3612 = vadd.f32 0.0, %v3611
  %v3613 = vpop.f32.mrb[0].mxu0
  %3614 = vmatprep.mubr.bf16.mxu0 0
  %3615 = vmatmul.mubr.bf16.gmra.mrb[0].mxu0 %v3569
  %v3616 = vpop.f32.mrb[0].mxu0
  %v3617 = vadd.f32 0.0, %v3616
  %v3618 = vpop.f32.mrb[0].mxu0
  %v3619 = vpop.f32.mrb[0].mxu0
  %v3620 = vadd.f32 0.0, %v3619
  %v3621 = vpop.f32.mrb[0].mxu0
  %3622 = vmatprep.mubr.bf16.mxu0 0
  %3623 = vmatmul.mubr.bf16.gmra.mrb[0].mxu0 %v3572
  %v3624 = vpop.f32.mrb[0].mxu0
  %v3625 = vadd.f32 0.0, %v3624
  %v3626 = vpop.f32.mrb[0].mxu0
  %v3627 = vpop.f32.mrb[0].mxu0
  %v3628 = vadd.f32 0.0, %v3627
  %v3629 = vpop.f32.mrb[0].mxu0
  %3630 = vdwg.mxu0
  %v3631 = vadd.f32 %v2712, %v3609
  %v3632 = vadd.f32 %v2713, %v3612
  %v3633 = vadd.f32 %v2714, %v3617
  %v3634 = vadd.f32 %v2715, %v3620
  %v3635 = vadd.f32 %v2716, %v3625
  %v3636 = vadd.f32 %v2717, %v3628
  %3637 = vrot.lane.b32.xlu0 %v2844, 32
  %v3638 = vpop.permute.xlu0 %3637
  %v3640 = vadd.f32 %v3631, %v3638
  %v3641 = vadd.f32 %v3632, %v3638
  %v3642 = vadd.f32 %v3633, %v3638
  %v3643 = vadd.f32 %v3634, %v3638
  %v3644 = vadd.f32 %v3635, %v3638
  %v3645 = vadd.f32 %v3636, %v3638
  %v3646 = vsel %vm62, %v3640, 0.0
  %3647 = vadd.xlane.f32.xlu0 %v3646
  %v3648 = vpop.xlane.xlu0 %3647
  %v3649 = vsel %vm62, %v3641, 0.0
  %3650 = vadd.xlane.f32.xlu0 %v3649
  %v3651 = vpop.xlane.xlu0 %3650
  %v3652 = vsel %vm62, %v3642, 0.0
  %3653 = vadd.xlane.f32.xlu0 %v3652
  %v3654 = vpop.xlane.xlu0 %3653
  %v3655 = vsel %vm62, %v3643, 0.0
  %3656 = vadd.xlane.f32.xlu0 %v3655
  %v3657 = vpop.xlane.xlu0 %3656
  %v3658 = vsel %vm62, %v3644, 0.0
  %3659 = vadd.xlane.f32.xlu0 %v3658
  %v3660 = vpop.xlane.xlu0 %3659
  %v3661 = vsel %vm62, %v3645, 0.0
  %3662 = vadd.xlane.f32.xlu0 %v3661
  %v3663 = vpop.xlane.xlu0 %3662
  %v3664 = vmul.f32 %v3648, %v81
  %v3665 = vmul.f32 %v3651, %v81
  %v3666 = vmul.f32 %v3654, %v81
  %v3667 = vmul.f32 %v3657, %v81
  %v3668 = vmul.f32 %v3660, %v81
  %v3669 = vmul.f32 %v3663, %v81
  %v3670 = vmul.f32 %v3640, %v3640
  %v3671 = vmul.f32 %v3641, %v3641
  %v3672 = vmul.f32 %v3642, %v3642
  %v3673 = vmul.f32 %v3643, %v3643
  %v3674 = vmul.f32 %v3644, %v3644
  %v3675 = vmul.f32 %v3645, %v3645
  %v3676 = vsel %vm62, %v3670, 0.0
  %3677 = vadd.xlane.f32.xlu0 %v3676
  %v3678 = vpop.xlane.xlu0 %3677
  %v3679 = vsel %vm62, %v3671, 0.0
  %3680 = vadd.xlane.f32.xlu0 %v3679
  %v3681 = vpop.xlane.xlu0 %3680
  %v3682 = vsel %vm62, %v3672, 0.0
  %3683 = vadd.xlane.f32.xlu0 %v3682
  %v3684 = vpop.xlane.xlu0 %3683
  %v3685 = vsel %vm62, %v3673, 0.0
  %3686 = vadd.xlane.f32.xlu0 %v3685
  %v3687 = vpop.xlane.xlu0 %3686
  %v3688 = vsel %vm62, %v3674, 0.0
  %3689 = vadd.xlane.f32.xlu0 %v3688
  %v3690 = vpop.xlane.xlu0 %3689
  %v3691 = vsel %vm62, %v3675, 0.0
  %3692 = vadd.xlane.f32.xlu0 %v3691
  %v3693 = vpop.xlane.xlu0 %3692
  %v3694 = vmul.f32 %v3678, %v81
  %v3695 = vmul.f32 %v3681, %v81
  %v3696 = vmul.f32 %v3684, %v81
  %v3697 = vmul.f32 %v3687, %v81
  %v3698 = vmul.f32 %v3690, %v81
  %v3699 = vmul.f32 %v3693, %v81
  %v3700 = vmul.f32 %v3664, %v3664
  %v3701 = vmul.f32 %v3665, %v3665
  %v3702 = vmul.f32 %v3666, %v3666
  %v3703 = vmul.f32 %v3667, %v3667
  %v3704 = vmul.f32 %v3668, %v3668
  %v3705 = vmul.f32 %v3669, %v3669
  %v3706 = vsub.f32 %v3694, %v3700
  %v3707 = vsub.f32 %v3695, %v3701
  %v3708 = vsub.f32 %v3696, %v3702
  %v3709 = vsub.f32 %v3697, %v3703
  %v3710 = vsub.f32 %v3698, %v3704
  %v3711 = vsub.f32 %v3699, %v3705
  %v3712 = vsub.f32 %v3640, %v3664
  %v3713 = vsub.f32 %v3641, %v3665
  %v3714 = vsub.f32 %v3642, %v3666
  %v3715 = vsub.f32 %v3643, %v3667
  %v3716 = vsub.f32 %v3644, %v3668
  %v3717 = vsub.f32 %v3645, %v3669
  %v3718 = vadd.f32 %v3706, 1e-05
  %v3719 = vadd.f32 %v3707, 1e-05
  %v3720 = vadd.f32 %v3708, 1e-05
  %v3721 = vadd.f32 %v3709, 1e-05
  %v3722 = vadd.f32 %v3710, 1e-05
  %v3723 = vadd.f32 %v3711, 1e-05
  %v3724 = vrsqrt.pop %v3718
  %v3725 = vrsqrt.pop %v3719
  %v3726 = vrsqrt.pop %v3720
  %v3727 = vrsqrt.pop %v3721
  %v3728 = vrsqrt.pop %v3722
  %v3729 = vrsqrt.pop %v3723
  %v3730 = vmul.f32 %v3712, %v3724
  %v3731 = vmul.f32 %v3713, %v3725
  %v3732 = vmul.f32 %v3714, %v3726
  %v3733 = vmul.f32 %v3715, %v3727
  %v3734 = vmul.f32 %v3716, %v3728
  %v3735 = vmul.f32 %v3717, %v3729
  %v3736 = vlaneseq
  %v3737 = vshrl.u32 %v3736, 7
  %v3738 = vsub.s32 2, %v3737
  %v3739 = vrot.slane %v2726, %v3738
  %v3740 = vmul.f32 %v3730, %v3739
  %v3741 = vmul.f32 %v3731, %v3739
  %v3742 = vmul.f32 %v3732, %v3739
  %v3743 = vmul.f32 %v3733, %v3739
  %v3744 = vmul.f32 %v3734, %v3739
  %v3745 = vmul.f32 %v3735, %v3739
  %v3746 = vlaneseq
  %v3747 = vshrl.u32 %v3746, 7
  %v3748 = vsub.s32 3, %v3747
  %v3749 = vrot.slane %v2726, %v3748
  %v3750 = vadd.f32 %v3740, %v3749
  %v3751 = vadd.f32 %v3741, %v3749
  %v3752 = vadd.f32 %v3742, %v3749
  %v3753 = vadd.f32 %v3743, %v3749
  %v3754 = vadd.f32 %v3744, %v3749
  %v3755 = vadd.f32 %v3745, %v3749
  %v3756 = vpack.c.bf16 %v3751, %v3750
  %v3757 = vpack.c.bf16 %v3753, %v3752
  %v3758 = vpack.c.bf16 %v3755, %v3754
  %v3759 = vrot.slane %v2724, 1
  %v3760 = vlaneseq
  %v3761 = vshrl.u32 %v3760, 7
  %v3762 = vsub.s32 0, %v3761
  %v3763 = vrot.slane %v3759, %v3762
  %v3765 = vunpack.c.h.b16 %v2719
  %v3766 = vunpack.c.h.b16 %v2720
  %v3767 = vunpack.c.h.b16 %v2721
  %v3768 = vunpack.c.h.b16 %v2722
  %v3769 = vpack.c.b16 %v3766, %v3765
  %v3770 = vpack.c.b16 %v3768, %v3767
  %v3774 = vsel %vm62, %v3756, 0
  %v3777 = vsel %vm62, %v3757, 0
  %v3780 = vsel %vm62, %v3758, 0
  %3782 = vmatprep.subr.bf16.mxu0 0
  %3783 = vmatpush1.bf16.msra.mxu0 %v3769
  %3784 = vmatprep.subr.bf16.mxu0 0
  %3785 = vmatpush1.bf16.msra.mxu0 %v3770
  %3786 = vmatprep.subr.bf16.mxu0 0
  %3787 = vmatpush1.bf16.msra.mxu0 0
  %3788 = vmatprep.subr.bf16.mxu0 0
  %3789 = vmatpush1.bf16.msra.mxu0 0
  %3790 = vmatprep.subr.bf16.mxu0 0
  %3791 = vmatpush1.bf16.msra.mxu0 0
  %3792 = vmatprep.subr.bf16.mxu0 0
  %3793 = vmatpush1.bf16.msra.mxu0 0
  %3794 = vmatprep.subr.bf16.mxu0 0
  %3795 = vmatpush1.bf16.msra.mxu0 0
  %3796 = vmatprep.subr.bf16.mxu0 0
  %3797 = vmatpush1.bf16.msra.mxu0 0
  %3798 = vmatprep.subr.bf16.mxu0 0
  %3799 = vmatpush1.bf16.msra.mxu0 0
  %3800 = vmatprep.subr.bf16.mxu0 0
  %3801 = vmatpush1.bf16.msra.mxu0 0
  %3802 = vmatprep.subr.bf16.mxu0 0
  %3803 = vmatpush1.bf16.msra.mxu0 0
  %3804 = vmatprep.subr.bf16.mxu0 0
  %3805 = vmatpush1.bf16.msra.mxu0 0
  %3806 = vmatprep.subr.bf16.mxu0 0
  %3807 = vmatpush1.bf16.msra.mxu0 0
  %3808 = vmatprep.subr.bf16.mxu0 0
  %3809 = vmatpush1.bf16.msra.mxu0 0
  %3810 = vmatprep.subr.bf16.mxu0 0
  %3811 = vmatpush1.bf16.msra.mxu0 0
  %3812 = vmatprep.subr.bf16.mxu0 0
  %3813 = vmatpush1.bf16.msra.mxu0 0
  %3814 = vmatprep.mubr.bf16.mxu0 0
  %3815 = vmatmul.mubr.bf16.gmra.mrb[0].mxu0 %v3774
  %v3816 = vpop.f32.mrb[0].mxu0
  %v3817 = vadd.f32 %v3763, %v3816
  %v3818 = vpop.f32.mrb[0].mxu0
  %v3819 = vpop.f32.mrb[0].mxu0
  %v3820 = vadd.f32 %v3763, %v3819
  %v3821 = vpop.f32.mrb[0].mxu0
  %3822 = vmatprep.mubr.bf16.mxu0 0
  %3823 = vmatmul.mubr.bf16.gmra.mrb[0].mxu0 %v3777
  %v3824 = vpop.f32.mrb[0].mxu0
  %v3825 = vadd.f32 %v3763, %v3824
  %v3826 = vpop.f32.mrb[0].mxu0
  %v3827 = vpop.f32.mrb[0].mxu0
  %v3828 = vadd.f32 %v3763, %v3827
  %v3829 = vpop.f32.mrb[0].mxu0
  %3830 = vmatprep.mubr.bf16.mxu0 0
  %3831 = vmatmul.mubr.bf16.gmra.mrb[0].mxu0 %v3780
  %v3832 = vpop.f32.mrb[0].mxu0
  %v3833 = vadd.f32 %v3763, %v3832
  %v3834 = vpop.f32.mrb[0].mxu0
  %v3835 = vpop.f32.mrb[0].mxu0
  %v3836 = vadd.f32 %v3763, %v3835
  %v3837 = vpop.f32.mrb[0].mxu0
  %3838 = vdwg.mxu0
  %v3839 = vmul.f32 %v3817, %v3817
  %v3840 = vmul.f32 %v3820, %v3820
  %v3841 = vmul.f32 %v3825, %v3825
  %v3842 = vmul.f32 %v3828, %v3828
  %v3843 = vmul.f32 %v3833, %v3833
  %v3844 = vmul.f32 %v3836, %v3836
  %v3845 = vmul.f32 %v3817, %v3839
  %v3846 = vmul.f32 %v3820, %v3840
  %v3847 = vmul.f32 %v3825, %v3841
  %v3848 = vmul.f32 %v3828, %v3842
  %v3849 = vmul.f32 %v3833, %v3843
  %v3850 = vmul.f32 %v3836, %v3844
  %v3851 = vmul.f32 %v3845, 0.044715
  %v3852 = vmul.f32 %v3846, 0.044715
  %v3853 = vmul.f32 %v3847, 0.044715
  %v3854 = vmul.f32 %v3848, 0.044715
  %v3855 = vmul.f32 %v3849, 0.044715
  %v3856 = vmul.f32 %v3850, 0.044715
  %v3857 = vadd.f32 %v3817, %v3851
  %v3858 = vadd.f32 %v3820, %v3852
  %v3859 = vadd.f32 %v3825, %v3853
  %v3860 = vadd.f32 %v3828, %v3854
  %v3861 = vadd.f32 %v3833, %v3855
  %v3862 = vadd.f32 %v3836, %v3856
  %v3863 = vmul.f32 %v3857, 0.7978846
  %v3864 = vmul.f32 %v3858, 0.7978846
  %v3865 = vmul.f32 %v3859, 0.7978846
  %v3866 = vmul.f32 %v3860, 0.7978846
  %v3867 = vmul.f32 %v3861, 0.7978846
  %v3868 = vmul.f32 %v3862, 0.7978846
  %v3869 = vtanh.pop %v3863
  %v3870 = vtanh.pop %v3864
  %v3871 = vtanh.pop %v3865
  %v3872 = vtanh.pop %v3866
  %v3873 = vtanh.pop %v3867
  %v3874 = vtanh.pop %v3868
  %v3875 = vadd.f32 %v3869, 1.0
  %v3876 = vadd.f32 %v3870, 1.0
  %v3877 = vadd.f32 %v3871, 1.0
  %v3878 = vadd.f32 %v3872, 1.0
  %v3879 = vadd.f32 %v3873, 1.0
  %v3880 = vadd.f32 %v3874, 1.0
  %v3881 = vmul.f32 %v3875, 0.5
  %v3882 = vmul.f32 %v3876, 0.5
  %v3883 = vmul.f32 %v3877, 0.5
  %v3884 = vmul.f32 %v3878, 0.5
  %v3885 = vmul.f32 %v3879, 0.5
  %v3886 = vmul.f32 %v3880, 0.5
  %v3887 = vmul.f32 %v3817, %v3881
  %v3888 = vmul.f32 %v3820, %v3882
  %v3889 = vmul.f32 %v3825, %v3883
  %v3890 = vmul.f32 %v3828, %v3884
  %v3891 = vmul.f32 %v3833, %v3885
  %v3892 = vmul.f32 %v3836, %v3886
  %s3893 = scalar_lea.vmem %s2, 128
  %v3894 = vld [vmem:[%s3893] sm:$0xf]
  %v3895 = vld [vmem:[%s3893 + $0x4] sm:$0xf]
  %v3896 = vld [vmem:[%s3893 + $0x8] sm:$0xf]
  %v3897 = vld [vmem:[%s3893 + $0xc] sm:$0xf]
  %v3898 = vld [vmem:[%s3893 + $0x10] sm:$0xf]
  %v3899 = vld [vmem:[%s3893 + $0x14] sm:$0xf]
  %v3900 = vld [vmem:[%s3893 + $0x18] sm:$0xf]
  %v3901 = vld [vmem:[%s3893 + $0x1c] sm:$0xf]
  %v3902 = vld [vmem:[%s3893 + $0x20] sm:$0xf]
  %v3903 = vld [vmem:[%s3893 + $0x24] sm:$0xf]
  %v3904 = vld [vmem:[%s3893 + $0x28] sm:$0xf]
  %v3905 = vld [vmem:[%s3893 + $0x2c] sm:$0xf]
  %v3906 = vld [vmem:[%s3893 + $0x30] sm:$0xf]
  %v3907 = vld [vmem:[%s3893 + $0x34] sm:$0xf]
  %v3908 = vld [vmem:[%s3893 + $0x38] sm:$0xf]
  %v3909 = vld [vmem:[%s3893 + $0x3c] sm:$0xf]
  %v3910 = vpack.c.bf16 %v3888, %v3887
  %v3911 = vpack.c.bf16 %v3890, %v3889
  %v3912 = vpack.c.bf16 %v3892, %v3891
  %v3929 = vunpack.c.l.b16 %v3894
  %v3930 = vunpack.c.l.b16 %v3895
  %v3931 = vunpack.c.l.b16 %v3896
  %v3932 = vunpack.c.l.b16 %v3897
  %v3933 = vunpack.c.l.b16 %v3898
  %v3934 = vunpack.c.l.b16 %v3899
  %v3935 = vunpack.c.l.b16 %v3900
  %v3936 = vunpack.c.l.b16 %v3901
  %v3937 = vunpack.c.l.b16 %v3902
  %v3938 = vunpack.c.l.b16 %v3903
  %v3939 = vunpack.c.l.b16 %v3904
  %v3940 = vunpack.c.l.b16 %v3905
  %v3941 = vunpack.c.l.b16 %v3906
  %v3942 = vunpack.c.l.b16 %v3907
  %v3943 = vunpack.c.l.b16 %v3908
  %v3944 = vunpack.c.l.b16 %v3909
  %v3945 = vpack.c.b16 %v3930, %v3929
  %v3946 = vpack.c.b16 %v3932, %v3931
  %v3947 = vpack.c.b16 %v3934, %v3933
  %v3948 = vpack.c.b16 %v3936, %v3935
  %v3949 = vpack.c.b16 %v3938, %v3937
  %v3950 = vpack.c.b16 %v3940, %v3939
  %v3951 = vpack.c.b16 %v3942, %v3941
  %v3952 = vpack.c.b16 %v3944, %v3943
  %3961 = vmatprep.subr.bf16.mxu0 0
  %3962 = vmatpush1.bf16.msra.mxu0 %v3945
  %3963 = vmatprep.subr.bf16.mxu0 0
  %3964 = vmatpush1.bf16.msra.mxu0 %v3946
  %3965 = vmatprep.subr.bf16.mxu0 0
  %3966 = vmatpush1.bf16.msra.mxu0 %v3947
  %3967 = vmatprep.subr.bf16.mxu0 0
  %3968 = vmatpush1.bf16.msra.mxu0 %v3948
  %3969 = vmatprep.subr.bf16.mxu0 0
  %3970 = vmatpush1.bf16.msra.mxu0 %v3949
  %3971 = vmatprep.subr.bf16.mxu0 0
  %3972 = vmatpush1.bf16.msra.mxu0 %v3950
  %3973 = vmatprep.subr.bf16.mxu0 0
  %3974 = vmatpush1.bf16.msra.mxu0 %v3951
  %3975 = vmatprep.subr.bf16.mxu0 0
  %3976 = vmatpush1.bf16.msra.mxu0 %v3952
  %3977 = vmatprep.subr.bf16.mxu0 0
  %3978 = vmatpush1.bf16.msra.mxu0 0
  %3979 = vmatprep.subr.bf16.mxu0 0
  %3980 = vmatpush1.bf16.msra.mxu0 0
  %3981 = vmatprep.subr.bf16.mxu0 0
  %3982 = vmatpush1.bf16.msra.mxu0 0
  %3983 = vmatprep.subr.bf16.mxu0 0
  %3984 = vmatpush1.bf16.msra.mxu0 0
  %3985 = vmatprep.subr.bf16.mxu0 0
  %3986 = vmatpush1.bf16.msra.mxu0 0
  %3987 = vmatprep.subr.bf16.mxu0 0
  %3988 = vmatpush1.bf16.msra.mxu0 0
  %3989 = vmatprep.subr.bf16.mxu0 0
  %3990 = vmatpush1.bf16.msra.mxu0 0
  %3991 = vmatprep.subr.bf16.mxu0 0
  %3992 = vmatpush1.bf16.msra.mxu0 0
  %3993 = vmatprep.mubr.bf16.mxu0 0
  %3994 = vmatmul.mubr.bf16.gmra.mrb[0].mxu0 %v3910
  %v3995 = vpop.f32.mrb[0].mxu0
  %v3996 = vadd.f32 0.0, %v3995
  %v3997 = vpop.f32.mrb[0].mxu0
  %v3998 = vpop.f32.mrb[0].mxu0
  %v3999 = vadd.f32 0.0, %v3998
  %v4000 = vpop.f32.mrb[0].mxu0
  %4001 = vmatprep.mubr.bf16.mxu0 0
  %4002 = vmatmul.mubr.bf16.gmra.mrb[0].mxu0 %v3911
  %v4003 = vpop.f32.mrb[0].mxu0
  %v4004 = vadd.f32 0.0, %v4003
  %v4005 = vpop.f32.mrb[0].mxu0
  %v4006 = vpop.f32.mrb[0].mxu0
  %v4007 = vadd.f32 0.0, %v4006
  %v4008 = vpop.f32.mrb[0].mxu0
  %4009 = vmatprep.mubr.bf16.mxu0 0
  %4010 = vmatmul.mubr.bf16.gmra.mrb[0].mxu0 %v3912
  %v4011 = vpop.f32.mrb[0].mxu0
  %v4012 = vadd.f32 0.0, %v4011
  %v4013 = vpop.f32.mrb[0].mxu0
  %v4014 = vpop.f32.mrb[0].mxu0
  %v4015 = vadd.f32 0.0, %v4014
  %v4016 = vpop.f32.mrb[0].mxu0
  %4017 = vdwg.mxu0
  %v4018 = vadd.f32 %v3640, %v3996
  %v4019 = vadd.f32 %v3641, %v3999
  %v4020 = vadd.f32 %v3642, %v4004
  %v4021 = vadd.f32 %v3643, %v4007
  %v4022 = vadd.f32 %v3644, %v4012
  %v4023 = vadd.f32 %v3645, %v4015
  %v4024 = vrot.slane %v2724, 2
  %v4025 = vlaneseq
  %v4026 = vshrl.u32 %v4025, 7
  %v4027 = vsub.s32 0, %v4026
  %v4028 = vrot.slane %v4024, %v4027
  %v4030 = vadd.f32 %v4018, %v4028
  %v4031 = vadd.f32 %v4019, %v4028
  %v4032 = vadd.f32 %v4020, %v4028
  %v4033 = vadd.f32 %v4021, %v4028
  %v4034 = vadd.f32 %v4022, %v4028
  %v4035 = vadd.f32 %v4023, %v4028
  %v4036 = vld [vmem:[%s5] sm:$0x1]
  %v4037 = vld [vmem:[%s5 + $0x1] sm:$0x1]
  %v4038 = vsel %vm62, %v4030, 0.0
  %4039 = vadd.xlane.f32.xlu0 %v4038
  %v4040 = vpop.xlane.xlu0 %4039
  %v4041 = vsel %vm62, %v4031, 0.0
  %4042 = vadd.xlane.f32.xlu0 %v4041
  %v4043 = vpop.xlane.xlu0 %4042
  %v4044 = vsel %vm62, %v4032, 0.0
  %4045 = vadd.xlane.f32.xlu0 %v4044
  %v4046 = vpop.xlane.xlu0 %4045
  %v4047 = vsel %vm62, %v4033, 0.0
  %4048 = vadd.xlane.f32.xlu0 %v4047
  %v4049 = vpop.xlane.xlu0 %4048
  %v4050 = vsel %vm62, %v4034, 0.0
  %4051 = vadd.xlane.f32.xlu0 %v4050
  %v4052 = vpop.xlane.xlu0 %4051
  %v4053 = vsel %vm62, %v4035, 0.0
  %4054 = vadd.xlane.f32.xlu0 %v4053
  %v4055 = vpop.xlane.xlu0 %4054
  %v4056 = vmul.f32 %v4040, %v81
  %v4057 = vmul.f32 %v4043, %v81
  %v4058 = vmul.f32 %v4046, %v81
  %v4059 = vmul.f32 %v4049, %v81
  %v4060 = vmul.f32 %v4052, %v81
  %v4061 = vmul.f32 %v4055, %v81
  %v4062 = vmul.f32 %v4030, %v4030
  %v4063 = vmul.f32 %v4031, %v4031
  %v4064 = vmul.f32 %v4032, %v4032
  %v4065 = vmul.f32 %v4033, %v4033
  %v4066 = vmul.f32 %v4034, %v4034
  %v4067 = vmul.f32 %v4035, %v4035
  %v4068 = vsel %vm62, %v4062, 0.0
  %4069 = vadd.xlane.f32.xlu0 %v4068
  %v4070 = vpop.xlane.xlu0 %4069
  %v4071 = vsel %vm62, %v4063, 0.0
  %4072 = vadd.xlane.f32.xlu0 %v4071
  %v4073 = vpop.xlane.xlu0 %4072
  %v4074 = vsel %vm62, %v4064, 0.0
  %4075 = vadd.xlane.f32.xlu0 %v4074
  %v4076 = vpop.xlane.xlu0 %4075
  %v4077 = vsel %vm62, %v4065, 0.0
  %4078 = vadd.xlane.f32.xlu0 %v4077
  %v4079 = vpop.xlane.xlu0 %4078
  %v4080 = vsel %vm62, %v4066, 0.0
  %4081 = vadd.xlane.f32.xlu0 %v4080
  %v4082 = vpop.xlane.xlu0 %4081
  %v4083 = vsel %vm62, %v4067, 0.0
  %4084 = vadd.xlane.f32.xlu0 %v4083
  %v4085 = vpop.xlane.xlu0 %4084
  %v4086 = vmul.f32 %v4070, %v81
  %v4087 = vmul.f32 %v4073, %v81
  %v4088 = vmul.f32 %v4076, %v81
  %v4089 = vmul.f32 %v4079, %v81
  %v4090 = vmul.f32 %v4082, %v81
  %v4091 = vmul.f32 %v4085, %v81
  %v4092 = vmul.f32 %v4056, %v4056
  %v4093 = vmul.f32 %v4057, %v4057
  %v4094 = vmul.f32 %v4058, %v4058
  %v4095 = vmul.f32 %v4059, %v4059
  %v4096 = vmul.f32 %v4060, %v4060
  %v4097 = vmul.f32 %v4061, %v4061
  %v4098 = vsub.f32 %v4086, %v4092
  %v4099 = vsub.f32 %v4087, %v4093
  %v4100 = vsub.f32 %v4088, %v4094
  %v4101 = vsub.f32 %v4089, %v4095
  %v4102 = vsub.f32 %v4090, %v4096
  %v4103 = vsub.f32 %v4091, %v4097
  %v4104 = vsub.f32 %v4030, %v4056
  %v4105 = vsub.f32 %v4031, %v4057
  %v4106 = vsub.f32 %v4032, %v4058
  %v4107 = vsub.f32 %v4033, %v4059
  %v4108 = vsub.f32 %v4034, %v4060
  %v4109 = vsub.f32 %v4035, %v4061
  %v4110 = vadd.f32 %v4098, 1e-05
  %v4111 = vadd.f32 %v4099, 1e-05
  %v4112 = vadd.f32 %v4100, 1e-05
  %v4113 = vadd.f32 %v4101, 1e-05
  %v4114 = vadd.f32 %v4102, 1e-05
  %v4115 = vadd.f32 %v4103, 1e-05
  %v4116 = vrsqrt.pop %v4110
  %v4117 = vrsqrt.pop %v4111
  %v4118 = vrsqrt.pop %v4112
  %v4119 = vrsqrt.pop %v4113
  %v4120 = vrsqrt.pop %v4114
  %v4121 = vrsqrt.pop %v4115
  %v4122 = vmul.f32 %v4104, %v4116
  %v4123 = vmul.f32 %v4105, %v4117
  %v4124 = vmul.f32 %v4106, %v4118
  %v4125 = vmul.f32 %v4107, %v4119
  %v4126 = vmul.f32 %v4108, %v4120
  %v4127 = vmul.f32 %v4109, %v4121
  %v4128 = vlaneseq
  %v4129 = vshrl.u32 %v4128, 7
  %v4130 = vsub.s32 0, %v4129
  %v4131 = vrot.slane %v4036, %v4130
  %v4132 = vmul.f32 %v4122, %v4131
  %v4133 = vmul.f32 %v4123, %v4131
  %v4134 = vmul.f32 %v4124, %v4131
  %v4135 = vmul.f32 %v4125, %v4131
  %v4136 = vmul.f32 %v4126, %v4131
  %v4137 = vmul.f32 %v4127, %v4131
  %v4138 = vlaneseq
  %v4139 = vshrl.u32 %v4138, 7
  %v4140 = vsub.s32 0, %v4139
  %v4141 = vrot.slane %v4037, %v4140
  %v4142 = vadd.f32 %v4132, %v4141
  %v4143 = vadd.f32 %v4133, %v4141
  %v4144 = vadd.f32 %v4134, %v4141
  %v4145 = vadd.f32 %v4135, %v4141
  %v4146 = vadd.f32 %v4136, %v4141
  %v4147 = vadd.f32 %v4137, %v4141
  %4148 = vst.msk [vmem:[%s6] sm:$0xff] %vm62, %v4142
  %4149 = vst.msk [vmem:[%s6 + $0x8] sm:$0xff] %vm62, %v4143
  %4150 = vst.msk [vmem:[%s6 + $0x10] sm:$0xff] %vm62, %v4144
  %4151 = vst.msk [vmem:[%s6 + $0x18] sm:$0xff] %vm62, %v4145
  %4152 = vst.msk [vmem:[%s6 + $0x20] sm:$0xff] %vm62, %v4146
  %4153 = vst.msk [vmem:[%s6 + $0x28] sm:$0xff] %vm62, %v4147
  // Predicated region
  $region26: #{tpu_custom_call.1} parent=0 // pred_check
    _
  $region27: #{tpu_custom_call.1} parent=0 // pred_check_branch
    %4155 = sbr.rel (0) target = $region29
  $region28: #{tpu_custom_call.1} parent=0 // pred_region
    _
  $region29: #{tpu_custom_call.1} parent=0 // pred_fallthru
    _
  // Predicated region
  $region30: #{tpu_custom_call.1} parent=0 // pred_check
    _
  $region31: #{tpu_custom_call.1} parent=0 // pred_check_branch
    %4157 = sbr.rel (0) target = $region33
  $region32: #{tpu_custom_call.1} parent=0 // pred_region
    _
  $region33: #{tpu_custom_call.1} parent=0 // pred_fallthru
    _

</llo_original>
